<compile_context>
chip_gen: v7x
topology: tpu7x:2x2x1
jax: 0.10.0
libtpu: 0.0.40
codegen_flags: <defaults>
</compile_context>

<pallas_src>
import functools

import jax
import jax.numpy as jnp
from jax.experimental import pallas as pl

# ---- small, module-consistent sizes (synthetic) --------------------------
BATCH = 8          # batch_size
HIDDEN = 32        # hidden_size
INPUT_SIZE = 16    # decoder embedding / input_size
ATT_FEATURES = 16  # attention_features
VOCAB_FEATURES = 128
VOCAB_SIZE = 32
LAYERS_DEC = 2
T_ENC = 8
T_DEC = 4


def _lstm_cell(gates, c_prev, H):
    # PyTorch LSTM gate order: i, f, g, o
    i_g = jax.nn.sigmoid(gates[:, 0 * H:1 * H])
    f_g = jax.nn.sigmoid(gates[:, 1 * H:2 * H])
    g_g = jnp.tanh(gates[:, 2 * H:3 * H])
    o_g = jax.nn.sigmoid(gates[:, 3 * H:4 * H])
    c_new = f_g * c_prev + i_g * g_g
    h_new = o_g * jnp.tanh(c_new)
    return h_new, c_new


# ---------------------------------------------------------------------------
# The single fused kernel (grid-less: every operand is a full-array VMEM ref).
# ---------------------------------------------------------------------------
def _make_decoder_kernel(first_word, Td, B, H, Te, A, Vf):
    TA = Te * A

    def kernel(*refs):
        it = iter(refs)
        if first_word:
            old_ref, wred_ref, bred_ref = next(it), next(it), next(it)
        else:
            hinit_ref, cinit_ref = next(it), next(it)
        xflat_ref = next(it)     # (Td*B, I)
        wih0_ref = next(it)      # (I, 4H)
        b0_ref = next(it)        # (1, 4H)   b_ih0 + b_hh0
        whh0_ref = next(it)      # (H, 4H)
        w1_ref = next(it)        # (2H, 4H)  [W_ih1^T ; W_hh1^T]
        b1_ref = next(it)        # (1, 4H)   b_ih1 + b_hh1
        enc_ref = next(it)       # (B, Te, 2H)
        encf_ref = next(it)      # (B, Te*2H)  same data, lane-flattened
        wencbig_ref = next(it)   # (Te*2H, Te*A)  block-diag W_att_enc^T
        battbig_ref = next(it)   # (1, Te*A)
        mask_ref = next(it)      # (B, Te)
        wdec_ref = next(it)      # (H, Te*A + Vf)  [W_att_dec^T tiled | W_v1_dec^T]
        wsel_ref = next(it)      # (Te*A, Te)  block-diag attn_out selector
        wv1c_ref = next(it)      # (2H, Vf)
        bv1_ref = next(it)       # (1, Vf)
        wv2_ref = next(it)       # (Vf, Vs)
        bv2_ref = next(it)       # (1, Vs)
        pvocab_ref = next(it)    # (Td, B, Vs)
        hT_ref = next(it)        # (2, B, H)
        cT_ref = next(it)        # (2, B, H)

        # ---- prologue (runs once, before the recurrence) ------------------
        if first_word:
            # reduce_dim on hidden AND cell states in one (4B, 2H)@(2H, H) matmul
            red = (jnp.dot(old_ref[...], wred_ref[...],
                           preferred_element_type=jnp.float32) + bred_ref[...])
            h0, h1 = red[0:B], red[B:2 * B]
            c0, c1 = red[2 * B:3 * B], red[3 * B:4 * B]
        else:
            h0, h1 = hinit_ref[0:B], hinit_ref[B:2 * B]
            c0, c1 = cinit_ref[0:B], cinit_ref[B:2 * B]

        # layer-0 input projection for all timesteps at once: (Td*B, I)@(I, 4H)
        xp0 = (jnp.dot(xflat_ref[...], wih0_ref[...],
                       preferred_element_type=jnp.float32) + b0_ref[...])
        # encoder-side attention projection, lane-dense layout (B, Te*A)
        eenc = (jnp.dot(encf_ref[...], wencbig_ref[...],
                        preferred_element_type=jnp.float32) + battbig_ref[...])

        enc = enc_ref[...]
        mask = mask_ref[...]
        whh0 = whh0_ref[...]
        w1 = w1_ref[...]
        b1 = b1_ref[...]
        wdec = wdec_ref[...]
        wsel = wsel_ref[...]
        wv1c = wv1c_ref[...]
        bv1 = bv1_ref[...]
        wv2 = wv2_ref[...]
        bv2 = bv2_ref[...]

        # ---- unrolled recurrence; h/c carried in vregs ---------------------
        for t in range(Td):
            # LSTM layer 0
            gates0 = xp0[t * B:(t + 1) * B] + jnp.dot(
                h0, whh0, preferred_element_type=jnp.float32)
            h0, c0 = _lstm_cell(gates0, c0, H)

            # LSTM layer 1 (merged input/hidden matmul)
            x1 = jnp.concatenate([h0, h1], axis=-1)                     # (B, 2H)
            gates1 = jnp.dot(x1, w1, preferred_element_type=jnp.float32) + b1
            h1, c1 = _lstm_cell(gates1, c1, H)
            dec = h1                                                    # (B, H)

            # decoder projection for attention + vocab head in ONE matmul
            dproj = jnp.dot(dec, wdec, preferred_element_type=jnp.float32)
            edec = dproj[:, :TA]                                        # (B, Te*A)
            hv_dec = dproj[:, TA:]                                      # (B, Vf)

            # additive attention, lane-dense score path
            s_pre = jnp.tanh(eenc + edec)                               # (B, Te*A)
            scores = jnp.dot(s_pre, wsel,
                             preferred_element_type=jnp.float32) + mask  # (B, Te)
            scores = scores - jnp.max(scores, axis=-1, keepdims=True)
            p = jnp.exp(scores)
            attn = p * pl.reciprocal(jnp.sum(p, axis=-1, keepdims=True),
                                     approx=False)                      # (B, Te)

            # context: VPU broadcast-multiply + sublane reduce (no M=1 matmuls)
            context = jnp.sum(attn[:, :, None] * enc, axis=1)           # (B, 2H)

            # vocab head
            hv = hv_dec + jnp.dot(context, wv1c,
                                  preferred_element_type=jnp.float32) + bv1
            logits = jnp.dot(hv, wv2, preferred_element_type=jnp.float32) + bv2
            pvocab_ref[t] = logits

        # single writeback of the final recurrent state
        hT_ref[0] = h0
        hT_ref[1] = h1
        cT_ref[0] = c0
        cT_ref[1] = c1

    return kernel


# ---------------------------------------------------------------------------
# Parameters (deterministic init; shapes follow the PyTorch module __init__)
# ---------------------------------------------------------------------------
def init_params(key):
    ks = iter(jax.random.split(key, 32))

    def rnd(shape, scale=0.1):
        return jax.random.normal(next(ks), shape, jnp.float32) * scale

    H, I, A = HIDDEN, INPUT_SIZE, ATT_FEATURES
    Vf, Vs = VOCAB_FEATURES, VOCAB_SIZE
    p = {}
    p["W_reduce"] = rnd((H, 2 * H))          # reduce_dim: Linear(2H, H)
    p["b_reduce"] = rnd((H,))
    p["lstm"] = []
    for layer in range(LAYERS_DEC):
        in_l = I if layer == 0 else H
        p["lstm"].append({
            "w_ih": rnd((4 * H, in_l)),
            "w_hh": rnd((4 * H, H)),
            "b_ih": rnd((4 * H,)),
            "b_hh": rnd((4 * H,)),
        })
    p["W_att"] = rnd((A, 3 * H))             # attention: Linear(3H, A), cat = [enc | dec]
    p["b_att"] = rnd((A,))
    p["W_attn_out"] = rnd((1, A))            # attn_out: Linear(A, 1, bias=False)
    p["W_v1"] = rnd((Vf, 3 * H))             # linearVocab1: Linear(3H, Vf), cat = [dec | ctx]
    p["b_v1"] = rnd((Vf,))
    p["W_v2"] = rnd((Vs, Vf))                # linearVocab2: Linear(Vf, Vs)
    p["b_v2"] = rnd((Vs,))
    # TODO(synk): self.linearOut is defined in __init__ but never used in forward; omitted.
    return p


# ---------------------------------------------------------------------------
# Full forward: weight-only re-layout (plain JAX; would be hoisted/precomputed
# in production) + ONE fused pallas_call.
# ---------------------------------------------------------------------------
def bi_decoder_forward(p, output_enc, input_dec, hidden_enc, cell_state_enc,
                       att_mask, first_word=True):
    H = HIDDEN
    Te, B, H2 = output_enc.shape
    Td, _, I = input_dec.shape
    A = p["W_att"].shape[0]
    Vf = p["W_v1"].shape[0]
    Vs = p["W_v2"].shape[0]

    lp0, lp1 = p["lstm"]

    # ---- activation re-layout (batch-major encoder, flattened decoder input)
    enc_b = jnp.transpose(output_enc, (1, 0, 2))                   # (B, Te, 2H)
    enc_flat = enc_b.reshape(B, Te * H2)                           # (B, Te*2H)
    mask_b = jnp.transpose(att_mask[:, :, 0], (1, 0))              # (B, Te)
    x_flat = input_dec.reshape(Td * B, I)                          # (Td*B, I)

    # ---- weight-only prep (tiny; XLA fuses it, precompute once in practice)
    eye_te = jnp.eye(Te, dtype=jnp.float32)
    W_att_enc_T = p["W_att"][:, :H2].T                             # (2H, A)
    W_att_dec_T = p["W_att"][:, H2:].T                             # (H, A)
    w_enc_big = jnp.kron(eye_te, W_att_enc_T)                      # (Te*2H, Te*A)
    b_att_big = jnp.tile(p["b_att"], Te)[None, :]                  # (1, Te*A)
    w_sel = jnp.kron(eye_te, p["W_attn_out"].T)                    # (Te*A, Te)
    w_dec_comb = jnp.concatenate(
        [jnp.tile(W_att_dec_T, (1, Te)), p["W_v1"][:, :H].T], axis=1)  # (H, Te*A+Vf)
    w_v1_ctx_T = p["W_v1"][:, H:].T                                # (2H, Vf)
    w1_stacked = jnp.concatenate([lp1["w_ih"].T, lp1["w_hh"].T], axis=0)  # (2H, 4H)
    b0 = (lp0["b_ih"] + lp0["b_hh"])[None, :]
    b1 = (lp1["b_ih"] + lp1["b_hh"])[None, :]

    if first_word:
        # NOTE: cat((x[0:2], x[2:]), dim=-1) matches the reference forward literally.
        old_enc = jnp.concatenate([hidden_enc[0:2], hidden_enc[2:]], axis=-1)
        old_cell = jnp.concatenate([cell_state_enc[0:2], cell_state_enc[2:]], axis=-1)
        old_stacked = jnp.concatenate([old_enc, old_cell], axis=0).reshape(4 * B, 2 * H)
        init_args = (old_stacked, p["W_reduce"].T, p["b_reduce"][None, :])
    else:
        init_args = (hidden_enc.reshape(2 * B, H), cell_state_enc.reshape(2 * B, H))

    kernel = _make_decoder_kernel(first_word, Td, B, H, Te, A, Vf)

    pvocab, hT, cT = pl.pallas_call(
        kernel,
        out_shape=(jax.ShapeDtypeStruct((Td, B, Vs), jnp.float32),
                   jax.ShapeDtypeStruct((2, B, H), jnp.float32),
                   jax.ShapeDtypeStruct((2, B, H), jnp.float32)),
    )(*init_args,
      x_flat, lp0["w_ih"].T, b0,
      lp0["w_hh"].T, w1_stacked, b1,
      enc_b, enc_flat,
      w_enc_big, b_att_big, mask_b,
      w_dec_comb, w_sel,
      w_v1_ctx_T, p["b_v1"][None, :],
      p["W_v2"].T, p["b_v2"][None, :])
    return pvocab, (hT, cT)


# ---------------------------------------------------------------------------
# Pure-JAX reference (mirrors the PyTorch forward op-for-op) for validation
# ---------------------------------------------------------------------------
def _reference_forward(p, output_enc, input_dec, hidden_enc, cell_state_enc,
                       att_mask, first_word=True):
    H = HIDDEN

    def linear(x, w, b=None):
        y = x @ w.T
        return y if b is None else y + b

    if first_word:
        old_enc = jnp.concatenate([hidden_enc[0:2], hidden_enc[2:]], axis=-1)
        old_cell = jnp.concatenate([cell_state_enc[0:2], cell_state_enc[2:]], axis=-1)
        new_enc = linear(old_enc, p["W_reduce"], p["b_reduce"])
        new_cell = linear(old_cell, p["W_reduce"], p["b_reduce"])
    else:
        new_enc, new_cell = hidden_enc, cell_state_enc

    x = input_dec
    h_fin, c_fin = [], []
    for layer in range(LAYERS_DEC):
        lp = p["lstm"][layer]
        h, c = new_enc[layer], new_cell[layer]
        outs = []
        for t in range(x.shape[0]):
            gates = x[t] @ lp["w_ih"].T + h @ lp["w_hh"].T + lp["b_ih"] + lp["b_hh"]
            i_g = jax.nn.sigmoid(gates[:, 0 * H:1 * H])
            f_g = jax.nn.sigmoid(gates[:, 1 * H:2 * H])
            g_g = jnp.tanh(gates[:, 2 * H:3 * H])
            o_g = jax.nn.sigmoid(gates[:, 3 * H:4 * H])
            c = f_g * c + i_g * g_g
            h = o_g * jnp.tanh(c)
            outs.append(h)
        x = jnp.stack(outs, axis=0)
        h_fin.append(h)
        c_fin.append(c)
    output_dec = x
    hidden_dec = jnp.stack(h_fin, axis=0)
    cell_dec = jnp.stack(c_fin, axis=0)

    pv = []
    for t in range(output_dec.shape[0]):
        dec_t = jnp.broadcast_to(output_dec[t:t + 1], output_enc.shape[:2] + (H,))
        e = jnp.tanh(linear(jnp.concatenate([output_enc, dec_t], axis=2),
                            p["W_att"], p["b_att"]))
        e = linear(e, p["W_attn_out"]) + att_mask              # (Te, B, 1)
        attention = jax.nn.softmax(e, axis=0)
        context = jnp.sum(attention * output_enc, axis=0)      # (B, 2H)
        pvt = linear(jnp.concatenate([output_dec[t], context], axis=-1),
                     p["W_v1"], p["b_v1"])
        pvt = linear(pvt, p["W_v2"], p["b_v2"])
        pv.append(pvt)
    return jnp.stack(pv, axis=0), (hidden_dec, cell_dec)


# ---------------------------------------------------------------------------
if __name__ == "__main__":
    key = jax.random.PRNGKey(0)
    kp, kd = jax.random.split(key)
    params = init_params(kp)

    dks = jax.random.split(kd, 4)
    output_enc = jax.random.normal(dks[0], (T_ENC, BATCH, 2 * HIDDEN), jnp.float32)
    input_dec = jax.random.normal(dks[1], (T_DEC, BATCH, INPUT_SIZE), jnp.float32)
    hidden_enc = jax.random.normal(dks[2], (2 * LAYERS_DEC, BATCH, HIDDEN), jnp.float32)
    cell_state_enc = jax.random.normal(dks[3], (2 * LAYERS_DEC, BATCH, HIDDEN), jnp.float32)
    # additive attention mask over encoder time: last two positions masked out
    att_mask = jnp.zeros((T_ENC, BATCH, 1), jnp.float32).at[T_ENC - 2:].set(-1e9)

    fwd = jax.jit(functools.partial(bi_decoder_forward, first_word=True))
    pvocab, (hidden_dec, cell_dec) = fwd(params, output_enc, input_dec,
                                         hidden_enc, cell_state_enc, att_mask)
    jax.block_until_ready((pvocab, hidden_dec, cell_dec))

    assert pvocab.shape == (T_DEC, BATCH, VOCAB_SIZE)
    assert hidden_dec.shape == (LAYERS_DEC, BATCH, HIDDEN)
    assert cell_dec.shape == (LAYERS_DEC, BATCH, HIDDEN)
    assert bool(jnp.all(jnp.isfinite(pvocab)))

    # correctness vs. the op-for-op JAX reference (tolerance covers MXU
    # default-precision matmuls; the softmax reciprocal is now exact)
    pv_ref, (h_ref, c_ref) = _reference_forward(
        params, output_enc, input_dec, hidden_enc, cell_state_enc, att_mask,
        first_word=True)
    assert bool(jnp.allclose(pvocab, pv_ref, rtol=2e-2, atol=2e-2))
    assert bool(jnp.allclose(hidden_dec, h_ref, rtol=2e-2, atol=2e-2))
    assert bool(jnp.allclose(cell_dec, c_ref, rtol=2e-2, atol=2e-2))

    print("KERNEL_OK")
</pallas_src>

<mosaic_0001>
module attributes {stable_mosaic.version = 11 : i64} {
  func.func @kernel(%arg0: memref<32x64xf32, #tpu.memory_space<vmem>>, %arg1: memref<64x32xf32, #tpu.memory_space<vmem>>, %arg2: memref<1x32xf32, #tpu.memory_space<vmem>>, %arg3: memref<32x16xf32, #tpu.memory_space<vmem>>, %arg4: memref<16x128xf32, #tpu.memory_space<vmem>>, %arg5: memref<1x128xf32, #tpu.memory_space<vmem>>, %arg6: memref<32x128xf32, #tpu.memory_space<vmem>>, %arg7: memref<64x128xf32, #tpu.memory_space<vmem>>, %arg8: memref<1x128xf32, #tpu.memory_space<vmem>>, %arg9: memref<8x8x64xf32, #tpu.memory_space<vmem>>, %arg10: memref<8x512xf32, #tpu.memory_space<vmem>>, %arg11: memref<512x128xf32, #tpu.memory_space<vmem>>, %arg12: memref<1x128xf32, #tpu.memory_space<vmem>>, %arg13: memref<8x8xf32, #tpu.memory_space<vmem>>, %arg14: memref<32x256xf32, #tpu.memory_space<vmem>>, %arg15: memref<128x8xf32, #tpu.memory_space<vmem>>, %arg16: memref<64x128xf32, #tpu.memory_space<vmem>>, %arg17: memref<1x128xf32, #tpu.memory_space<vmem>>, %arg18: memref<128x32xf32, #tpu.memory_space<vmem>>, %arg19: memref<1x32xf32, #tpu.memory_space<vmem>>, %arg20: memref<4x8x32xf32, #tpu.memory_space<vmem>>, %arg21: memref<2x8x32xf32, #tpu.memory_space<vmem>>, %arg22: memref<2x8x32xf32, #tpu.memory_space<vmem>>) attributes {dimension_semantics = [], scalar_prefetch = 0 : i64, scratch_operands = 0 : i64, tpu.core_type = #tpu.core_type<tc>} {
    %c0 = arith.constant 0 : index
    %c0_0 = arith.constant 0 : index
    %0 = vector.load %arg0[%c0, %c0_0] : memref<32x64xf32, #tpu.memory_space<vmem>>, vector<32x64xf32>
    %c0_1 = arith.constant 0 : index
    %c0_2 = arith.constant 0 : index
    %1 = vector.load %arg1[%c0_1, %c0_2] : memref<64x32xf32, #tpu.memory_space<vmem>>, vector<64x32xf32>
    %cst = arith.constant dense<0.000000e+00> : vector<32x32xf32>
    %2 = tpu.matmul %0, %1, %cst {dimension_numbers = #tpu.dot_dimension_numbers<[1], [0], [0], [1], [0, 0, 1, 1], [], []>} : vector<32x64xf32>, vector<64x32xf32>, vector<32x32xf32> -> vector<32x32xf32>
    %c0_3 = arith.constant 0 : index
    %c0_4 = arith.constant 0 : index
    %3 = vector.load %arg2[%c0_3, %c0_4] : memref<1x32xf32, #tpu.memory_space<vmem>>, vector<1x32xf32>
    %4 = vector.broadcast %3 : vector<1x32xf32> to vector<32x32xf32>
    %5 = arith.addf %2, %4 : vector<32x32xf32>
    %6 = vector.extract_strided_slice %5 {offsets = [0, 0], sizes = [8, 32], strides = [1, 1]} : vector<32x32xf32> to vector<8x32xf32>
    %7 = vector.extract_strided_slice %5 {offsets = [8, 0], sizes = [8, 32], strides = [1, 1]} : vector<32x32xf32> to vector<8x32xf32>
    %8 = vector.extract_strided_slice %5 {offsets = [16, 0], sizes = [8, 32], strides = [1, 1]} : vector<32x32xf32> to vector<8x32xf32>
    %9 = vector.extract_strided_slice %5 {offsets = [24, 0], sizes = [8, 32], strides = [1, 1]} : vector<32x32xf32> to vector<8x32xf32>
    %c0_5 = arith.constant 0 : index
    %c0_6 = arith.constant 0 : index
    %10 = vector.load %arg3[%c0_5, %c0_6] : memref<32x16xf32, #tpu.memory_space<vmem>>, vector<32x16xf32>
    %c0_7 = arith.constant 0 : index
    %c0_8 = arith.constant 0 : index
    %11 = vector.load %arg4[%c0_7, %c0_8] : memref<16x128xf32, #tpu.memory_space<vmem>>, vector<16x128xf32>
    %cst_9 = arith.constant dense<0.000000e+00> : vector<32x128xf32>
    %12 = tpu.matmul %10, %11, %cst_9 {dimension_numbers = #tpu.dot_dimension_numbers<[1], [0], [0], [1], [0, 0, 1, 1], [], []>} : vector<32x16xf32>, vector<16x128xf32>, vector<32x128xf32> -> vector<32x128xf32>
    %c0_10 = arith.constant 0 : index
    %c0_11 = arith.constant 0 : index
    %13 = vector.load %arg5[%c0_10, %c0_11] : memref<1x128xf32, #tpu.memory_space<vmem>>, vector<1x128xf32>
    %14 = vector.broadcast %13 : vector<1x128xf32> to vector<32x128xf32>
    %15 = arith.addf %12, %14 : vector<32x128xf32>
    %c0_12 = arith.constant 0 : index
    %c0_13 = arith.constant 0 : index
    %16 = vector.load %arg10[%c0_12, %c0_13] : memref<8x512xf32, #tpu.memory_space<vmem>>, vector<8x512xf32>
    %c0_14 = arith.constant 0 : index
    %c0_15 = arith.constant 0 : index
    %17 = vector.load %arg11[%c0_14, %c0_15] : memref<512x128xf32, #tpu.memory_space<vmem>>, vector<512x128xf32>
    %cst_16 = arith.constant dense<0.000000e+00> : vector<8x128xf32>
    %18 = tpu.matmul %16, %17, %cst_16 {dimension_numbers = #tpu.dot_dimension_numbers<[1], [0], [0], [1], [0, 0, 1, 1], [], []>} : vector<8x512xf32>, vector<512x128xf32>, vector<8x128xf32> -> vector<8x128xf32>
    %c0_17 = arith.constant 0 : index
    %c0_18 = arith.constant 0 : index
    %19 = vector.load %arg12[%c0_17, %c0_18] : memref<1x128xf32, #tpu.memory_space<vmem>>, vector<1x128xf32>
    %20 = vector.broadcast %19 : vector<1x128xf32> to vector<8x128xf32>
    %21 = arith.addf %18, %20 : vector<8x128xf32>
    %c0_19 = arith.constant 0 : index
    %c0_20 = arith.constant 0 : index
    %c0_21 = arith.constant 0 : index
    %22 = vector.load %arg9[%c0_19, %c0_20, %c0_21] : memref<8x8x64xf32, #tpu.memory_space<vmem>>, vector<8x8x64xf32>
    %c0_22 = arith.constant 0 : index
    %c0_23 = arith.constant 0 : index
    %23 = vector.load %arg13[%c0_22, %c0_23] : memref<8x8xf32, #tpu.memory_space<vmem>>, vector<8x8xf32>
    %c0_24 = arith.constant 0 : index
    %c0_25 = arith.constant 0 : index
    %24 = vector.load %arg6[%c0_24, %c0_25] : memref<32x128xf32, #tpu.memory_space<vmem>>, vector<32x128xf32>
    %c0_26 = arith.constant 0 : index
    %c0_27 = arith.constant 0 : index
    %25 = vector.load %arg7[%c0_26, %c0_27] : memref<64x128xf32, #tpu.memory_space<vmem>>, vector<64x128xf32>
    %c0_28 = arith.constant 0 : index
    %c0_29 = arith.constant 0 : index
    %26 = vector.load %arg8[%c0_28, %c0_29] : memref<1x128xf32, #tpu.memory_space<vmem>>, vector<1x128xf32>
    %c0_30 = arith.constant 0 : index
    %c0_31 = arith.constant 0 : index
    %27 = vector.load %arg14[%c0_30, %c0_31] : memref<32x256xf32, #tpu.memory_space<vmem>>, vector<32x256xf32>
    %c0_32 = arith.constant 0 : index
    %c0_33 = arith.constant 0 : index
    %28 = vector.load %arg15[%c0_32, %c0_33] : memref<128x8xf32, #tpu.memory_space<vmem>>, vector<128x8xf32>
    %c0_34 = arith.constant 0 : index
    %c0_35 = arith.constant 0 : index
    %29 = vector.load %arg16[%c0_34, %c0_35] : memref<64x128xf32, #tpu.memory_space<vmem>>, vector<64x128xf32>
    %c0_36 = arith.constant 0 : index
    %c0_37 = arith.constant 0 : index
    %30 = vector.load %arg17[%c0_36, %c0_37] : memref<1x128xf32, #tpu.memory_space<vmem>>, vector<1x128xf32>
    %c0_38 = arith.constant 0 : index
    %c0_39 = arith.constant 0 : index
    %31 = vector.load %arg18[%c0_38, %c0_39] : memref<128x32xf32, #tpu.memory_space<vmem>>, vector<128x32xf32>
    %c0_40 = arith.constant 0 : index
    %c0_41 = arith.constant 0 : index
    %32 = vector.load %arg19[%c0_40, %c0_41] : memref<1x32xf32, #tpu.memory_space<vmem>>, vector<1x32xf32>
    %33 = vector.extract_strided_slice %15 {offsets = [0, 0], sizes = [8, 128], strides = [1, 1]} : vector<32x128xf32> to vector<8x128xf32>
    %cst_42 = arith.constant dense<0.000000e+00> : vector<8x128xf32>
    %34 = tpu.matmul %6, %24, %cst_42 {dimension_numbers = #tpu.dot_dimension_numbers<[1], [0], [0], [1], [0, 0, 1, 1], [], []>} : vector<8x32xf32>, vector<32x128xf32>, vector<8x128xf32> -> vector<8x128xf32>
    %35 = arith.addf %33, %34 : vector<8x128xf32>
    %36 = vector.extract_strided_slice %35 {offsets = [0, 0], sizes = [8, 32], strides = [1, 1]} : vector<8x128xf32> to vector<8x32xf32>
    %37 = arith.negf %36 : vector<8x32xf32>
    %38 = math.exp %37 : vector<8x32xf32>
    %cst_43 = arith.constant 1.000000e+00 : f32
    %39 = vector.broadcast %cst_43 : f32 to vector<8x32xf32>
    %40 = arith.addf %39, %38 : vector<8x32xf32>
    %41 = arith.divf %39, %40 : vector<8x32xf32>
    %42 = vector.extract_strided_slice %35 {offsets = [0, 32], sizes = [8, 32], strides = [1, 1]} : vector<8x128xf32> to vector<8x32xf32>
    %43 = arith.negf %42 : vector<8x32xf32>
    %44 = math.exp %43 : vector<8x32xf32>
    %cst_44 = arith.constant 1.000000e+00 : f32
    %45 = vector.broadcast %cst_44 : f32 to vector<8x32xf32>
    %46 = arith.addf %45, %44 : vector<8x32xf32>
    %47 = arith.divf %45, %46 : vector<8x32xf32>
    %48 = vector.extract_strided_slice %35 {offsets = [0, 64], sizes = [8, 32], strides = [1, 1]} : vector<8x128xf32> to vector<8x32xf32>
    %49 = math.tanh %48 : vector<8x32xf32>
    %50 = vector.extract_strided_slice %35 {offsets = [0, 96], sizes = [8, 32], strides = [1, 1]} : vector<8x128xf32> to vector<8x32xf32>
    %51 = arith.negf %50 : vector<8x32xf32>
    %52 = math.exp %51 : vector<8x32xf32>
    %cst_45 = arith.constant 1.000000e+00 : f32
    %53 = vector.broadcast %cst_45 : f32 to vector<8x32xf32>
    %54 = arith.addf %53, %52 : vector<8x32xf32>
    %55 = arith.divf %53, %54 : vector<8x32xf32>
    %56 = arith.mulf %47, %8 : vector<8x32xf32>
    %57 = arith.mulf %41, %49 : vector<8x32xf32>
    %58 = arith.addf %56, %57 : vector<8x32xf32>
    %59 = math.tanh %58 : vector<8x32xf32>
    %60 = arith.mulf %55, %59 : vector<8x32xf32>
    %61 = tpu.concatenate %60, %7 in 1 : vector<8x32xf32>, vector<8x32xf32> -> vector<8x64xf32>
    %cst_46 = arith.constant dense<0.000000e+00> : vector<8x128xf32>
    %62 = tpu.matmul %61, %25, %cst_46 {dimension_numbers = #tpu.dot_dimension_numbers<[1], [0], [0], [1], [0, 0, 1, 1], [], []>} : vector<8x64xf32>, vector<64x128xf32>, vector<8x128xf32> -> vector<8x128xf32>
    %63 = vector.broadcast %26 : vector<1x128xf32> to vector<8x128xf32>
    %64 = arith.addf %62, %63 : vector<8x128xf32>
    %65 = vector.extract_strided_slice %64 {offsets = [0, 0], sizes = [8, 32], strides = [1, 1]} : vector<8x128xf32> to vector<8x32xf32>
    %66 = arith.negf %65 : vector<8x32xf32>
    %67 = math.exp %66 : vector<8x32xf32>
    %cst_47 = arith.constant 1.000000e+00 : f32
    %68 = vector.broadcast %cst_47 : f32 to vector<8x32xf32>
    %69 = arith.addf %68, %67 : vector<8x32xf32>
    %70 = arith.divf %68, %69 : vector<8x32xf32>
    %71 = vector.extract_strided_slice %64 {offsets = [0, 32], sizes = [8, 32], strides = [1, 1]} : vector<8x128xf32> to vector<8x32xf32>
    %72 = arith.negf %71 : vector<8x32xf32>
    %73 = math.exp %72 : vector<8x32xf32>
    %cst_48 = arith.constant 1.000000e+00 : f32
    %74 = vector.broadcast %cst_48 : f32 to vector<8x32xf32>
    %75 = arith.addf %74, %73 : vector<8x32xf32>
    %76 = arith.divf %74, %75 : vector<8x32xf32>
    %77 = vector.extract_strided_slice %64 {offsets = [0, 64], sizes = [8, 32], strides = [1, 1]} : vector<8x128xf32> to vector<8x32xf32>
    %78 = math.tanh %77 : vector<8x32xf32>
    %79 = vector.extract_strided_slice %64 {offsets = [0, 96], sizes = [8, 32], strides = [1, 1]} : vector<8x128xf32> to vector<8x32xf32>
    %80 = arith.negf %79 : vector<8x32xf32>
    %81 = math.exp %80 : vector<8x32xf32>
    %cst_49 = arith.constant 1.000000e+00 : f32
    %82 = vector.broadcast %cst_49 : f32 to vector<8x32xf32>
    %83 = arith.addf %82, %81 : vector<8x32xf32>
    %84 = arith.divf %82, %83 : vector<8x32xf32>
    %85 = arith.mulf %76, %9 : vector<8x32xf32>
    %86 = arith.mulf %70, %78 : vector<8x32xf32>
    %87 = arith.addf %85, %86 : vector<8x32xf32>
    %88 = math.tanh %87 : vector<8x32xf32>
    %89 = arith.mulf %84, %88 : vector<8x32xf32>
    %cst_50 = arith.constant dense<0.000000e+00> : vector<8x256xf32>
    %90 = tpu.matmul %89, %27, %cst_50 {dimension_numbers = #tpu.dot_dimension_numbers<[1], [0], [0], [1], [0, 0, 1, 1], [], []>} : vector<8x32xf32>, vector<32x256xf32>, vector<8x256xf32> -> vector<8x256xf32>
    %91 = vector.extract_strided_slice %90 {offsets = [0, 0], sizes = [8, 128], strides = [1, 1]} : vector<8x256xf32> to vector<8x128xf32>
    %92 = vector.extract_strided_slice %90 {offsets = [0, 128], sizes = [8, 128], strides = [1, 1]} : vector<8x256xf32> to vector<8x128xf32>
    %93 = arith.addf %21, %91 : vector<8x128xf32>
    %94 = math.tanh %93 : vector<8x128xf32>
    %cst_51 = arith.constant dense<0.000000e+00> : vector<8x8xf32>
    %95 = tpu.matmul %94, %28, %cst_51 {dimension_numbers = #tpu.dot_dimension_numbers<[1], [0], [0], [1], [0, 0, 1, 1], [], []>} : vector<8x128xf32>, vector<128x8xf32>, vector<8x8xf32> -> vector<8x8xf32>
    %96 = arith.addf %95, %23 : vector<8x8xf32>
    %cst_52 = arith.constant dense<0xFF800000> : vector<8xf32>
    %97 = vector.multi_reduction <maximumf>, %96, %cst_52 [1] : vector<8x8xf32> to vector<8xf32>
    %98 = vector.shape_cast %97 : vector<8xf32> to vector<8x1xf32>
    %99 = vector.broadcast %98 : vector<8x1xf32> to vector<8x8xf32>
    %100 = arith.subf %96, %99 : vector<8x8xf32>
    %101 = math.exp %100 : vector<8x8xf32>
    %cst_53 = arith.constant dense<0.000000e+00> : vector<8xf32>
    %102 = vector.multi_reduction <add>, %101, %cst_53 [1] : vector<8x8xf32> to vector<8xf32>
    %103 = vector.shape_cast %102 : vector<8xf32> to vector<8x1xf32>
    %104 = tpu.reciprocal %103 : vector<8x1xf32> -> vector<8x1xf32>
    %105 = vector.broadcast %104 : vector<8x1xf32> to vector<8x8xf32>
    %106 = arith.mulf %101, %105 : vector<8x8xf32>
    %107 = vector.shape_cast %106 : vector<8x8xf32> to vector<8x8x1xf32>
    %108 = vector.broadcast %107 : vector<8x8x1xf32> to vector<8x8x64xf32>
    %109 = arith.mulf %108, %22 : vector<8x8x64xf32>
    %cst_54 = arith.constant dense<0.000000e+00> : vector<8x64xf32>
    %110 = vector.multi_reduction <add>, %109, %cst_54 [1] : vector<8x8x64xf32> to vector<8x64xf32>
    %cst_55 = arith.constant dense<0.000000e+00> : vector<8x128xf32>
    %111 = tpu.matmul %110, %29, %cst_55 {dimension_numbers = #tpu.dot_dimension_numbers<[1], [0], [0], [1], [0, 0, 1, 1], [], []>} : vector<8x64xf32>, vector<64x128xf32>, vector<8x128xf32> -> vector<8x128xf32>
    %112 = arith.addf %92, %111 : vector<8x128xf32>
    %113 = vector.broadcast %30 : vector<1x128xf32> to vector<8x128xf32>
    %114 = arith.addf %112, %113 : vector<8x128xf32>
    %cst_56 = arith.constant dense<0.000000e+00> : vector<8x32xf32>
    %115 = tpu.matmul %114, %31, %cst_56 {dimension_numbers = #tpu.dot_dimension_numbers<[1], [0], [0], [1], [0, 0, 1, 1], [], []>} : vector<8x128xf32>, vector<128x32xf32>, vector<8x32xf32> -> vector<8x32xf32>
    %116 = vector.broadcast %32 : vector<1x32xf32> to vector<8x32xf32>
    %117 = arith.addf %115, %116 : vector<8x32xf32>
    %c0_57 = arith.constant 0 : index
    %c0_58 = arith.constant 0 : index
    %c0_59 = arith.constant 0 : index
    %118 = vector.load %arg20[%c0_57, %c0_58, %c0_59] : memref<4x8x32xf32, #tpu.memory_space<vmem>>, vector<1x8x32xf32>
    %119 = vector.shape_cast %118 : vector<1x8x32xf32> to vector<8x32xf32>
    %120 = vector.shape_cast %117 : vector<8x32xf32> to vector<1x8x32xf32>
    tpu.vector_store %arg20[%c0_57, %c0_58, %c0_59], %120 {strides = array<i32>} : memref<4x8x32xf32, #tpu.memory_space<vmem>>, vector<1x8x32xf32>,
    %121 = vector.extract_strided_slice %15 {offsets = [8, 0], sizes = [8, 128], strides = [1, 1]} : vector<32x128xf32> to vector<8x128xf32>
    %cst_60 = arith.constant dense<0.000000e+00> : vector<8x128xf32>
    %122 = tpu.matmul %60, %24, %cst_60 {dimension_numbers = #tpu.dot_dimension_numbers<[1], [0], [0], [1], [0, 0, 1, 1], [], []>} : vector<8x32xf32>, vector<32x128xf32>, vector<8x128xf32> -> vector<8x128xf32>
    %123 = arith.addf %121, %122 : vector<8x128xf32>
    %124 = vector.extract_strided_slice %123 {offsets = [0, 0], sizes = [8, 32], strides = [1, 1]} : vector<8x128xf32> to vector<8x32xf32>
    %125 = arith.negf %124 : vector<8x32xf32>
    %126 = math.exp %125 : vector<8x32xf32>
    %cst_61 = arith.constant 1.000000e+00 : f32
    %127 = vector.broadcast %cst_61 : f32 to vector<8x32xf32>
    %128 = arith.addf %127, %126 : vector<8x32xf32>
    %129 = arith.divf %127, %128 : vector<8x32xf32>
    %130 = vector.extract_strided_slice %123 {offsets = [0, 32], sizes = [8, 32], strides = [1, 1]} : vector<8x128xf32> to vector<8x32xf32>
    %131 = arith.negf %130 : vector<8x32xf32>
    %132 = math.exp %131 : vector<8x32xf32>
    %cst_62 = arith.constant 1.000000e+00 : f32
    %133 = vector.broadcast %cst_62 : f32 to vector<8x32xf32>
    %134 = arith.addf %133, %132 : vector<8x32xf32>
    %135 = arith.divf %133, %134 : vector<8x32xf32>
    %136 = vector.extract_strided_slice %123 {offsets = [0, 64], sizes = [8, 32], strides = [1, 1]} : vector<8x128xf32> to vector<8x32xf32>
    %137 = math.tanh %136 : vector<8x32xf32>
    %138 = vector.extract_strided_slice %123 {offsets = [0, 96], sizes = [8, 32], strides = [1, 1]} : vector<8x128xf32> to vector<8x32xf32>
    %139 = arith.negf %138 : vector<8x32xf32>
    %140 = math.exp %139 : vector<8x32xf32>
    %cst_63 = arith.constant 1.000000e+00 : f32
    %141 = vector.broadcast %cst_63 : f32 to vector<8x32xf32>
    %142 = arith.addf %141, %140 : vector<8x32xf32>
    %143 = arith.divf %141, %142 : vector<8x32xf32>
    %144 = arith.mulf %135, %58 : vector<8x32xf32>
    %145 = arith.mulf %129, %137 : vector<8x32xf32>
    %146 = arith.addf %144, %145 : vector<8x32xf32>
    %147 = math.tanh %146 : vector<8x32xf32>
    %148 = arith.mulf %143, %147 : vector<8x32xf32>
    %149 = tpu.concatenate %148, %89 in 1 : vector<8x32xf32>, vector<8x32xf32> -> vector<8x64xf32>
    %cst_64 = arith.constant dense<0.000000e+00> : vector<8x128xf32>
    %150 = tpu.matmul %149, %25, %cst_64 {dimension_numbers = #tpu.dot_dimension_numbers<[1], [0], [0], [1], [0, 0, 1, 1], [], []>} : vector<8x64xf32>, vector<64x128xf32>, vector<8x128xf32> -> vector<8x128xf32>
    %151 = vector.broadcast %26 : vector<1x128xf32> to vector<8x128xf32>
    %152 = arith.addf %150, %151 : vector<8x128xf32>
    %153 = vector.extract_strided_slice %152 {offsets = [0, 0], sizes = [8, 32], strides = [1, 1]} : vector<8x128xf32> to vector<8x32xf32>
    %154 = arith.negf %153 : vector<8x32xf32>
    %155 = math.exp %154 : vector<8x32xf32>
    %cst_65 = arith.constant 1.000000e+00 : f32
    %156 = vector.broadcast %cst_65 : f32 to vector<8x32xf32>
    %157 = arith.addf %156, %155 : vector<8x32xf32>
    %158 = arith.divf %156, %157 : vector<8x32xf32>
    %159 = vector.extract_strided_slice %152 {offsets = [0, 32], sizes = [8, 32], strides = [1, 1]} : vector<8x128xf32> to vector<8x32xf32>
    %160 = arith.negf %159 : vector<8x32xf32>
    %161 = math.exp %160 : vector<8x32xf32>
    %cst_66 = arith.constant 1.000000e+00 : f32
    %162 = vector.broadcast %cst_66 : f32 to vector<8x32xf32>
    %163 = arith.addf %162, %161 : vector<8x32xf32>
    %164 = arith.divf %162, %163 : vector<8x32xf32>
    %165 = vector.extract_strided_slice %152 {offsets = [0, 64], sizes = [8, 32], strides = [1, 1]} : vector<8x128xf32> to vector<8x32xf32>
    %166 = math.tanh %165 : vector<8x32xf32>
    %167 = vector.extract_strided_slice %152 {offsets = [0, 96], sizes = [8, 32], strides = [1, 1]} : vector<8x128xf32> to vector<8x32xf32>
    %168 = arith.negf %167 : vector<8x32xf32>
    %169 = math.exp %168 : vector<8x32xf32>
    %cst_67 = arith.constant 1.000000e+00 : f32
    %170 = vector.broadcast %cst_67 : f32 to vector<8x32xf32>
    %171 = arith.addf %170, %169 : vector<8x32xf32>
    %172 = arith.divf %170, %171 : vector<8x32xf32>
    %173 = arith.mulf %164, %87 : vector<8x32xf32>
    %174 = arith.mulf %158, %166 : vector<8x32xf32>
    %175 = arith.addf %173, %174 : vector<8x32xf32>
    %176 = math.tanh %175 : vector<8x32xf32>
    %177 = arith.mulf %172, %176 : vector<8x32xf32>
    %cst_68 = arith.constant dense<0.000000e+00> : vector<8x256xf32>
    %178 = tpu.matmul %177, %27, %cst_68 {dimension_numbers = #tpu.dot_dimension_numbers<[1], [0], [0], [1], [0, 0, 1, 1], [], []>} : vector<8x32xf32>, vector<32x256xf32>, vector<8x256xf32> -> vector<8x256xf32>
    %179 = vector.extract_strided_slice %178 {offsets = [0, 0], sizes = [8, 128], strides = [1, 1]} : vector<8x256xf32> to vector<8x128xf32>
    %180 = vector.extract_strided_slice %178 {offsets = [0, 128], sizes = [8, 128], strides = [1, 1]} : vector<8x256xf32> to vector<8x128xf32>
    %181 = arith.addf %21, %179 : vector<8x128xf32>
    %182 = math.tanh %181 : vector<8x128xf32>
    %cst_69 = arith.constant dense<0.000000e+00> : vector<8x8xf32>
    %183 = tpu.matmul %182, %28, %cst_69 {dimension_numbers = #tpu.dot_dimension_numbers<[1], [0], [0], [1], [0, 0, 1, 1], [], []>} : vector<8x128xf32>, vector<128x8xf32>, vector<8x8xf32> -> vector<8x8xf32>
    %184 = arith.addf %183, %23 : vector<8x8xf32>
    %cst_70 = arith.constant dense<0xFF800000> : vector<8xf32>
    %185 = vector.multi_reduction <maximumf>, %184, %cst_70 [1] : vector<8x8xf32> to vector<8xf32>
    %186 = vector.shape_cast %185 : vector<8xf32> to vector<8x1xf32>
    %187 = vector.broadcast %186 : vector<8x1xf32> to vector<8x8xf32>
    %188 = arith.subf %184, %187 : vector<8x8xf32>
    %189 = math.exp %188 : vector<8x8xf32>
    %cst_71 = arith.constant dense<0.000000e+00> : vector<8xf32>
    %190 = vector.multi_reduction <add>, %189, %cst_71 [1] : vector<8x8xf32> to vector<8xf32>
    %191 = vector.shape_cast %190 : vector<8xf32> to vector<8x1xf32>
    %192 = tpu.reciprocal %191 : vector<8x1xf32> -> vector<8x1xf32>
    %193 = vector.broadcast %192 : vector<8x1xf32> to vector<8x8xf32>
    %194 = arith.mulf %189, %193 : vector<8x8xf32>
    %195 = vector.shape_cast %194 : vector<8x8xf32> to vector<8x8x1xf32>
    %196 = vector.broadcast %195 : vector<8x8x1xf32> to vector<8x8x64xf32>
    %197 = arith.mulf %196, %22 : vector<8x8x64xf32>
    %cst_72 = arith.constant dense<0.000000e+00> : vector<8x64xf32>
    %198 = vector.multi_reduction <add>, %197, %cst_72 [1] : vector<8x8x64xf32> to vector<8x64xf32>
    %cst_73 = arith.constant dense<0.000000e+00> : vector<8x128xf32>
    %199 = tpu.matmul %198, %29, %cst_73 {dimension_numbers = #tpu.dot_dimension_numbers<[1], [0], [0], [1], [0, 0, 1, 1], [], []>} : vector<8x64xf32>, vector<64x128xf32>, vector<8x128xf32> -> vector<8x128xf32>
    %200 = arith.addf %180, %199 : vector<8x128xf32>
    %201 = vector.broadcast %30 : vector<1x128xf32> to vector<8x128xf32>
    %202 = arith.addf %200, %201 : vector<8x128xf32>
    %cst_74 = arith.constant dense<0.000000e+00> : vector<8x32xf32>
    %203 = tpu.matmul %202, %31, %cst_74 {dimension_numbers = #tpu.dot_dimension_numbers<[1], [0], [0], [1], [0, 0, 1, 1], [], []>} : vector<8x128xf32>, vector<128x32xf32>, vector<8x32xf32> -> vector<8x32xf32>
    %204 = vector.broadcast %32 : vector<1x32xf32> to vector<8x32xf32>
    %205 = arith.addf %203, %204 : vector<8x32xf32>
    %c1 = arith.constant 1 : index
    %c0_75 = arith.constant 0 : index
    %c0_76 = arith.constant 0 : index
    %206 = vector.load %arg20[%c1, %c0_75, %c0_76] : memref<4x8x32xf32, #tpu.memory_space<vmem>>, vector<1x8x32xf32>
    %207 = vector.shape_cast %206 : vector<1x8x32xf32> to vector<8x32xf32>
    %208 = vector.shape_cast %205 : vector<8x32xf32> to vector<1x8x32xf32>
    tpu.vector_store %arg20[%c1, %c0_75, %c0_76], %208 {strides = array<i32>} : memref<4x8x32xf32, #tpu.memory_space<vmem>>, vector<1x8x32xf32>,
    %209 = vector.extract_strided_slice %15 {offsets = [16, 0], sizes = [8, 128], strides = [1, 1]} : vector<32x128xf32> to vector<8x128xf32>
    %cst_77 = arith.constant dense<0.000000e+00> : vector<8x128xf32>
    %210 = tpu.matmul %148, %24, %cst_77 {dimension_numbers = #tpu.dot_dimension_numbers<[1], [0], [0], [1], [0, 0, 1, 1], [], []>} : vector<8x32xf32>, vector<32x128xf32>, vector<8x128xf32> -> vector<8x128xf32>
    %211 = arith.addf %209, %210 : vector<8x128xf32>
    %212 = vector.extract_strided_slice %211 {offsets = [0, 0], sizes = [8, 32], strides = [1, 1]} : vector<8x128xf32> to vector<8x32xf32>
    %213 = arith.negf %212 : vector<8x32xf32>
    %214 = math.exp %213 : vector<8x32xf32>
    %cst_78 = arith.constant 1.000000e+00 : f32
    %215 = vector.broadcast %cst_78 : f32 to vector<8x32xf32>
    %216 = arith.addf %215, %214 : vector<8x32xf32>
    %217 = arith.divf %215, %216 : vector<8x32xf32>
    %218 = vector.extract_strided_slice %211 {offsets = [0, 32], sizes = [8, 32], strides = [1, 1]} : vector<8x128xf32> to vector<8x32xf32>
    %219 = arith.negf %218 : vector<8x32xf32>
    %220 = math.exp %219 : vector<8x32xf32>
    %cst_79 = arith.constant 1.000000e+00 : f32
    %221 = vector.broadcast %cst_79 : f32 to vector<8x32xf32>
    %222 = arith.addf %221, %220 : vector<8x32xf32>
    %223 = arith.divf %221, %222 : vector<8x32xf32>
    %224 = vector.extract_strided_slice %211 {offsets = [0, 64], sizes = [8, 32], strides = [1, 1]} : vector<8x128xf32> to vector<8x32xf32>
    %225 = math.tanh %224 : vector<8x32xf32>
    %226 = vector.extract_strided_slice %211 {offsets = [0, 96], sizes = [8, 32], strides = [1, 1]} : vector<8x128xf32> to vector<8x32xf32>
    %227 = arith.negf %226 : vector<8x32xf32>
    %228 = math.exp %227 : vector<8x32xf32>
    %cst_80 = arith.constant 1.000000e+00 : f32
    %229 = vector.broadcast %cst_80 : f32 to vector<8x32xf32>
    %230 = arith.addf %229, %228 : vector<8x32xf32>
    %231 = arith.divf %229, %230 : vector<8x32xf32>
    %232 = arith.mulf %223, %146 : vector<8x32xf32>
    %233 = arith.mulf %217, %225 : vector<8x32xf32>
    %234 = arith.addf %232, %233 : vector<8x32xf32>
    %235 = math.tanh %234 : vector<8x32xf32>
    %236 = arith.mulf %231, %235 : vector<8x32xf32>
    %237 = tpu.concatenate %236, %177 in 1 : vector<8x32xf32>, vector<8x32xf32> -> vector<8x64xf32>
    %cst_81 = arith.constant dense<0.000000e+00> : vector<8x128xf32>
    %238 = tpu.matmul %237, %25, %cst_81 {dimension_numbers = #tpu.dot_dimension_numbers<[1], [0], [0], [1], [0, 0, 1, 1], [], []>} : vector<8x64xf32>, vector<64x128xf32>, vector<8x128xf32> -> vector<8x128xf32>
    %239 = vector.broadcast %26 : vector<1x128xf32> to vector<8x128xf32>
    %240 = arith.addf %238, %239 : vector<8x128xf32>
    %241 = vector.extract_strided_slice %240 {offsets = [0, 0], sizes = [8, 32], strides = [1, 1]} : vector<8x128xf32> to vector<8x32xf32>
    %242 = arith.negf %241 : vector<8x32xf32>
    %243 = math.exp %242 : vector<8x32xf32>
    %cst_82 = arith.constant 1.000000e+00 : f32
    %244 = vector.broadcast %cst_82 : f32 to vector<8x32xf32>
    %245 = arith.addf %244, %243 : vector<8x32xf32>
    %246 = arith.divf %244, %245 : vector<8x32xf32>
    %247 = vector.extract_strided_slice %240 {offsets = [0, 32], sizes = [8, 32], strides = [1, 1]} : vector<8x128xf32> to vector<8x32xf32>
    %248 = arith.negf %247 : vector<8x32xf32>
    %249 = math.exp %248 : vector<8x32xf32>
    %cst_83 = arith.constant 1.000000e+00 : f32
    %250 = vector.broadcast %cst_83 : f32 to vector<8x32xf32>
    %251 = arith.addf %250, %249 : vector<8x32xf32>
    %252 = arith.divf %250, %251 : vector<8x32xf32>
    %253 = vector.extract_strided_slice %240 {offsets = [0, 64], sizes = [8, 32], strides = [1, 1]} : vector<8x128xf32> to vector<8x32xf32>
    %254 = math.tanh %253 : vector<8x32xf32>
    %255 = vector.extract_strided_slice %240 {offsets = [0, 96], sizes = [8, 32], strides = [1, 1]} : vector<8x128xf32> to vector<8x32xf32>
    %256 = arith.negf %255 : vector<8x32xf32>
    %257 = math.exp %256 : vector<8x32xf32>
    %cst_84 = arith.constant 1.000000e+00 : f32
    %258 = vector.broadcast %cst_84 : f32 to vector<8x32xf32>
    %259 = arith.addf %258, %257 : vector<8x32xf32>
    %260 = arith.divf %258, %259 : vector<8x32xf32>
    %261 = arith.mulf %252, %175 : vector<8x32xf32>
    %262 = arith.mulf %246, %254 : vector<8x32xf32>
    %263 = arith.addf %261, %262 : vector<8x32xf32>
    %264 = math.tanh %263 : vector<8x32xf32>
    %265 = arith.mulf %260, %264 : vector<8x32xf32>
    %cst_85 = arith.constant dense<0.000000e+00> : vector<8x256xf32>
    %266 = tpu.matmul %265, %27, %cst_85 {dimension_numbers = #tpu.dot_dimension_numbers<[1], [0], [0], [1], [0, 0, 1, 1], [], []>} : vector<8x32xf32>, vector<32x256xf32>, vector<8x256xf32> -> vector<8x256xf32>
    %267 = vector.extract_strided_slice %266 {offsets = [0, 0], sizes = [8, 128], strides = [1, 1]} : vector<8x256xf32> to vector<8x128xf32>
    %268 = vector.extract_strided_slice %266 {offsets = [0, 128], sizes = [8, 128], strides = [1, 1]} : vector<8x256xf32> to vector<8x128xf32>
    %269 = arith.addf %21, %267 : vector<8x128xf32>
    %270 = math.tanh %269 : vector<8x128xf32>
    %cst_86 = arith.constant dense<0.000000e+00> : vector<8x8xf32>
    %271 = tpu.matmul %270, %28, %cst_86 {dimension_numbers = #tpu.dot_dimension_numbers<[1], [0], [0], [1], [0, 0, 1, 1], [], []>} : vector<8x128xf32>, vector<128x8xf32>, vector<8x8xf32> -> vector<8x8xf32>
    %272 = arith.addf %271, %23 : vector<8x8xf32>
    %cst_87 = arith.constant dense<0xFF800000> : vector<8xf32>
    %273 = vector.multi_reduction <maximumf>, %272, %cst_87 [1] : vector<8x8xf32> to vector<8xf32>
    %274 = vector.shape_cast %273 : vector<8xf32> to vector<8x1xf32>
    %275 = vector.broadcast %274 : vector<8x1xf32> to vector<8x8xf32>
    %276 = arith.subf %272, %275 : vector<8x8xf32>
    %277 = math.exp %276 : vector<8x8xf32>
    %cst_88 = arith.constant dense<0.000000e+00> : vector<8xf32>
    %278 = vector.multi_reduction <add>, %277, %cst_88 [1] : vector<8x8xf32> to vector<8xf32>
    %279 = vector.shape_cast %278 : vector<8xf32> to vector<8x1xf32>
    %280 = tpu.reciprocal %279 : vector<8x1xf32> -> vector<8x1xf32>
    %281 = vector.broadcast %280 : vector<8x1xf32> to vector<8x8xf32>
    %282 = arith.mulf %277, %281 : vector<8x8xf32>
    %283 = vector.shape_cast %282 : vector<8x8xf32> to vector<8x8x1xf32>
    %284 = vector.broadcast %283 : vector<8x8x1xf32> to vector<8x8x64xf32>
    %285 = arith.mulf %284, %22 : vector<8x8x64xf32>
    %cst_89 = arith.constant dense<0.000000e+00> : vector<8x64xf32>
    %286 = vector.multi_reduction <add>, %285, %cst_89 [1] : vector<8x8x64xf32> to vector<8x64xf32>
    %cst_90 = arith.constant dense<0.000000e+00> : vector<8x128xf32>
    %287 = tpu.matmul %286, %29, %cst_90 {dimension_numbers = #tpu.dot_dimension_numbers<[1], [0], [0], [1], [0, 0, 1, 1], [], []>} : vector<8x64xf32>, vector<64x128xf32>, vector<8x128xf32> -> vector<8x128xf32>
    %288 = arith.addf %268, %287 : vector<8x128xf32>
    %289 = vector.broadcast %30 : vector<1x128xf32> to vector<8x128xf32>
    %290 = arith.addf %288, %289 : vector<8x128xf32>
    %cst_91 = arith.constant dense<0.000000e+00> : vector<8x32xf32>
    %291 = tpu.matmul %290, %31, %cst_91 {dimension_numbers = #tpu.dot_dimension_numbers<[1], [0], [0], [1], [0, 0, 1, 1], [], []>} : vector<8x128xf32>, vector<128x32xf32>, vector<8x32xf32> -> vector<8x32xf32>
    %292 = vector.broadcast %32 : vector<1x32xf32> to vector<8x32xf32>
    %293 = arith.addf %291, %292 : vector<8x32xf32>
    %c2 = arith.constant 2 : index
    %c0_92 = arith.constant 0 : index
    %c0_93 = arith.constant 0 : index
    %294 = vector.load %arg20[%c2, %c0_92, %c0_93] : memref<4x8x32xf32, #tpu.memory_space<vmem>>, vector<1x8x32xf32>
    %295 = vector.shape_cast %294 : vector<1x8x32xf32> to vector<8x32xf32>
    %296 = vector.shape_cast %293 : vector<8x32xf32> to vector<1x8x32xf32>
    tpu.vector_store %arg20[%c2, %c0_92, %c0_93], %296 {strides = array<i32>} : memref<4x8x32xf32, #tpu.memory_space<vmem>>, vector<1x8x32xf32>,
    %297 = vector.extract_strided_slice %15 {offsets = [24, 0], sizes = [8, 128], strides = [1, 1]} : vector<32x128xf32> to vector<8x128xf32>
    %cst_94 = arith.constant dense<0.000000e+00> : vector<8x128xf32>
    %298 = tpu.matmul %236, %24, %cst_94 {dimension_numbers = #tpu.dot_dimension_numbers<[1], [0], [0], [1], [0, 0, 1, 1], [], []>} : vector<8x32xf32>, vector<32x128xf32>, vector<8x128xf32> -> vector<8x128xf32>
    %299 = arith.addf %297, %298 : vector<8x128xf32>
    %300 = vector.extract_strided_slice %299 {offsets = [0, 0], sizes = [8, 32], strides = [1, 1]} : vector<8x128xf32> to vector<8x32xf32>
    %301 = arith.negf %300 : vector<8x32xf32>
    %302 = math.exp %301 : vector<8x32xf32>
    %cst_95 = arith.constant 1.000000e+00 : f32
    %303 = vector.broadcast %cst_95 : f32 to vector<8x32xf32>
    %304 = arith.addf %303, %302 : vector<8x32xf32>
    %305 = arith.divf %303, %304 : vector<8x32xf32>
    %306 = vector.extract_strided_slice %299 {offsets = [0, 32], sizes = [8, 32], strides = [1, 1]} : vector<8x128xf32> to vector<8x32xf32>
    %307 = arith.negf %306 : vector<8x32xf32>
    %308 = math.exp %307 : vector<8x32xf32>
    %cst_96 = arith.constant 1.000000e+00 : f32
    %309 = vector.broadcast %cst_96 : f32 to vector<8x32xf32>
    %310 = arith.addf %309, %308 : vector<8x32xf32>
    %311 = arith.divf %309, %310 : vector<8x32xf32>
    %312 = vector.extract_strided_slice %299 {offsets = [0, 64], sizes = [8, 32], strides = [1, 1]} : vector<8x128xf32> to vector<8x32xf32>
    %313 = math.tanh %312 : vector<8x32xf32>
    %314 = vector.extract_strided_slice %299 {offsets = [0, 96], sizes = [8, 32], strides = [1, 1]} : vector<8x128xf32> to vector<8x32xf32>
    %315 = arith.negf %314 : vector<8x32xf32>
    %316 = math.exp %315 : vector<8x32xf32>
    %cst_97 = arith.constant 1.000000e+00 : f32
    %317 = vector.broadcast %cst_97 : f32 to vector<8x32xf32>
    %318 = arith.addf %317, %316 : vector<8x32xf32>
    %319 = arith.divf %317, %318 : vector<8x32xf32>
    %320 = arith.mulf %311, %234 : vector<8x32xf32>
    %321 = arith.mulf %305, %313 : vector<8x32xf32>
    %322 = arith.addf %320, %321 : vector<8x32xf32>
    %323 = math.tanh %322 : vector<8x32xf32>
    %324 = arith.mulf %319, %323 : vector<8x32xf32>
    %325 = tpu.concatenate %324, %265 in 1 : vector<8x32xf32>, vector<8x32xf32> -> vector<8x64xf32>
    %cst_98 = arith.constant dense<0.000000e+00> : vector<8x128xf32>
    %326 = tpu.matmul %325, %25, %cst_98 {dimension_numbers = #tpu.dot_dimension_numbers<[1], [0], [0], [1], [0, 0, 1, 1], [], []>} : vector<8x64xf32>, vector<64x128xf32>, vector<8x128xf32> -> vector<8x128xf32>
    %327 = vector.broadcast %26 : vector<1x128xf32> to vector<8x128xf32>
    %328 = arith.addf %326, %327 : vector<8x128xf32>
    %329 = vector.extract_strided_slice %328 {offsets = [0, 0], sizes = [8, 32], strides = [1, 1]} : vector<8x128xf32> to vector<8x32xf32>
    %330 = arith.negf %329 : vector<8x32xf32>
    %331 = math.exp %330 : vector<8x32xf32>
    %cst_99 = arith.constant 1.000000e+00 : f32
    %332 = vector.broadcast %cst_99 : f32 to vector<8x32xf32>
    %333 = arith.addf %332, %331 : vector<8x32xf32>
    %334 = arith.divf %332, %333 : vector<8x32xf32>
    %335 = vector.extract_strided_slice %328 {offsets = [0, 32], sizes = [8, 32], strides = [1, 1]} : vector<8x128xf32> to vector<8x32xf32>
    %336 = arith.negf %335 : vector<8x32xf32>
    %337 = math.exp %336 : vector<8x32xf32>
    %cst_100 = arith.constant 1.000000e+00 : f32
    %338 = vector.broadcast %cst_100 : f32 to vector<8x32xf32>
    %339 = arith.addf %338, %337 : vector<8x32xf32>
    %340 = arith.divf %338, %339 : vector<8x32xf32>
    %341 = vector.extract_strided_slice %328 {offsets = [0, 64], sizes = [8, 32], strides = [1, 1]} : vector<8x128xf32> to vector<8x32xf32>
    %342 = math.tanh %341 : vector<8x32xf32>
    %343 = vector.extract_strided_slice %328 {offsets = [0, 96], sizes = [8, 32], strides = [1, 1]} : vector<8x128xf32> to vector<8x32xf32>
    %344 = arith.negf %343 : vector<8x32xf32>
    %345 = math.exp %344 : vector<8x32xf32>
    %cst_101 = arith.constant 1.000000e+00 : f32
    %346 = vector.broadcast %cst_101 : f32 to vector<8x32xf32>
    %347 = arith.addf %346, %345 : vector<8x32xf32>
    %348 = arith.divf %346, %347 : vector<8x32xf32>
    %349 = arith.mulf %340, %263 : vector<8x32xf32>
    %350 = arith.mulf %334, %342 : vector<8x32xf32>
    %351 = arith.addf %349, %350 : vector<8x32xf32>
    %352 = math.tanh %351 : vector<8x32xf32>
    %353 = arith.mulf %348, %352 : vector<8x32xf32>
    %cst_102 = arith.constant dense<0.000000e+00> : vector<8x256xf32>
    %354 = tpu.matmul %353, %27, %cst_102 {dimension_numbers = #tpu.dot_dimension_numbers<[1], [0], [0], [1], [0, 0, 1, 1], [], []>} : vector<8x32xf32>, vector<32x256xf32>, vector<8x256xf32> -> vector<8x256xf32>
    %355 = vector.extract_strided_slice %354 {offsets = [0, 0], sizes = [8, 128], strides = [1, 1]} : vector<8x256xf32> to vector<8x128xf32>
    %356 = vector.extract_strided_slice %354 {offsets = [0, 128], sizes = [8, 128], strides = [1, 1]} : vector<8x256xf32> to vector<8x128xf32>
    %357 = arith.addf %21, %355 : vector<8x128xf32>
    %358 = math.tanh %357 : vector<8x128xf32>
    %cst_103 = arith.constant dense<0.000000e+00> : vector<8x8xf32>
    %359 = tpu.matmul %358, %28, %cst_103 {dimension_numbers = #tpu.dot_dimension_numbers<[1], [0], [0], [1], [0, 0, 1, 1], [], []>} : vector<8x128xf32>, vector<128x8xf32>, vector<8x8xf32> -> vector<8x8xf32>
    %360 = arith.addf %359, %23 : vector<8x8xf32>
    %cst_104 = arith.constant dense<0xFF800000> : vector<8xf32>
    %361 = vector.multi_reduction <maximumf>, %360, %cst_104 [1] : vector<8x8xf32> to vector<8xf32>
    %362 = vector.shape_cast %361 : vector<8xf32> to vector<8x1xf32>
    %363 = vector.broadcast %362 : vector<8x1xf32> to vector<8x8xf32>
    %364 = arith.subf %360, %363 : vector<8x8xf32>
    %365 = math.exp %364 : vector<8x8xf32>
    %cst_105 = arith.constant dense<0.000000e+00> : vector<8xf32>
    %366 = vector.multi_reduction <add>, %365, %cst_105 [1] : vector<8x8xf32> to vector<8xf32>
    %367 = vector.shape_cast %366 : vector<8xf32> to vector<8x1xf32>
    %368 = tpu.reciprocal %367 : vector<8x1xf32> -> vector<8x1xf32>
    %369 = vector.broadcast %368 : vector<8x1xf32> to vector<8x8xf32>
    %370 = arith.mulf %365, %369 : vector<8x8xf32>
    %371 = vector.shape_cast %370 : vector<8x8xf32> to vector<8x8x1xf32>
    %372 = vector.broadcast %371 : vector<8x8x1xf32> to vector<8x8x64xf32>
    %373 = arith.mulf %372, %22 : vector<8x8x64xf32>
    %cst_106 = arith.constant dense<0.000000e+00> : vector<8x64xf32>
    %374 = vector.multi_reduction <add>, %373, %cst_106 [1] : vector<8x8x64xf32> to vector<8x64xf32>
    %cst_107 = arith.constant dense<0.000000e+00> : vector<8x128xf32>
    %375 = tpu.matmul %374, %29, %cst_107 {dimension_numbers = #tpu.dot_dimension_numbers<[1], [0], [0], [1], [0, 0, 1, 1], [], []>} : vector<8x64xf32>, vector<64x128xf32>, vector<8x128xf32> -> vector<8x128xf32>
    %376 = arith.addf %356, %375 : vector<8x128xf32>
    %377 = vector.broadcast %30 : vector<1x128xf32> to vector<8x128xf32>
    %378 = arith.addf %376, %377 : vector<8x128xf32>
    %cst_108 = arith.constant dense<0.000000e+00> : vector<8x32xf32>
    %379 = tpu.matmul %378, %31, %cst_108 {dimension_numbers = #tpu.dot_dimension_numbers<[1], [0], [0], [1], [0, 0, 1, 1], [], []>} : vector<8x128xf32>, vector<128x32xf32>, vector<8x32xf32> -> vector<8x32xf32>
    %380 = vector.broadcast %32 : vector<1x32xf32> to vector<8x32xf32>
    %381 = arith.addf %379, %380 : vector<8x32xf32>
    %c3 = arith.constant 3 : index
    %c0_109 = arith.constant 0 : index
    %c0_110 = arith.constant 0 : index
    %382 = vector.load %arg20[%c3, %c0_109, %c0_110] : memref<4x8x32xf32, #tpu.memory_space<vmem>>, vector<1x8x32xf32>
    %383 = vector.shape_cast %382 : vector<1x8x32xf32> to vector<8x32xf32>
    %384 = vector.shape_cast %381 : vector<8x32xf32> to vector<1x8x32xf32>
    tpu.vector_store %arg20[%c3, %c0_109, %c0_110], %384 {strides = array<i32>} : memref<4x8x32xf32, #tpu.memory_space<vmem>>, vector<1x8x32xf32>,
    %c0_111 = arith.constant 0 : index
    %c0_112 = arith.constant 0 : index
    %c0_113 = arith.constant 0 : index
    %385 = vector.load %arg21[%c0_111, %c0_112, %c0_113] : memref<2x8x32xf32, #tpu.memory_space<vmem>>, vector<1x8x32xf32>
    %386 = vector.shape_cast %385 : vector<1x8x32xf32> to vector<8x32xf32>
    %387 = vector.shape_cast %324 : vector<8x32xf32> to vector<1x8x32xf32>
    tpu.vector_store %arg21[%c0_111, %c0_112, %c0_113], %387 {strides = array<i32>} : memref<2x8x32xf32, #tpu.memory_space<vmem>>, vector<1x8x32xf32>,
    %c1_114 = arith.constant 1 : index
    %c0_115 = arith.constant 0 : index
    %c0_116 = arith.constant 0 : index
    %388 = vector.load %arg21[%c1_114, %c0_115, %c0_116] : memref<2x8x32xf32, #tpu.memory_space<vmem>>, vector<1x8x32xf32>
    %389 = vector.shape_cast %388 : vector<1x8x32xf32> to vector<8x32xf32>
    %390 = vector.shape_cast %353 : vector<8x32xf32> to vector<1x8x32xf32>
    tpu.vector_store %arg21[%c1_114, %c0_115, %c0_116], %390 {strides = array<i32>} : memref<2x8x32xf32, #tpu.memory_space<vmem>>, vector<1x8x32xf32>,
    %c0_117 = arith.constant 0 : index
    %c0_118 = arith.constant 0 : index
    %c0_119 = arith.constant 0 : index
    %391 = vector.load %arg22[%c0_117, %c0_118, %c0_119] : memref<2x8x32xf32, #tpu.memory_space<vmem>>, vector<1x8x32xf32>
    %392 = vector.shape_cast %391 : vector<1x8x32xf32> to vector<8x32xf32>
    %393 = vector.shape_cast %322 : vector<8x32xf32> to vector<1x8x32xf32>
    tpu.vector_store %arg22[%c0_117, %c0_118, %c0_119], %393 {strides = array<i32>} : memref<2x8x32xf32, #tpu.memory_space<vmem>>, vector<1x8x32xf32>,
    %c1_120 = arith.constant 1 : index
    %c0_121 = arith.constant 0 : index
    %c0_122 = arith.constant 0 : index
    %394 = vector.load %arg22[%c1_120, %c0_121, %c0_122] : memref<2x8x32xf32, #tpu.memory_space<vmem>>, vector<1x8x32xf32>
    %395 = vector.shape_cast %394 : vector<1x8x32xf32> to vector<8x32xf32>
    %396 = vector.shape_cast %351 : vector<8x32xf32> to vector<1x8x32xf32>
    tpu.vector_store %arg22[%c1_120, %c0_121, %c0_122], %396 {strides = array<i32>} : memref<2x8x32xf32, #tpu.memory_space<vmem>>, vector<1x8x32xf32>,
    return
  }
}

</mosaic_0001>

<llo_original>
// kernel: tile.14
$region0: #{tile.14}
  %s0 = inlined_call_operand.vmem [shape: f32[8,16], index: 0, kind: input, shape index: {}]
  %s1 = inlined_call_operand.vmem [shape: f32[1,128], index: 1, kind: output, shape index: {}]
  $region1: #{tile.14} parent=0
    #allocation0 [shape = 'u8[4096]{0}', space=vmem, size = 0x1000, scoped, tag = 'scoped mem for output reshape']
    %v2 = vld [vmem:[%s0] sm:$0x1]
    %vm3 = vcmask 130048
    %4 = vst.msk [vmem:[#allocation0] sm:$0x1] %vm3, %v2
    %s5 = scalar_lea.vmem %s0, 7
    %v6 = vld [vmem:[%s5] sm:$0x1]
    %7 = vrot.lane.b32.xlu0 %v6, 112
    %v8 = vpop.permute.xlu0 %7
    %vm9 = vcmask 1048448
    %10 = vst.msk [vmem:[#allocation0] sm:$0x1] %vm9, %v8
    %s11 = scalar_lea.vmem %s0, 6
    %v12 = vld [vmem:[%s11] sm:$0x1]
    %13 = vrot.lane.b32.xlu0 %v12, 96
    %v14 = vpop.permute.xlu0 %13
    %vm15 = vcmask 917248
    %16 = vst.msk [vmem:[#allocation0] sm:$0x1] %vm15, %v14
    %s17 = scalar_lea.vmem %s0, 5
    %v18 = vld [vmem:[%s17] sm:$0x1]
    %19 = vrot.lane.b32.xlu0 %v18, 80
    %v20 = vpop.permute.xlu0 %19
    %vm21 = vcmask 786048
    %22 = vst.msk [vmem:[#allocation0] sm:$0x1] %vm21, %v20
    %s23 = scalar_lea.vmem %s0, 4
    %v24 = vld [vmem:[%s23] sm:$0x1]
    %25 = vrot.lane.b32.xlu0 %v24, 64
    %v26 = vpop.permute.xlu0 %25
    %vm27 = vcmask 654848
    %28 = vst.msk [vmem:[#allocation0] sm:$0x1] %vm27, %v26
    %s29 = scalar_lea.vmem %s0, 3
    %v30 = vld [vmem:[%s29] sm:$0x1]
    %31 = vrot.lane.b32.xlu0 %v30, 48
    %v32 = vpop.permute.xlu0 %31
    %vm33 = vcmask 523648
    %34 = vst.msk [vmem:[#allocation0] sm:$0x1] %vm33, %v32
    %s35 = scalar_lea.vmem %s0, 2
    %v36 = vld [vmem:[%s35] sm:$0x1]
    %37 = vrot.lane.b32.xlu0 %v36, 32
    %v38 = vpop.permute.xlu0 %37
    %vm39 = vcmask 392448
    %40 = vst.msk [vmem:[#allocation0] sm:$0x1] %vm39, %v38
    %s41 = scalar_lea.vmem %s0, 1
    %v42 = vld [vmem:[%s41] sm:$0x1]
    %43 = vrot.lane.b32.xlu0 %v42, 16
    %v44 = vpop.permute.xlu0 %43
    %vm45 = vcmask 261248
    %46 = vst.msk [vmem:[#allocation0] sm:$0x1] %vm45, %v44
    %s48 = sshllo.u32 0, 1
    %v50 = vld [vmem:[#allocation0] sm:%s48]
    %s51 = sshllo.u32 0, 1
    %52 = vst [vmem:[%s1] sm:%s51] %v50

// kernel: bi_decoder_forward.1
$region0: #{bi_decoder_forward.1}
  #allocation0 [shape = 'u32[]', space=smem, size = 0x4, offset = 0x4, fixed_abs, tag = 'smem constant byte address 0x4 - core index']
  #allocation1 [shape = 'u32[144,128]{1,0:T(1,128)}', space=vmem, size = 0x12000, scoped, tag = 'internal scratch']
  %s0 = inlined_call_operand.vmem [shape: f32[32,64], index: 0, kind: input, shape index: {}]
  %s1 = inlined_call_operand.vmem [shape: f32[64,32], index: 1, kind: input, shape index: {}]
  %s2 = inlined_call_operand.vmem [shape: f32[1,32], index: 2, kind: input, shape index: {}]
  %s3 = inlined_call_operand.vmem [shape: f32[32,16], index: 3, kind: input, shape index: {}]
  %s4 = inlined_call_operand.vmem [shape: f32[16,128], index: 4, kind: input, shape index: {}]
  %s5 = inlined_call_operand.vmem [shape: f32[1,128], index: 5, kind: input, shape index: {}]
  %s6 = inlined_call_operand.vmem [shape: f32[32,128], index: 6, kind: input, shape index: {}]
  %s7 = inlined_call_operand.vmem [shape: f32[64,128], index: 7, kind: input, shape index: {}]
  %s8 = inlined_call_operand.vmem [shape: f32[1,128], index: 8, kind: input, shape index: {}]
  %s9 = inlined_call_operand.vmem [shape: f32[8,8,64], index: 9, kind: input, shape index: {}]
  %s10 = inlined_call_operand.vmem [shape: f32[8,512], index: 10, kind: input, shape index: {}]
  %s11 = inlined_call_operand.vmem [shape: f32[512,128], index: 11, kind: input, shape index: {}]
  %s12 = inlined_call_operand.vmem [shape: f32[1,128], index: 12, kind: input, shape index: {}]
  %s13 = inlined_call_operand.vmem [shape: f32[8,8], index: 13, kind: input, shape index: {}]
  %s14 = inlined_call_operand.vmem [shape: f32[32,256], index: 14, kind: input, shape index: {}]
  %s15 = inlined_call_operand.vmem [shape: f32[128,8], index: 15, kind: input, shape index: {}]
  %s16 = inlined_call_operand.vmem [shape: f32[64,128], index: 16, kind: input, shape index: {}]
  %s17 = inlined_call_operand.vmem [shape: f32[1,128], index: 17, kind: input, shape index: {}]
  %s18 = inlined_call_operand.vmem [shape: f32[128,32], index: 18, kind: input, shape index: {}]
  %s19 = inlined_call_operand.vmem [shape: f32[1,32], index: 19, kind: input, shape index: {}]
  %s20 = inlined_call_operand.hbm [shape: f32[4,8,32], index: 20, kind: output, shape index: {0}]
  %s21 = inlined_call_operand.hbm [shape: f32[2,8,32], index: 21, kind: output, shape index: {1}]
  %s22 = inlined_call_operand.hbm [shape: f32[2,8,32], index: 22, kind: output, shape index: {2}]
  %23 = xla_tuple %s20, %s21, %s22
  %s24 = sld [smem:[#allocation0]]
  $region106: #{bi_decoder_forward.1} parent=0
    _
  %s26 = ssub.s32 1, %s24
  %s27 = scalar_select 0, %s26, %s24
  $region1: #{bi_decoder_forward.1} parent=0
    #allocation2 [shape = 'u8[16384]{0}', space=vmem, size = 0x4000, scoped, tag = 'output window, operand 0, single buffered']
    #allocation3 [shape = 's32[1]{0}', space=sflag, size = 0x4, scoped, tag = 'scoped memory for bi_decoder_forward.1']
    #allocation4 [shape = 'u8[8192]{0}', space=vmem, size = 0x2000, scoped, tag = 'output window, operand 1, single buffered']
    #allocation5 [shape = 's32[1]{0}', space=sflag, size = 0x4, scoped, tag = 'scoped memory for bi_decoder_forward.1']
    #allocation6 [shape = 'u8[8192]{0}', space=vmem, size = 0x2000, scoped, tag = 'output window, operand 2, single buffered']
    %28 = vsyncpa [#allocation3], 0
    %29 = vsyncpa [#allocation5], 0
    // Predicated region
    $region2: #{bi_decoder_forward.1} parent=1 // pred_check
      _
    $region3: #{bi_decoder_forward.1} parent=1 // pred_check_branch
      %31 = sbr.rel (0) target = $region5
    $region4: #{bi_decoder_forward.1} parent=1 // pred_region
      _
    $region5: #{bi_decoder_forward.1} parent=1 // pred_fallthru
      _
    // Predicated region
    $region6: #{bi_decoder_forward.1} parent=1 // pred_check
      _
    $region7: #{bi_decoder_forward.1} parent=1 // pred_check_branch
      %33 = sbr.rel (0) target = $region9
    $region8: #{bi_decoder_forward.1} parent=1 // pred_region
      _
    $region9: #{bi_decoder_forward.1} parent=1 // pred_fallthru
      _
    // Predicated region
    $region10: #{bi_decoder_forward.1} parent=1 // pred_check
      _
    $region11: #{bi_decoder_forward.1} parent=1 // pred_check_branch
      %35 = sbr.rel (0) target = $region13
    $region12: #{bi_decoder_forward.1} parent=1 // pred_region
      _
    $region13: #{bi_decoder_forward.1} parent=1 // pred_fallthru
      _
    // Predicated region
    $region14: #{bi_decoder_forward.1} parent=1 // pred_check
      _
    $region15: #{bi_decoder_forward.1} parent=1 // pred_check_branch
      %37 = sbr.rel (0) target = $region17
    $region16: #{bi_decoder_forward.1} parent=1 // pred_region
      _
    $region17: #{bi_decoder_forward.1} parent=1 // pred_fallthru
      _
    // Predicated region
    $region18: #{bi_decoder_forward.1} parent=1 // pred_check
      _
    $region19: #{bi_decoder_forward.1} parent=1 // pred_check_branch
      %39 = sbr.rel (0) target = $region21
    $region20: #{bi_decoder_forward.1} parent=1 // pred_region
      _
    $region21: #{bi_decoder_forward.1} parent=1 // pred_fallthru
      _
    // Predicated region
    $region22: #{bi_decoder_forward.1} parent=1 // pred_check
      _
    $region23: #{bi_decoder_forward.1} parent=1 // pred_check_branch
      %41 = sbr.rel (0) target = $region25
    $region24: #{bi_decoder_forward.1} parent=1 // pred_region
      _
    $region25: #{bi_decoder_forward.1} parent=1 // pred_fallthru
      _
    // Predicated region
    $region26: #{bi_decoder_forward.1} parent=1 // pred_check
      _
    $region27: #{bi_decoder_forward.1} parent=1 // pred_check_branch
      %43 = sbr.rel (0) target = $region29
    $region28: #{bi_decoder_forward.1} parent=1 // pred_region
      _
    $region29: #{bi_decoder_forward.1} parent=1 // pred_fallthru
      _
    // Predicated region
    $region30: #{bi_decoder_forward.1} parent=1 // pred_check
      _
    $region31: #{bi_decoder_forward.1} parent=1 // pred_check_branch
      %45 = sbr.rel (0) target = $region33
    $region32: #{bi_decoder_forward.1} parent=1 // pred_region
      _
    $region33: #{bi_decoder_forward.1} parent=1 // pred_fallthru
      _
    // Predicated region
    $region34: #{bi_decoder_forward.1} parent=1 // pred_check
      _
    $region35: #{bi_decoder_forward.1} parent=1 // pred_check_branch
      %47 = sbr.rel (0) target = $region37
    $region36: #{bi_decoder_forward.1} parent=1 // pred_region
      _
    $region37: #{bi_decoder_forward.1} parent=1 // pred_fallthru
      _
    // Predicated region
    $region38: #{bi_decoder_forward.1} parent=1 // pred_check
      _
    $region39: #{bi_decoder_forward.1} parent=1 // pred_check_branch
      %49 = sbr.rel (0) target = $region41
    $region40: #{bi_decoder_forward.1} parent=1 // pred_region
      _
    $region41: #{bi_decoder_forward.1} parent=1 // pred_fallthru
      _
    // Predicated region
    $region42: #{bi_decoder_forward.1} parent=1 // pred_check
      _
    $region43: #{bi_decoder_forward.1} parent=1 // pred_check_branch
      %51 = sbr.rel (0) target = $region45
    $region44: #{bi_decoder_forward.1} parent=1 // pred_region
      _
    $region45: #{bi_decoder_forward.1} parent=1 // pred_fallthru
      _
    // Predicated region
    $region46: #{bi_decoder_forward.1} parent=1 // pred_check
      _
    $region47: #{bi_decoder_forward.1} parent=1 // pred_check_branch
      %53 = sbr.rel (0) target = $region49
    $region48: #{bi_decoder_forward.1} parent=1 // pred_region
      _
    $region49: #{bi_decoder_forward.1} parent=1 // pred_fallthru
      _
    // Predicated region
    $region50: #{bi_decoder_forward.1} parent=1 // pred_check
      _
    $region51: #{bi_decoder_forward.1} parent=1 // pred_check_branch
      %55 = sbr.rel (0) target = $region53
    $region52: #{bi_decoder_forward.1} parent=1 // pred_region
      _
    $region53: #{bi_decoder_forward.1} parent=1 // pred_fallthru
      _
    // Predicated region
    $region54: #{bi_decoder_forward.1} parent=1 // pred_check
      _
    $region55: #{bi_decoder_forward.1} parent=1 // pred_check_branch
      %57 = sbr.rel (0) target = $region57
    $region56: #{bi_decoder_forward.1} parent=1 // pred_region
      _
    $region57: #{bi_decoder_forward.1} parent=1 // pred_fallthru
      _
    // Predicated region
    $region58: #{bi_decoder_forward.1} parent=1 // pred_check
      _
    $region59: #{bi_decoder_forward.1} parent=1 // pred_check_branch
      %59 = sbr.rel (0) target = $region61
    $region60: #{bi_decoder_forward.1} parent=1 // pred_region
      _
    $region61: #{bi_decoder_forward.1} parent=1 // pred_fallthru
      _
    // Predicated region
    $region62: #{bi_decoder_forward.1} parent=1 // pred_check
      _
    $region63: #{bi_decoder_forward.1} parent=1 // pred_check_branch
      %61 = sbr.rel (0) target = $region65
    $region64: #{bi_decoder_forward.1} parent=1 // pred_region
      _
    $region65: #{bi_decoder_forward.1} parent=1 // pred_fallthru
      _
    // Predicated region
    $region66: #{bi_decoder_forward.1} parent=1 // pred_check
      _
    $region67: #{bi_decoder_forward.1} parent=1 // pred_check_branch
      %63 = sbr.rel (0) target = $region69
    $region68: #{bi_decoder_forward.1} parent=1 // pred_region
      _
    $region69: #{bi_decoder_forward.1} parent=1 // pred_fallthru
      _
    // Predicated region
    $region70: #{bi_decoder_forward.1} parent=1 // pred_check
      _
    $region71: #{bi_decoder_forward.1} parent=1 // pred_check_branch
      %65 = sbr.rel (0) target = $region73
    $region72: #{bi_decoder_forward.1} parent=1 // pred_region
      _
    $region73: #{bi_decoder_forward.1} parent=1 // pred_fallthru
      _
    // Predicated region
    $region74: #{bi_decoder_forward.1} parent=1 // pred_check
      _
    $region75: #{bi_decoder_forward.1} parent=1 // pred_check_branch
      %67 = sbr.rel (0) target = $region77
    $region76: #{bi_decoder_forward.1} parent=1 // pred_region
      _
    $region77: #{bi_decoder_forward.1} parent=1 // pred_fallthru
      _
    // Predicated region
    $region78: #{bi_decoder_forward.1} parent=1 // pred_check
      _
    $region79: #{bi_decoder_forward.1} parent=1 // pred_check_branch
      %69 = sbr.rel (0) target = $region81
    $region80: #{bi_decoder_forward.1} parent=1 // pred_region
      _
    $region81: #{bi_decoder_forward.1} parent=1 // pred_fallthru
      _
    %v70 = vld [vmem:[%s0] sm:$0xff]
    %v71 = vld [vmem:[%s0 + $0x8] sm:$0xff]
    %v72 = vld [vmem:[%s0 + $0x10] sm:$0xff]
    %v73 = vld [vmem:[%s0 + $0x18] sm:$0xff]
    %v74 = vld [vmem:[%s1] sm:$0xff]
    %v75 = vld [vmem:[%s1 + $0x8] sm:$0xff]
    %v76 = vld [vmem:[%s1 + $0x10] sm:$0xff]
    %v77 = vld [vmem:[%s1 + $0x18] sm:$0xff]
    %v78 = vld [vmem:[%s1 + $0x20] sm:$0xff]
    %v79 = vld [vmem:[%s1 + $0x28] sm:$0xff]
    %v80 = vld [vmem:[%s1 + $0x30] sm:$0xff]
    %v81 = vld [vmem:[%s1 + $0x38] sm:$0xff]
    %v82 = vld [vmem:[%s2] sm:$0x1]
    %v84 = vlaneseq
    %v85 = vshrl.u32 %v84, 7
    %v86 = vsub.s32 0, %v85
    %v87 = vrot.slane %v82, %v86
    %vm89 = vcmask 523264
    %v91 = vsel %vm89, %v70, 0
    %v94 = vsel %vm89, %v71, 0
    %v97 = vsel %vm89, %v72, 0
    %v100 = vsel %vm89, %v73, 0
    %102 = vmatprep.subr.mxu0 0.0
    %103 = vmatpush1.msra.mxu0 %v74
    %104 = vmatprep.subr.mxu0 0.0
    %105 = vmatpush1.msra.mxu0 %v75
    %106 = vmatprep.subr.mxu0 0.0
    %107 = vmatpush1.msra.mxu0 %v76
    %108 = vmatprep.subr.mxu0 0.0
    %109 = vmatpush1.msra.mxu0 %v77
    %110 = vmatprep.subr.mxu0 0.0
    %111 = vmatpush1.msra.mxu0 %v78
    %112 = vmatprep.subr.mxu0 0.0
    %113 = vmatpush1.msra.mxu0 %v79
    %114 = vmatprep.subr.mxu0 0.0
    %115 = vmatpush1.msra.mxu0 %v80
    %116 = vmatprep.subr.mxu0 0.0
    %117 = vmatpush1.msra.mxu0 %v81
    %118 = vmatprep.subr.mxu0 0.0
    %119 = vmatpush1.msra.mxu0 0.0
    %120 = vmatprep.subr.mxu0 0.0
    %121 = vmatpush1.msra.mxu0 0.0
    %122 = vmatprep.subr.mxu0 0.0
    %123 = vmatpush1.msra.mxu0 0.0
    %124 = vmatprep.subr.mxu0 0.0
    %125 = vmatpush1.msra.mxu0 0.0
    %126 = vmatprep.subr.mxu0 0.0
    %127 = vmatpush1.msra.mxu0 0.0
    %128 = vmatprep.subr.mxu0 0.0
    %129 = vmatpush1.msra.mxu0 0.0
    %130 = vmatprep.subr.mxu0 0.0
    %131 = vmatpush1.msra.mxu0 0.0
    %132 = vmatprep.subr.mxu0 0.0
    %133 = vmatpush1.msra.mxu0 0.0
    %134 = vmatprep.subr.mxu0 0.0
    %135 = vmatpush1.msra.mxu0 0.0
    %136 = vmatprep.subr.mxu0 0.0
    %137 = vmatpush1.msra.mxu0 0.0
    %138 = vmatprep.subr.mxu0 0.0
    %139 = vmatpush1.msra.mxu0 0.0
    %140 = vmatprep.subr.mxu0 0.0
    %141 = vmatpush1.msra.mxu0 0.0
    %142 = vmatprep.subr.mxu0 0.0
    %143 = vmatpush1.msra.mxu0 0.0
    %144 = vmatprep.subr.mxu0 0.0
    %145 = vmatpush1.msra.mxu0 0.0
    %146 = vmatprep.subr.mxu0 0.0
    %147 = vmatpush1.msra.mxu0 0.0
    %148 = vmatprep.subr.mxu0 0.0
    %149 = vmatpush1.msra.mxu0 0.0
    %150 = vmatprep.subr.mxu0 0.0
    %151 = vmatpush1.msra.mxu0 0.0
    %152 = vmatprep.subr.mxu0 0.0
    %153 = vmatpush1.msra.mxu0 0.0
    %154 = vmatprep.subr.mxu0 0.0
    %155 = vmatpush1.msra.mxu0 0.0
    %156 = vmatprep.subr.mxu0 0.0
    %157 = vmatpush1.msra.mxu0 0.0
    %158 = vmatprep.subr.mxu0 0.0
    %159 = vmatpush1.msra.mxu0 0.0
    %160 = vmatprep.subr.mxu0 0.0
    %161 = vmatpush1.msra.mxu0 0.0
    %162 = vmatprep.subr.mxu0 0.0
    %163 = vmatpush1.msra.mxu0 0.0
    %164 = vmatprep.subr.mxu0 0.0
    %165 = vmatpush1.msra.mxu0 0.0
    %166 = vmatprep.mubr.f32.mxu0 0.0
    %167 = vmatmul.mubr.f32.gmra.mrb[0].mxu0 %v91
    %v168 = vpop.f32.mrb[0].mxu0
    %v169 = vadd.f32 %v87, %v168
    %v170 = vpop.f32.mrb[0].mxu0
    %171 = vmatprep.mubr.f32.mxu0 0.0
    %172 = vmatmul.mubr.f32.gmra.mrb[0].mxu0 %v94
    %v173 = vpop.f32.mrb[0].mxu0
    %v174 = vadd.f32 %v87, %v173
    %v175 = vpop.f32.mrb[0].mxu0
    %176 = vmatprep.mubr.f32.mxu0 0.0
    %177 = vmatmul.mubr.f32.gmra.mrb[0].mxu0 %v97
    %v178 = vpop.f32.mrb[0].mxu0
    %v179 = vadd.f32 %v87, %v178
    %v180 = vpop.f32.mrb[0].mxu0
    %181 = vmatprep.mubr.f32.mxu0 0.0
    %182 = vmatmul.mubr.f32.gmra.mrb[0].mxu0 %v100
    %v183 = vpop.f32.mrb[0].mxu0
    %v184 = vadd.f32 %v87, %v183
    %v185 = vpop.f32.mrb[0].mxu0
    %186 = vdwg.mxu0
    %v187 = vld [vmem:[%s3] sm:$0xff]
    %v188 = vld [vmem:[%s3 + $0x8] sm:$0xff]
    %v189 = vld [vmem:[%s3 + $0x10] sm:$0xff]
    %v190 = vld [vmem:[%s3 + $0x18] sm:$0xff]
    %v191 = vld [vmem:[%s4] sm:$0xff]
    %v192 = vld [vmem:[%s4 + $0x8] sm:$0xff]
    %v193 = vld [vmem:[%s5] sm:$0x1]
    %v195 = vlaneseq
    %v196 = vshrl.u32 %v195, 7
    %v197 = vsub.s32 0, %v196
    %v198 = vrot.slane %v193, %v197
    %vm200 = vcmask 130048
    %v202 = vsel %vm200, %v187, 0
    %v205 = vsel %vm200, %v188, 0
    %v208 = vsel %vm200, %v189, 0
    %v211 = vsel %vm200, %v190, 0
    %213 = vmatprep.subr.mxu0 0.0
    %214 = vmatpush1.msra.mxu0 %v191
    %215 = vmatprep.subr.mxu0 0.0
    %216 = vmatpush1.msra.mxu0 %v192
    %217 = vmatprep.subr.mxu0 0.0
    %218 = vmatpush1.msra.mxu0 0.0
    %219 = vmatprep.subr.mxu0 0.0
    %220 = vmatpush1.msra.mxu0 0.0
    %221 = vmatprep.subr.mxu0 0.0
    %222 = vmatpush1.msra.mxu0 0.0
    %223 = vmatprep.subr.mxu0 0.0
    %224 = vmatpush1.msra.mxu0 0.0
    %225 = vmatprep.subr.mxu0 0.0
    %226 = vmatpush1.msra.mxu0 0.0
    %227 = vmatprep.subr.mxu0 0.0
    %228 = vmatpush1.msra.mxu0 0.0
    %229 = vmatprep.subr.mxu0 0.0
    %230 = vmatpush1.msra.mxu0 0.0
    %231 = vmatprep.subr.mxu0 0.0
    %232 = vmatpush1.msra.mxu0 0.0
    %233 = vmatprep.subr.mxu0 0.0
    %234 = vmatpush1.msra.mxu0 0.0
    %235 = vmatprep.subr.mxu0 0.0
    %236 = vmatpush1.msra.mxu0 0.0
    %237 = vmatprep.subr.mxu0 0.0
    %238 = vmatpush1.msra.mxu0 0.0
    %239 = vmatprep.subr.mxu0 0.0
    %240 = vmatpush1.msra.mxu0 0.0
    %241 = vmatprep.subr.mxu0 0.0
    %242 = vmatpush1.msra.mxu0 0.0
    %243 = vmatprep.subr.mxu0 0.0
    %244 = vmatpush1.msra.mxu0 0.0
    %245 = vmatprep.subr.mxu0 0.0
    %246 = vmatpush1.msra.mxu0 0.0
    %247 = vmatprep.subr.mxu0 0.0
    %248 = vmatpush1.msra.mxu0 0.0
    %249 = vmatprep.subr.mxu0 0.0
    %250 = vmatpush1.msra.mxu0 0.0
    %251 = vmatprep.subr.mxu0 0.0
    %252 = vmatpush1.msra.mxu0 0.0
    %253 = vmatprep.subr.mxu0 0.0
    %254 = vmatpush1.msra.mxu0 0.0
    %255 = vmatprep.subr.mxu0 0.0
    %256 = vmatpush1.msra.mxu0 0.0
    %257 = vmatprep.subr.mxu0 0.0
    %258 = vmatpush1.msra.mxu0 0.0
    %259 = vmatprep.subr.mxu0 0.0
    %260 = vmatpush1.msra.mxu0 0.0
    %261 = vmatprep.subr.mxu0 0.0
    %262 = vmatpush1.msra.mxu0 0.0
    %263 = vmatprep.subr.mxu0 0.0
    %264 = vmatpush1.msra.mxu0 0.0
    %265 = vmatprep.subr.mxu0 0.0
    %266 = vmatpush1.msra.mxu0 0.0
    %267 = vmatprep.subr.mxu0 0.0
    %268 = vmatpush1.msra.mxu0 0.0
    %269 = vmatprep.subr.mxu0 0.0
    %270 = vmatpush1.msra.mxu0 0.0
    %271 = vmatprep.subr.mxu0 0.0
    %272 = vmatpush1.msra.mxu0 0.0
    %273 = vmatprep.subr.mxu0 0.0
    %274 = vmatpush1.msra.mxu0 0.0
    %275 = vmatprep.subr.mxu0 0.0
    %276 = vmatpush1.msra.mxu0 0.0
    %277 = vmatprep.mubr.f32.mxu0 0.0
    %278 = vmatmul.mubr.f32.gmra.mrb[0].mxu0 %v202
    %v279 = vpop.f32.mrb[0].mxu0
    %v280 = vadd.f32 %v198, %v279
    %v281 = vpop.f32.mrb[0].mxu0
    %282 = vmatprep.mubr.f32.mxu0 0.0
    %283 = vmatmul.mubr.f32.gmra.mrb[0].mxu0 %v205
    %v284 = vpop.f32.mrb[0].mxu0
    %v285 = vadd.f32 %v198, %v284
    %v286 = vpop.f32.mrb[0].mxu0
    %287 = vmatprep.mubr.f32.mxu0 0.0
    %288 = vmatmul.mubr.f32.gmra.mrb[0].mxu0 %v208
    %v289 = vpop.f32.mrb[0].mxu0
    %v290 = vadd.f32 %v198, %v289
    %v291 = vpop.f32.mrb[0].mxu0
    %292 = vmatprep.mubr.f32.mxu0 0.0
    %293 = vmatmul.mubr.f32.gmra.mrb[0].mxu0 %v211
    %v294 = vpop.f32.mrb[0].mxu0
    %v295 = vadd.f32 %v198, %v294
    %v296 = vpop.f32.mrb[0].mxu0
    %297 = vdwg.mxu0
    %v298 = vld [vmem:[%s10] sm:$0xff]
    %v299 = vld [vmem:[%s10 + $0x8] sm:$0xff]
    %v300 = vld [vmem:[%s10 + $0x10] sm:$0xff]
    %v301 = vld [vmem:[%s10 + $0x18] sm:$0xff]
    %v302 = vld [vmem:[%s11] sm:$0xff]
    %v303 = vld [vmem:[%s11 + $0x8] sm:$0xff]
    %v304 = vld [vmem:[%s11 + $0x10] sm:$0xff]
    %v305 = vld [vmem:[%s11 + $0x18] sm:$0xff]
    %v306 = vld [vmem:[%s11 + $0x20] sm:$0xff]
    %v307 = vld [vmem:[%s11 + $0x28] sm:$0xff]
    %v308 = vld [vmem:[%s11 + $0x30] sm:$0xff]
    %v309 = vld [vmem:[%s11 + $0x38] sm:$0xff]
    %v310 = vld [vmem:[%s11 + $0x40] sm:$0xff]
    %v311 = vld [vmem:[%s11 + $0x48] sm:$0xff]
    %v312 = vld [vmem:[%s11 + $0x50] sm:$0xff]
    %v313 = vld [vmem:[%s11 + $0x58] sm:$0xff]
    %v314 = vld [vmem:[%s11 + $0x60] sm:$0xff]
    %v315 = vld [vmem:[%s11 + $0x68] sm:$0xff]
    %v316 = vld [vmem:[%s11 + $0x70] sm:$0xff]
    %v317 = vld [vmem:[%s11 + $0x78] sm:$0xff]
    %v318 = vld [vmem:[%s11 + $0x80] sm:$0xff]
    %v319 = vld [vmem:[%s11 + $0x88] sm:$0xff]
    %v320 = vld [vmem:[%s11 + $0x90] sm:$0xff]
    %v321 = vld [vmem:[%s11 + $0x98] sm:$0xff]
    %v322 = vld [vmem:[%s11 + $0xa0] sm:$0xff]
    %v323 = vld [vmem:[%s11 + $0xa8] sm:$0xff]
    %v324 = vld [vmem:[%s11 + $0xb0] sm:$0xff]
    %v325 = vld [vmem:[%s11 + $0xb8] sm:$0xff]
    %v326 = vld [vmem:[%s11 + $0xc0] sm:$0xff]
    %v327 = vld [vmem:[%s11 + $0xc8] sm:$0xff]
    %v328 = vld [vmem:[%s11 + $0xd0] sm:$0xff]
    %v329 = vld [vmem:[%s11 + $0xd8] sm:$0xff]
    %v330 = vld [vmem:[%s11 + $0xe0] sm:$0xff]
    %v331 = vld [vmem:[%s11 + $0xe8] sm:$0xff]
    %v332 = vld [vmem:[%s11 + $0xf0] sm:$0xff]
    %v333 = vld [vmem:[%s11 + $0xf8] sm:$0xff]
    %v334 = vld [vmem:[%s11 + $0x100] sm:$0xff]
    %v335 = vld [vmem:[%s11 + $0x108] sm:$0xff]
    %v336 = vld [vmem:[%s11 + $0x110] sm:$0xff]
    %v337 = vld [vmem:[%s11 + $0x118] sm:$0xff]
    %v338 = vld [vmem:[%s11 + $0x120] sm:$0xff]
    %v339 = vld [vmem:[%s11 + $0x128] sm:$0xff]
    %v340 = vld [vmem:[%s11 + $0x130] sm:$0xff]
    %v341 = vld [vmem:[%s11 + $0x138] sm:$0xff]
    %v342 = vld [vmem:[%s11 + $0x140] sm:$0xff]
    %v343 = vld [vmem:[%s11 + $0x148] sm:$0xff]
    %v344 = vld [vmem:[%s11 + $0x150] sm:$0xff]
    %v345 = vld [vmem:[%s11 + $0x158] sm:$0xff]
    %v346 = vld [vmem:[%s11 + $0x160] sm:$0xff]
    %v347 = vld [vmem:[%s11 + $0x168] sm:$0xff]
    %v348 = vld [vmem:[%s11 + $0x170] sm:$0xff]
    %v349 = vld [vmem:[%s11 + $0x178] sm:$0xff]
    %v350 = vld [vmem:[%s11 + $0x180] sm:$0xff]
    %v351 = vld [vmem:[%s11 + $0x188] sm:$0xff]
    %v352 = vld [vmem:[%s11 + $0x190] sm:$0xff]
    %v353 = vld [vmem:[%s11 + $0x198] sm:$0xff]
    %v354 = vld [vmem:[%s11 + $0x1a0] sm:$0xff]
    %v355 = vld [vmem:[%s11 + $0x1a8] sm:$0xff]
    %v356 = vld [vmem:[%s11 + $0x1b0] sm:$0xff]
    %v357 = vld [vmem:[%s11 + $0x1b8] sm:$0xff]
    %v358 = vld [vmem:[%s11 + $0x1c0] sm:$0xff]
    %v359 = vld [vmem:[%s11 + $0x1c8] sm:$0xff]
    %v360 = vld [vmem:[%s11 + $0x1d0] sm:$0xff]
    %v361 = vld [vmem:[%s11 + $0x1d8] sm:$0xff]
    %v362 = vld [vmem:[%s11 + $0x1e0] sm:$0xff]
    %v363 = vld [vmem:[%s11 + $0x1e8] sm:$0xff]
    %v364 = vld [vmem:[%s11 + $0x1f0] sm:$0xff]
    %v365 = vld [vmem:[%s11 + $0x1f8] sm:$0xff]
    %v366 = vld [vmem:[%s12] sm:$0x1]
    %v368 = vlaneseq
    %v369 = vshrl.u32 %v368, 7
    %v370 = vsub.s32 0, %v369
    %v371 = vrot.slane %v366, %v370
    %373 = vmatprep.subr.mxu0 0.0
    %374 = vmatpush1.msra.mxu0 %v302
    %375 = vmatprep.subr.mxu0 0.0
    %376 = vmatpush1.msra.mxu0 %v303
    %377 = vmatprep.subr.mxu0 0.0
    %378 = vmatpush1.msra.mxu0 %v304
    %379 = vmatprep.subr.mxu0 0.0
    %380 = vmatpush1.msra.mxu0 %v305
    %381 = vmatprep.subr.mxu0 0.0
    %382 = vmatpush1.msra.mxu0 %v306
    %383 = vmatprep.subr.mxu0 0.0
    %384 = vmatpush1.msra.mxu0 %v307
    %385 = vmatprep.subr.mxu0 0.0
    %386 = vmatpush1.msra.mxu0 %v308
    %387 = vmatprep.subr.mxu0 0.0
    %388 = vmatpush1.msra.mxu0 %v309
    %389 = vmatprep.subr.mxu0 0.0
    %390 = vmatpush1.msra.mxu0 %v310
    %391 = vmatprep.subr.mxu0 0.0
    %392 = vmatpush1.msra.mxu0 %v311
    %393 = vmatprep.subr.mxu0 0.0
    %394 = vmatpush1.msra.mxu0 %v312
    %395 = vmatprep.subr.mxu0 0.0
    %396 = vmatpush1.msra.mxu0 %v313
    %397 = vmatprep.subr.mxu0 0.0
    %398 = vmatpush1.msra.mxu0 %v314
    %399 = vmatprep.subr.mxu0 0.0
    %400 = vmatpush1.msra.mxu0 %v315
    %401 = vmatprep.subr.mxu0 0.0
    %402 = vmatpush1.msra.mxu0 %v316
    %403 = vmatprep.subr.mxu0 0.0
    %404 = vmatpush1.msra.mxu0 %v317
    %405 = vmatprep.subr.mxu0 0.0
    %406 = vmatpush1.msra.mxu0 %v318
    %407 = vmatprep.subr.mxu0 0.0
    %408 = vmatpush1.msra.mxu0 %v319
    %409 = vmatprep.subr.mxu0 0.0
    %410 = vmatpush1.msra.mxu0 %v320
    %411 = vmatprep.subr.mxu0 0.0
    %412 = vmatpush1.msra.mxu0 %v321
    %413 = vmatprep.subr.mxu0 0.0
    %414 = vmatpush1.msra.mxu0 %v322
    %415 = vmatprep.subr.mxu0 0.0
    %416 = vmatpush1.msra.mxu0 %v323
    %417 = vmatprep.subr.mxu0 0.0
    %418 = vmatpush1.msra.mxu0 %v324
    %419 = vmatprep.subr.mxu0 0.0
    %420 = vmatpush1.msra.mxu0 %v325
    %421 = vmatprep.subr.mxu0 0.0
    %422 = vmatpush1.msra.mxu0 %v326
    %423 = vmatprep.subr.mxu0 0.0
    %424 = vmatpush1.msra.mxu0 %v327
    %425 = vmatprep.subr.mxu0 0.0
    %426 = vmatpush1.msra.mxu0 %v328
    %427 = vmatprep.subr.mxu0 0.0
    %428 = vmatpush1.msra.mxu0 %v329
    %429 = vmatprep.subr.mxu0 0.0
    %430 = vmatpush1.msra.mxu0 %v330
    %431 = vmatprep.subr.mxu0 0.0
    %432 = vmatpush1.msra.mxu0 %v331
    %433 = vmatprep.subr.mxu0 0.0
    %434 = vmatpush1.msra.mxu0 %v332
    %435 = vmatprep.subr.mxu0 0.0
    %436 = vmatpush1.msra.mxu0 %v333
    %437 = vmatprep.mubr.f32.mxu0 %v299
    %438 = vmatmul.mubr.f32.gmra.mrb[0].mxu0 %v298
    %v439 = vpop.f32.mrb[0].mxu0
    %v440 = vadd.f32 %v371, %v439
    %v441 = vpop.f32.mrb[0].mxu0
    %442 = vdwg.mxu0
    %443 = vmatprep.subr.mxu0 0.0
    %444 = vmatpush1.msra.mxu0 %v334
    %445 = vmatprep.subr.mxu0 0.0
    %446 = vmatpush1.msra.mxu0 %v335
    %447 = vmatprep.subr.mxu0 0.0
    %448 = vmatpush1.msra.mxu0 %v336
    %449 = vmatprep.subr.mxu0 0.0
    %450 = vmatpush1.msra.mxu0 %v337
    %451 = vmatprep.subr.mxu0 0.0
    %452 = vmatpush1.msra.mxu0 %v338
    %453 = vmatprep.subr.mxu0 0.0
    %454 = vmatpush1.msra.mxu0 %v339
    %455 = vmatprep.subr.mxu0 0.0
    %456 = vmatpush1.msra.mxu0 %v340
    %457 = vmatprep.subr.mxu0 0.0
    %458 = vmatpush1.msra.mxu0 %v341
    %459 = vmatprep.subr.mxu0 0.0
    %460 = vmatpush1.msra.mxu0 %v342
    %461 = vmatprep.subr.mxu0 0.0
    %462 = vmatpush1.msra.mxu0 %v343
    %463 = vmatprep.subr.mxu0 0.0
    %464 = vmatpush1.msra.mxu0 %v344
    %465 = vmatprep.subr.mxu0 0.0
    %466 = vmatpush1.msra.mxu0 %v345
    %467 = vmatprep.subr.mxu0 0.0
    %468 = vmatpush1.msra.mxu0 %v346
    %469 = vmatprep.subr.mxu0 0.0
    %470 = vmatpush1.msra.mxu0 %v347
    %471 = vmatprep.subr.mxu0 0.0
    %472 = vmatpush1.msra.mxu0 %v348
    %473 = vmatprep.subr.mxu0 0.0
    %474 = vmatpush1.msra.mxu0 %v349
    %475 = vmatprep.subr.mxu0 0.0
    %476 = vmatpush1.msra.mxu0 %v350
    %477 = vmatprep.subr.mxu0 0.0
    %478 = vmatpush1.msra.mxu0 %v351
    %479 = vmatprep.subr.mxu0 0.0
    %480 = vmatpush1.msra.mxu0 %v352
    %481 = vmatprep.subr.mxu0 0.0
    %482 = vmatpush1.msra.mxu0 %v353
    %483 = vmatprep.subr.mxu0 0.0
    %484 = vmatpush1.msra.mxu0 %v354
    %485 = vmatprep.subr.mxu0 0.0
    %486 = vmatpush1.msra.mxu0 %v355
    %487 = vmatprep.subr.mxu0 0.0
    %488 = vmatpush1.msra.mxu0 %v356
    %489 = vmatprep.subr.mxu0 0.0
    %490 = vmatpush1.msra.mxu0 %v357
    %491 = vmatprep.subr.mxu0 0.0
    %492 = vmatpush1.msra.mxu0 %v358
    %493 = vmatprep.subr.mxu0 0.0
    %494 = vmatpush1.msra.mxu0 %v359
    %495 = vmatprep.subr.mxu0 0.0
    %496 = vmatpush1.msra.mxu0 %v360
    %497 = vmatprep.subr.mxu0 0.0
    %498 = vmatpush1.msra.mxu0 %v361
    %499 = vmatprep.subr.mxu0 0.0
    %500 = vmatpush1.msra.mxu0 %v362
    %501 = vmatprep.subr.mxu0 0.0
    %502 = vmatpush1.msra.mxu0 %v363
    %503 = vmatprep.subr.mxu0 0.0
    %504 = vmatpush1.msra.mxu0 %v364
    %505 = vmatprep.subr.mxu0 0.0
    %506 = vmatpush1.msra.mxu0 %v365
    %507 = vmatprep.mubr.f32.mxu0 %v301
    %508 = vmatmul.mubr.f32.gmra.mrb[0].mxu0 %v300
    %v509 = vpop.f32.mrb[0].mxu0
    %v510 = vadd.f32 %v440, %v509
    %v511 = vpop.f32.mrb[0].mxu0
    %512 = vdwg.mxu0
    %v513 = vld [vmem:[%s9] sm:$0xff]
    %v514 = vld [vmem:[%s9 + $0x8] sm:$0xff]
    %v515 = vld [vmem:[%s9 + $0x10] sm:$0xff]
    %v516 = vld [vmem:[%s9 + $0x18] sm:$0xff]
    %v517 = vld [vmem:[%s9 + $0x20] sm:$0xff]
    %v518 = vld [vmem:[%s9 + $0x28] sm:$0xff]
    %v519 = vld [vmem:[%s9 + $0x30] sm:$0xff]
    %v520 = vld [vmem:[%s9 + $0x38] sm:$0xff]
    %v521 = vld [vmem:[%s13] sm:$0xff]
    %v522 = vld [vmem:[%s6] sm:$0xff]
    %v523 = vld [vmem:[%s6 + $0x8] sm:$0xff]
    %v524 = vld [vmem:[%s6 + $0x10] sm:$0xff]
    %v525 = vld [vmem:[%s6 + $0x18] sm:$0xff]
    %v526 = vld [vmem:[%s7] sm:$0xff]
    %v527 = vld [vmem:[%s7 + $0x8] sm:$0xff]
    %v528 = vld [vmem:[%s7 + $0x10] sm:$0xff]
    %v529 = vld [vmem:[%s7 + $0x18] sm:$0xff]
    %v530 = vld [vmem:[%s7 + $0x20] sm:$0xff]
    %v531 = vld [vmem:[%s7 + $0x28] sm:$0xff]
    %v532 = vld [vmem:[%s7 + $0x30] sm:$0xff]
    %v533 = vld [vmem:[%s7 + $0x38] sm:$0xff]
    %v534 = vld [vmem:[%s8] sm:$0x1]
    %v535 = vld [vmem:[%s14] sm:$0xff]
    %v536 = vld [vmem:[%s14 + $0x8] sm:$0xff]
    %v537 = vld [vmem:[%s14 + $0x10] sm:$0xff]
    %v538 = vld [vmem:[%s14 + $0x18] sm:$0xff]
    %v539 = vld [vmem:[%s14 + $0x20] sm:$0xff]
    %v540 = vld [vmem:[%s14 + $0x28] sm:$0xff]
    %v541 = vld [vmem:[%s14 + $0x30] sm:$0xff]
    %v542 = vld [vmem:[%s14 + $0x38] sm:$0xff]
    %v543 = vld [vmem:[%s15] sm:$0xff]
    %v544 = vld [vmem:[%s15 + $0x8] sm:$0xff]
    %v545 = vld [vmem:[%s15 + $0x10] sm:$0xff]
    %v546 = vld [vmem:[%s15 + $0x18] sm:$0xff]
    %v547 = vld [vmem:[%s15 + $0x20] sm:$0xff]
    %v548 = vld [vmem:[%s15 + $0x28] sm:$0xff]
    %v549 = vld [vmem:[%s15 + $0x30] sm:$0xff]
    %v550 = vld [vmem:[%s15 + $0x38] sm:$0xff]
    %v551 = vld [vmem:[%s15 + $0x40] sm:$0xff]
    %v552 = vld [vmem:[%s15 + $0x48] sm:$0xff]
    %v553 = vld [vmem:[%s15 + $0x50] sm:$0xff]
    %v554 = vld [vmem:[%s15 + $0x58] sm:$0xff]
    %v555 = vld [vmem:[%s15 + $0x60] sm:$0xff]
    %v556 = vld [vmem:[%s15 + $0x68] sm:$0xff]
    %v557 = vld [vmem:[%s15 + $0x70] sm:$0xff]
    %v558 = vld [vmem:[%s15 + $0x78] sm:$0xff]
    %v559 = vld [vmem:[%s16] sm:$0xff]
    %v560 = vld [vmem:[%s16 + $0x8] sm:$0xff]
    %v561 = vld [vmem:[%s16 + $0x10] sm:$0xff]
    %v562 = vld [vmem:[%s16 + $0x18] sm:$0xff]
    %v563 = vld [vmem:[%s16 + $0x20] sm:$0xff]
    %v564 = vld [vmem:[%s16 + $0x28] sm:$0xff]
    %v565 = vld [vmem:[%s16 + $0x30] sm:$0xff]
    %v566 = vld [vmem:[%s16 + $0x38] sm:$0xff]
    %v567 = vld [vmem:[%s17] sm:$0x1]
    %v568 = vld [vmem:[%s18] sm:$0xff]
    %v569 = vld [vmem:[%s18 + $0x8] sm:$0xff]
    %v570 = vld [vmem:[%s18 + $0x10] sm:$0xff]
    %v571 = vld [vmem:[%s18 + $0x18] sm:$0xff]
    %v572 = vld [vmem:[%s18 + $0x20] sm:$0xff]
    %v573 = vld [vmem:[%s18 + $0x28] sm:$0xff]
    %v574 = vld [vmem:[%s18 + $0x30] sm:$0xff]
    %v575 = vld [vmem:[%s18 + $0x38] sm:$0xff]
    %v576 = vld [vmem:[%s18 + $0x40] sm:$0xff]
    %v577 = vld [vmem:[%s18 + $0x48] sm:$0xff]
    %v578 = vld [vmem:[%s18 + $0x50] sm:$0xff]
    %v579 = vld [vmem:[%s18 + $0x58] sm:$0xff]
    %v580 = vld [vmem:[%s18 + $0x60] sm:$0xff]
    %v581 = vld [vmem:[%s18 + $0x68] sm:$0xff]
    %v582 = vld [vmem:[%s18 + $0x70] sm:$0xff]
    %v583 = vld [vmem:[%s18 + $0x78] sm:$0xff]
    %v584 = vld [vmem:[%s19] sm:$0x1]
    %vm585 = vcmask 261120
    %v587 = vsel %vm585, %v169, 0
    %589 = vmatprep.subr.mxu0 0.0
    %590 = vmatpush1.msra.mxu0 %v522
    %591 = vmatprep.subr.mxu0 0.0
    %592 = vmatpush1.msra.mxu0 %v523
    %593 = vmatprep.subr.mxu0 0.0
    %594 = vmatpush1.msra.mxu0 %v524
    %595 = vmatprep.subr.mxu0 0.0
    %596 = vmatpush1.msra.mxu0 %v525
    %597 = vmatprep.subr.mxu0 0.0
    %598 = vmatpush1.msra.mxu0 0.0
    %599 = vmatprep.subr.mxu0 0.0
    %600 = vmatpush1.msra.mxu0 0.0
    %601 = vmatprep.subr.mxu0 0.0
    %602 = vmatpush1.msra.mxu0 0.0
    %603 = vmatprep.subr.mxu0 0.0
    %604 = vmatpush1.msra.mxu0 0.0
    %605 = vmatprep.subr.mxu0 0.0
    %606 = vmatpush1.msra.mxu0 0.0
    %607 = vmatprep.subr.mxu0 0.0
    %608 = vmatpush1.msra.mxu0 0.0
    %609 = vmatprep.subr.mxu0 0.0
    %610 = vmatpush1.msra.mxu0 0.0
    %611 = vmatprep.subr.mxu0 0.0
    %612 = vmatpush1.msra.mxu0 0.0
    %613 = vmatprep.subr.mxu0 0.0
    %614 = vmatpush1.msra.mxu0 0.0
    %615 = vmatprep.subr.mxu0 0.0
    %616 = vmatpush1.msra.mxu0 0.0
    %617 = vmatprep.subr.mxu0 0.0
    %618 = vmatpush1.msra.mxu0 0.0
    %619 = vmatprep.subr.mxu0 0.0
    %620 = vmatpush1.msra.mxu0 0.0
    %621 = vmatprep.subr.mxu0 0.0
    %622 = vmatpush1.msra.mxu0 0.0
    %623 = vmatprep.subr.mxu0 0.0
    %624 = vmatpush1.msra.mxu0 0.0
    %625 = vmatprep.subr.mxu0 0.0
    %626 = vmatpush1.msra.mxu0 0.0
    %627 = vmatprep.subr.mxu0 0.0
    %628 = vmatpush1.msra.mxu0 0.0
    %629 = vmatprep.subr.mxu0 0.0
    %630 = vmatpush1.msra.mxu0 0.0
    %631 = vmatprep.subr.mxu0 0.0
    %632 = vmatpush1.msra.mxu0 0.0
    %633 = vmatprep.subr.mxu0 0.0
    %634 = vmatpush1.msra.mxu0 0.0
    %635 = vmatprep.subr.mxu0 0.0
    %636 = vmatpush1.msra.mxu0 0.0
    %637 = vmatprep.subr.mxu0 0.0
    %638 = vmatpush1.msra.mxu0 0.0
    %639 = vmatprep.subr.mxu0 0.0
    %640 = vmatpush1.msra.mxu0 0.0
    %641 = vmatprep.subr.mxu0 0.0
    %642 = vmatpush1.msra.mxu0 0.0
    %643 = vmatprep.subr.mxu0 0.0
    %644 = vmatpush1.msra.mxu0 0.0
    %645 = vmatprep.subr.mxu0 0.0
    %646 = vmatpush1.msra.mxu0 0.0
    %647 = vmatprep.subr.mxu0 0.0
    %648 = vmatpush1.msra.mxu0 0.0
    %649 = vmatprep.subr.mxu0 0.0
    %650 = vmatpush1.msra.mxu0 0.0
    %651 = vmatprep.subr.mxu0 0.0
    %652 = vmatpush1.msra.mxu0 0.0
    %653 = vmatprep.mubr.f32.mxu0 0.0
    %654 = vmatmul.mubr.f32.gmra.mrb[0].mxu0 %v587
    %v655 = vpop.f32.mrb[0].mxu0
    %v656 = vadd.f32 0.0, %v655
    %v657 = vpop.f32.mrb[0].mxu0
    %658 = vdwg.mxu0
    %v659 = vadd.f32 %v280, %v656
    %v660 = vxor.u32 %v659, 2147483648
    %v661 = vmul.f32 %v660, 1.442695
    %v662 = vpow.pop %v661
    %v663 = vadd.f32 %v662, 1.0
    %v664 = vrcp.pop %v663
    %v665 = vmul.f32 1.0, %v664
    %v666 = vtanh.pop %v659
    %668 = vrot.lane.b32.xlu0 %v179, 32
    %v669 = vpop.permute.xlu0 %668
    %v671 = vmul.f32 %v665, %v669
    %673 = vrot.lane.b32.xlu0 %v666, 64
    %v674 = vpop.permute.xlu0 %673
    %v676 = vmul.f32 %v665, %v674
    %678 = vrot.lane.b32.xlu0 %v676, 32
    %v679 = vpop.permute.xlu0 %678
    %v681 = vadd.f32 %v671, %v679
    %v682 = vtanh.pop %v681
    %684 = vrot.lane.b32.xlu0 %v682, 64
    %v685 = vpop.permute.xlu0 %684
    %v687 = vmul.f32 %v665, %v685
    %689 = vrot.lane.b32.xlu0 %v687, 32
    %v690 = vpop.permute.xlu0 %689
    %693 = vrot.lane.b32.xlu0 %v174, 32
    %v694 = vpop.permute.xlu0 %693
    %v696 = vsel %vm585, %v690, %v694
    %v698 = vlaneseq
    %v699 = vshrl.u32 %v698, 7
    %v700 = vsub.s32 0, %v699
    %v701 = vrot.slane %v534, %v700
    %v704 = vsel %vm89, %v696, 0
    %706 = vmatprep.subr.mxu0 0.0
    %707 = vmatpush1.msra.mxu0 %v526
    %708 = vmatprep.subr.mxu0 0.0
    %709 = vmatpush1.msra.mxu0 %v527
    %710 = vmatprep.subr.mxu0 0.0
    %711 = vmatpush1.msra.mxu0 %v528
    %712 = vmatprep.subr.mxu0 0.0
    %713 = vmatpush1.msra.mxu0 %v529
    %714 = vmatprep.subr.mxu0 0.0
    %715 = vmatpush1.msra.mxu0 %v530
    %716 = vmatprep.subr.mxu0 0.0
    %717 = vmatpush1.msra.mxu0 %v531
    %718 = vmatprep.subr.mxu0 0.0
    %719 = vmatpush1.msra.mxu0 %v532
    %720 = vmatprep.subr.mxu0 0.0
    %721 = vmatpush1.msra.mxu0 %v533
    %722 = vmatprep.subr.mxu0 0.0
    %723 = vmatpush1.msra.mxu0 0.0
    %724 = vmatprep.subr.mxu0 0.0
    %725 = vmatpush1.msra.mxu0 0.0
    %726 = vmatprep.subr.mxu0 0.0
    %727 = vmatpush1.msra.mxu0 0.0
    %728 = vmatprep.subr.mxu0 0.0
    %729 = vmatpush1.msra.mxu0 0.0
    %730 = vmatprep.subr.mxu0 0.0
    %731 = vmatpush1.msra.mxu0 0.0
    %732 = vmatprep.subr.mxu0 0.0
    %733 = vmatpush1.msra.mxu0 0.0
    %734 = vmatprep.subr.mxu0 0.0
    %735 = vmatpush1.msra.mxu0 0.0
    %736 = vmatprep.subr.mxu0 0.0
    %737 = vmatpush1.msra.mxu0 0.0
    %738 = vmatprep.subr.mxu0 0.0
    %739 = vmatpush1.msra.mxu0 0.0
    %740 = vmatprep.subr.mxu0 0.0
    %741 = vmatpush1.msra.mxu0 0.0
    %742 = vmatprep.subr.mxu0 0.0
    %743 = vmatpush1.msra.mxu0 0.0
    %744 = vmatprep.subr.mxu0 0.0
    %745 = vmatpush1.msra.mxu0 0.0
    %746 = vmatprep.subr.mxu0 0.0
    %747 = vmatpush1.msra.mxu0 0.0
    %748 = vmatprep.subr.mxu0 0.0
    %749 = vmatpush1.msra.mxu0 0.0
    %750 = vmatprep.subr.mxu0 0.0
    %751 = vmatpush1.msra.mxu0 0.0
    %752 = vmatprep.subr.mxu0 0.0
    %753 = vmatpush1.msra.mxu0 0.0
    %754 = vmatprep.subr.mxu0 0.0
    %755 = vmatpush1.msra.mxu0 0.0
    %756 = vmatprep.subr.mxu0 0.0
    %757 = vmatpush1.msra.mxu0 0.0
    %758 = vmatprep.subr.mxu0 0.0
    %759 = vmatpush1.msra.mxu0 0.0
    %760 = vmatprep.subr.mxu0 0.0
    %761 = vmatpush1.msra.mxu0 0.0
    %762 = vmatprep.subr.mxu0 0.0
    %763 = vmatpush1.msra.mxu0 0.0
    %764 = vmatprep.subr.mxu0 0.0
    %765 = vmatpush1.msra.mxu0 0.0
    %766 = vmatprep.subr.mxu0 0.0
    %767 = vmatpush1.msra.mxu0 0.0
    %768 = vmatprep.subr.mxu0 0.0
    %769 = vmatpush1.msra.mxu0 0.0
    %770 = vmatprep.mubr.f32.mxu0 0.0
    %771 = vmatmul.mubr.f32.gmra.mrb[0].mxu0 %v704
    %v772 = vpop.f32.mrb[0].mxu0
    %v773 = vadd.f32 %v701, %v772
    %v774 = vpop.f32.mrb[0].mxu0
    %775 = vdwg.mxu0
    %v776 = vxor.u32 %v773, 2147483648
    %v777 = vmul.f32 %v776, 1.442695
    %v778 = vpow.pop %v777
    %v779 = vadd.f32 %v778, 1.0
    %v780 = vrcp.pop %v779
    %v781 = vmul.f32 1.0, %v780
    %v782 = vtanh.pop %v773
    %784 = vrot.lane.b32.xlu0 %v184, 32
    %v785 = vpop.permute.xlu0 %784
    %v787 = vmul.f32 %v781, %v785
    %789 = vrot.lane.b32.xlu0 %v782, 64
    %v790 = vpop.permute.xlu0 %789
    %v792 = vmul.f32 %v781, %v790
    %794 = vrot.lane.b32.xlu0 %v792, 32
    %v795 = vpop.permute.xlu0 %794
    %v797 = vadd.f32 %v787, %v795
    %v798 = vtanh.pop %v797
    %800 = vrot.lane.b32.xlu0 %v798, 64
    %v801 = vpop.permute.xlu0 %800
    %v803 = vmul.f32 %v781, %v801
    %805 = vrot.lane.b32.xlu0 %v803, 32
    %v806 = vpop.permute.xlu0 %805
    %v807 = vsel %vm585, %v806, 0
    %809 = vmatprep.subr.mxu0 %v536
    %810 = vmatpush1.msra.mxu0 %v535
    %811 = vmatprep.subr.mxu0 %v538
    %812 = vmatpush1.msra.mxu0 %v537
    %813 = vmatprep.subr.mxu0 %v540
    %814 = vmatpush1.msra.mxu0 %v539
    %815 = vmatprep.subr.mxu0 %v542
    %816 = vmatpush1.msra.mxu0 %v541
    %817 = vmatprep.subr.mxu0 0.0
    %818 = vmatpush1.msra.mxu0 0.0
    %819 = vmatprep.subr.mxu0 0.0
    %820 = vmatpush1.msra.mxu0 0.0
    %821 = vmatprep.subr.mxu0 0.0
    %822 = vmatpush1.msra.mxu0 0.0
    %823 = vmatprep.subr.mxu0 0.0
    %824 = vmatpush1.msra.mxu0 0.0
    %825 = vmatprep.subr.mxu0 0.0
    %826 = vmatpush1.msra.mxu0 0.0
    %827 = vmatprep.subr.mxu0 0.0
    %828 = vmatpush1.msra.mxu0 0.0
    %829 = vmatprep.subr.mxu0 0.0
    %830 = vmatpush1.msra.mxu0 0.0
    %831 = vmatprep.subr.mxu0 0.0
    %832 = vmatpush1.msra.mxu0 0.0
    %833 = vmatprep.subr.mxu0 0.0
    %834 = vmatpush1.msra.mxu0 0.0
    %835 = vmatprep.subr.mxu0 0.0
    %836 = vmatpush1.msra.mxu0 0.0
    %837 = vmatprep.subr.mxu0 0.0
    %838 = vmatpush1.msra.mxu0 0.0
    %839 = vmatprep.subr.mxu0 0.0
    %840 = vmatpush1.msra.mxu0 0.0
    %841 = vmatprep.subr.mxu0 0.0
    %842 = vmatpush1.msra.mxu0 0.0
    %843 = vmatprep.subr.mxu0 0.0
    %844 = vmatpush1.msra.mxu0 0.0
    %845 = vmatprep.subr.mxu0 0.0
    %846 = vmatpush1.msra.mxu0 0.0
    %847 = vmatprep.subr.mxu0 0.0
    %848 = vmatpush1.msra.mxu0 0.0
    %849 = vmatprep.subr.mxu0 0.0
    %850 = vmatpush1.msra.mxu0 0.0
    %851 = vmatprep.subr.mxu0 0.0
    %852 = vmatpush1.msra.mxu0 0.0
    %853 = vmatprep.subr.mxu0 0.0
    %854 = vmatpush1.msra.mxu0 0.0
    %855 = vmatprep.subr.mxu0 0.0
    %856 = vmatpush1.msra.mxu0 0.0
    %857 = vmatprep.subr.mxu0 0.0
    %858 = vmatpush1.msra.mxu0 0.0
    %859 = vmatprep.subr.mxu0 0.0
    %860 = vmatpush1.msra.mxu0 0.0
    %861 = vmatprep.subr.mxu0 0.0
    %862 = vmatpush1.msra.mxu0 0.0
    %863 = vmatprep.subr.mxu0 0.0
    %864 = vmatpush1.msra.mxu0 0.0
    %865 = vmatprep.subr.mxu0 0.0
    %866 = vmatpush1.msra.mxu0 0.0
    %867 = vmatprep.subr.mxu0 0.0
    %868 = vmatpush1.msra.mxu0 0.0
    %869 = vmatprep.subr.mxu0 0.0
    %870 = vmatpush1.msra.mxu0 0.0
    %871 = vmatprep.subr.mxu0 0.0
    %872 = vmatpush1.msra.mxu0 0.0
    %873 = vmatprep.mubr.f32.mxu0 0.0
    %874 = vmatmul.mubr.f32.gmra.mrb[0].mxu0 %v807
    %v875 = vpop.f32.mrb[0].mxu0
    %v876 = vadd.f32 0.0, %v875
    %v877 = vpop.f32.mrb[0].mxu0
    %v878 = vadd.f32 0.0, %v877
    %879 = vdwg.mxu0
    %v880 = vadd.f32 %v510, %v876
    %v881 = vtanh.pop %v880
    %882 = vmatprep.subr.mxu0 0.0
    %883 = vmatpush1.msra.mxu0 %v543
    %884 = vmatprep.subr.mxu0 0.0
    %885 = vmatpush1.msra.mxu0 %v544
    %886 = vmatprep.subr.mxu0 0.0
    %887 = vmatpush1.msra.mxu0 %v545
    %888 = vmatprep.subr.mxu0 0.0
    %889 = vmatpush1.msra.mxu0 %v546
    %890 = vmatprep.subr.mxu0 0.0
    %891 = vmatpush1.msra.mxu0 %v547
    %892 = vmatprep.subr.mxu0 0.0
    %893 = vmatpush1.msra.mxu0 %v548
    %894 = vmatprep.subr.mxu0 0.0
    %895 = vmatpush1.msra.mxu0 %v549
    %896 = vmatprep.subr.mxu0 0.0
    %897 = vmatpush1.msra.mxu0 %v550
    %898 = vmatprep.subr.mxu0 0.0
    %899 = vmatpush1.msra.mxu0 %v551
    %900 = vmatprep.subr.mxu0 0.0
    %901 = vmatpush1.msra.mxu0 %v552
    %902 = vmatprep.subr.mxu0 0.0
    %903 = vmatpush1.msra.mxu0 %v553
    %904 = vmatprep.subr.mxu0 0.0
    %905 = vmatpush1.msra.mxu0 %v554
    %906 = vmatprep.subr.mxu0 0.0
    %907 = vmatpush1.msra.mxu0 %v555
    %908 = vmatprep.subr.mxu0 0.0
    %909 = vmatpush1.msra.mxu0 %v556
    %910 = vmatprep.subr.mxu0 0.0
    %911 = vmatpush1.msra.mxu0 %v557
    %912 = vmatprep.subr.mxu0 0.0
    %913 = vmatpush1.msra.mxu0 %v558
    %914 = vmatprep.subr.mxu0 0.0
    %915 = vmatpush1.msra.mxu0 0.0
    %916 = vmatprep.subr.mxu0 0.0
    %917 = vmatpush1.msra.mxu0 0.0
    %918 = vmatprep.subr.mxu0 0.0
    %919 = vmatpush1.msra.mxu0 0.0
    %920 = vmatprep.subr.mxu0 0.0
    %921 = vmatpush1.msra.mxu0 0.0
    %922 = vmatprep.subr.mxu0 0.0
    %923 = vmatpush1.msra.mxu0 0.0
    %924 = vmatprep.subr.mxu0 0.0
    %925 = vmatpush1.msra.mxu0 0.0
    %926 = vmatprep.subr.mxu0 0.0
    %927 = vmatpush1.msra.mxu0 0.0
    %928 = vmatprep.subr.mxu0 0.0
    %929 = vmatpush1.msra.mxu0 0.0
    %930 = vmatprep.subr.mxu0 0.0
    %931 = vmatpush1.msra.mxu0 0.0
    %932 = vmatprep.subr.mxu0 0.0
    %933 = vmatpush1.msra.mxu0 0.0
    %934 = vmatprep.subr.mxu0 0.0
    %935 = vmatpush1.msra.mxu0 0.0
    %936 = vmatprep.subr.mxu0 0.0
    %937 = vmatpush1.msra.mxu0 0.0
    %938 = vmatprep.subr.mxu0 0.0
    %939 = vmatpush1.msra.mxu0 0.0
    %940 = vmatprep.subr.mxu0 0.0
    %941 = vmatpush1.msra.mxu0 0.0
    %942 = vmatprep.subr.mxu0 0.0
    %943 = vmatpush1.msra.mxu0 0.0
    %944 = vmatprep.subr.mxu0 0.0
    %945 = vmatpush1.msra.mxu0 0.0
    %946 = vmatprep.mubr.f32.mxu0 0.0
    %947 = vmatmul.mubr.f32.gmra.mrb[0].mxu0 %v881
    %v948 = vpop.f32.mrb[0].mxu0
    %v949 = vadd.f32 %v521, %v948
    %v950 = vpop.f32.mrb[0].mxu0
    %951 = vdwg.mxu0
    %vm952 = vcmask 64512
    %v953 = vsel %vm952, %v949, -inf
    %954 = vmax.xlane.f32.xlu0 %v953
    %v955 = vpop.xlane.xlu0 %954
    %v956 = vsub.f32 %v949, %v955
    %v957 = vmul.f32 %v956, 1.442695
    %v958 = vpow.pop %v957
    %v959 = vsel %vm952, %v958, 0.0
    %960 = vadd.xlane.f32.xlu0 %v959
    %v961 = vpop.xlane.xlu0 %960
    %v962 = vrcp.pop %v961
    %v963 = vmul.f32 %v958, %v962
    %v964 = vlaneseq
    %v965 = vshrl.u32 %v964, 7
    %v966 = vsub.s32 0, %v965
    %v967 = vrot.slane %v963, %v966
    %969 = vbcast.lane.b32.xlu0 %v967, 256
    %v970 = vpop.permute.xlu0 %969
    %v971 = vlaneseq
    %v972 = vshrl.u32 %v971, 7
    %v973 = vsub.s32 1, %v972
    %v974 = vrot.slane %v963, %v973
    %976 = vbcast.lane.b32.xlu0 %v974, 256
    %v977 = vpop.permute.xlu0 %976
    %v978 = vlaneseq
    %v979 = vshrl.u32 %v978, 7
    %v980 = vsub.s32 2, %v979
    %v981 = vrot.slane %v963, %v980
    %983 = vbcast.lane.b32.xlu0 %v981, 256
    %v984 = vpop.permute.xlu0 %983
    %v985 = vlaneseq
    %v986 = vshrl.u32 %v985, 7
    %v987 = vsub.s32 3, %v986
    %v988 = vrot.slane %v963, %v987
    %990 = vbcast.lane.b32.xlu0 %v988, 256
    %v991 = vpop.permute.xlu0 %990
    %v992 = vlaneseq
    %v993 = vshrl.u32 %v992, 7
    %v994 = vsub.s32 4, %v993
    %v995 = vrot.slane %v963, %v994
    %997 = vbcast.lane.b32.xlu0 %v995, 256
    %v998 = vpop.permute.xlu0 %997
    %v999 = vlaneseq
    %v1000 = vshrl.u32 %v999, 7
    %v1001 = vsub.s32 5, %v1000
    %v1002 = vrot.slane %v963, %v1001
    %1004 = vbcast.lane.b32.xlu0 %v1002, 256
    %v1005 = vpop.permute.xlu0 %1004
    %v1006 = vlaneseq
    %v1007 = vshrl.u32 %v1006, 7
    %v1008 = vsub.s32 6, %v1007
    %v1009 = vrot.slane %v963, %v1008
    %1011 = vbcast.lane.b32.xlu0 %v1009, 256
    %v1012 = vpop.permute.xlu0 %1011
    %v1013 = vlaneseq
    %v1014 = vshrl.u32 %v1013, 7
    %v1015 = vsub.s32 7, %v1014
    %v1016 = vrot.slane %v963, %v1015
    %1018 = vbcast.lane.b32.xlu0 %v1016, 256
    %v1019 = vpop.permute.xlu0 %1018
    %v1020 = vmul.f32 %v970, %v513
    %v1021 = vmul.f32 %v977, %v514
    %v1022 = vmul.f32 %v984, %v515
    %v1023 = vmul.f32 %v991, %v516
    %v1024 = vmul.f32 %v998, %v517
    %v1025 = vmul.f32 %v1005, %v518
    %v1026 = vmul.f32 %v1012, %v519
    %v1027 = vmul.f32 %v1019, %v520
    %v1028 = vsel %vm89, %v1020, 0.0
    %v1029 = vrot.slane %v1028, 4
    %v1030 = vadd.f32 %v1028, %v1029
    %v1031 = vrot.slane %v1030, 2
    %v1032 = vadd.f32 %v1030, %v1031
    %v1033 = vrot.slane %v1032, 1
    %v1034 = vadd.f32 %v1032, %v1033
    %v1035 = vsel %vm89, %v1021, 0.0
    %v1036 = vrot.slane %v1035, 4
    %v1037 = vadd.f32 %v1035, %v1036
    %v1038 = vrot.slane %v1037, 2
    %v1039 = vadd.f32 %v1037, %v1038
    %v1040 = vrot.slane %v1039, 1
    %v1041 = vadd.f32 %v1039, %v1040
    %v1042 = vsel %vm89, %v1022, 0.0
    %v1043 = vrot.slane %v1042, 4
    %v1044 = vadd.f32 %v1042, %v1043
    %v1045 = vrot.slane %v1044, 2
    %v1046 = vadd.f32 %v1044, %v1045
    %v1047 = vrot.slane %v1046, 1
    %v1048 = vadd.f32 %v1046, %v1047
    %v1049 = vsel %vm89, %v1023, 0.0
    %v1050 = vrot.slane %v1049, 4
    %v1051 = vadd.f32 %v1049, %v1050
    %v1052 = vrot.slane %v1051, 2
    %v1053 = vadd.f32 %v1051, %v1052
    %v1054 = vrot.slane %v1053, 1
    %v1055 = vadd.f32 %v1053, %v1054
    %v1056 = vsel %vm89, %v1024, 0.0
    %v1057 = vrot.slane %v1056, 4
    %v1058 = vadd.f32 %v1056, %v1057
    %v1059 = vrot.slane %v1058, 2
    %v1060 = vadd.f32 %v1058, %v1059
    %v1061 = vrot.slane %v1060, 1
    %v1062 = vadd.f32 %v1060, %v1061
    %v1063 = vsel %vm89, %v1025, 0.0
    %v1064 = vrot.slane %v1063, 4
    %v1065 = vadd.f32 %v1063, %v1064
    %v1066 = vrot.slane %v1065, 2
    %v1067 = vadd.f32 %v1065, %v1066
    %v1068 = vrot.slane %v1067, 1
    %v1069 = vadd.f32 %v1067, %v1068
    %v1070 = vsel %vm89, %v1026, 0.0
    %v1071 = vrot.slane %v1070, 4
    %v1072 = vadd.f32 %v1070, %v1071
    %v1073 = vrot.slane %v1072, 2
    %v1074 = vadd.f32 %v1072, %v1073
    %v1075 = vrot.slane %v1074, 1
    %v1076 = vadd.f32 %v1074, %v1075
    %v1077 = vsel %vm89, %v1027, 0.0
    %v1078 = vrot.slane %v1077, 4
    %v1079 = vadd.f32 %v1077, %v1078
    %v1080 = vrot.slane %v1079, 2
    %v1081 = vadd.f32 %v1079, %v1080
    %v1082 = vrot.slane %v1081, 1
    %v1083 = vadd.f32 %v1081, %v1082
    %vm1092 = vcmask 1041409
    %v1093 = vsel %vm1092, %v1041, %v1034
    %vm1094 = vcmask 1042434
    %v1095 = vsel %vm1094, %v1048, %v1093
    %vm1096 = vcmask 1043459
    %v1097 = vsel %vm1096, %v1055, %v1095
    %vm1098 = vcmask 1044484
    %v1099 = vsel %vm1098, %v1062, %v1097
    %vm1100 = vcmask 1045509
    %v1101 = vsel %vm1100, %v1069, %v1099
    %vm1102 = vcmask 1046534
    %v1103 = vsel %vm1102, %v1076, %v1101
    %vm1104 = vcmask 1047559
    %v1105 = vsel %vm1104, %v1083, %v1103
    %v1106 = vsel %vm89, %v1105, 0
    %1108 = vmatprep.subr.mxu0 0.0
    %1109 = vmatpush1.msra.mxu0 %v559
    %1110 = vmatprep.subr.mxu0 0.0
    %1111 = vmatpush1.msra.mxu0 %v560
    %1112 = vmatprep.subr.mxu0 0.0
    %1113 = vmatpush1.msra.mxu0 %v561
    %1114 = vmatprep.subr.mxu0 0.0
    %1115 = vmatpush1.msra.mxu0 %v562
    %1116 = vmatprep.subr.mxu0 0.0
    %1117 = vmatpush1.msra.mxu0 %v563
    %1118 = vmatprep.subr.mxu0 0.0
    %1119 = vmatpush1.msra.mxu0 %v564
    %1120 = vmatprep.subr.mxu0 0.0
    %1121 = vmatpush1.msra.mxu0 %v565
    %1122 = vmatprep.subr.mxu0 0.0
    %1123 = vmatpush1.msra.mxu0 %v566
    %1124 = vmatprep.subr.mxu0 0.0
    %1125 = vmatpush1.msra.mxu0 0.0
    %1126 = vmatprep.subr.mxu0 0.0
    %1127 = vmatpush1.msra.mxu0 0.0
    %1128 = vmatprep.subr.mxu0 0.0
    %1129 = vmatpush1.msra.mxu0 0.0
    %1130 = vmatprep.subr.mxu0 0.0
    %1131 = vmatpush1.msra.mxu0 0.0
    %1132 = vmatprep.subr.mxu0 0.0
    %1133 = vmatpush1.msra.mxu0 0.0
    %1134 = vmatprep.subr.mxu0 0.0
    %1135 = vmatpush1.msra.mxu0 0.0
    %1136 = vmatprep.subr.mxu0 0.0
    %1137 = vmatpush1.msra.mxu0 0.0
    %1138 = vmatprep.subr.mxu0 0.0
    %1139 = vmatpush1.msra.mxu0 0.0
    %1140 = vmatprep.subr.mxu0 0.0
    %1141 = vmatpush1.msra.mxu0 0.0
    %1142 = vmatprep.subr.mxu0 0.0
    %1143 = vmatpush1.msra.mxu0 0.0
    %1144 = vmatprep.subr.mxu0 0.0
    %1145 = vmatpush1.msra.mxu0 0.0
    %1146 = vmatprep.subr.mxu0 0.0
    %1147 = vmatpush1.msra.mxu0 0.0
    %1148 = vmatprep.subr.mxu0 0.0
    %1149 = vmatpush1.msra.mxu0 0.0
    %1150 = vmatprep.subr.mxu0 0.0
    %1151 = vmatpush1.msra.mxu0 0.0
    %1152 = vmatprep.subr.mxu0 0.0
    %1153 = vmatpush1.msra.mxu0 0.0
    %1154 = vmatprep.subr.mxu0 0.0
    %1155 = vmatpush1.msra.mxu0 0.0
    %1156 = vmatprep.subr.mxu0 0.0
    %1157 = vmatpush1.msra.mxu0 0.0
    %1158 = vmatprep.subr.mxu0 0.0
    %1159 = vmatpush1.msra.mxu0 0.0
    %1160 = vmatprep.subr.mxu0 0.0
    %1161 = vmatpush1.msra.mxu0 0.0
    %1162 = vmatprep.subr.mxu0 0.0
    %1163 = vmatpush1.msra.mxu0 0.0
    %1164 = vmatprep.subr.mxu0 0.0
    %1165 = vmatpush1.msra.mxu0 0.0
    %1166 = vmatprep.subr.mxu0 0.0
    %1167 = vmatpush1.msra.mxu0 0.0
    %1168 = vmatprep.subr.mxu0 0.0
    %1169 = vmatpush1.msra.mxu0 0.0
    %1170 = vmatprep.subr.mxu0 0.0
    %1171 = vmatpush1.msra.mxu0 0.0
    %1172 = vmatprep.mubr.f32.mxu0 0.0
    %1173 = vmatmul.mubr.f32.gmra.mrb[0].mxu0 %v1106
    %v1174 = vpop.f32.mrb[0].mxu0
    %v1175 = vadd.f32 0.0, %v1174
    %v1176 = vpop.f32.mrb[0].mxu0
    %1177 = vdwg.mxu0
    %v1178 = vadd.f32 %v878, %v1175
    %v1180 = vlaneseq
    %v1181 = vshrl.u32 %v1180, 7
    %v1182 = vsub.s32 0, %v1181
    %v1183 = vrot.slane %v567, %v1182
    %v1185 = vadd.f32 %v1178, %v1183
    %v1187 = vlaneseq
    %v1188 = vshrl.u32 %v1187, 7
    %v1189 = vsub.s32 0, %v1188
    %v1190 = vrot.slane %v584, %v1189
    %1192 = vmatprep.subr.mxu0 0.0
    %1193 = vmatpush1.msra.mxu0 %v568
    %1194 = vmatprep.subr.mxu0 0.0
    %1195 = vmatpush1.msra.mxu0 %v569
    %1196 = vmatprep.subr.mxu0 0.0
    %1197 = vmatpush1.msra.mxu0 %v570
    %1198 = vmatprep.subr.mxu0 0.0
    %1199 = vmatpush1.msra.mxu0 %v571
    %1200 = vmatprep.subr.mxu0 0.0
    %1201 = vmatpush1.msra.mxu0 %v572
    %1202 = vmatprep.subr.mxu0 0.0
    %1203 = vmatpush1.msra.mxu0 %v573
    %1204 = vmatprep.subr.mxu0 0.0
    %1205 = vmatpush1.msra.mxu0 %v574
    %1206 = vmatprep.subr.mxu0 0.0
    %1207 = vmatpush1.msra.mxu0 %v575
    %1208 = vmatprep.subr.mxu0 0.0
    %1209 = vmatpush1.msra.mxu0 %v576
    %1210 = vmatprep.subr.mxu0 0.0
    %1211 = vmatpush1.msra.mxu0 %v577
    %1212 = vmatprep.subr.mxu0 0.0
    %1213 = vmatpush1.msra.mxu0 %v578
    %1214 = vmatprep.subr.mxu0 0.0
    %1215 = vmatpush1.msra.mxu0 %v579
    %1216 = vmatprep.subr.mxu0 0.0
    %1217 = vmatpush1.msra.mxu0 %v580
    %1218 = vmatprep.subr.mxu0 0.0
    %1219 = vmatpush1.msra.mxu0 %v581
    %1220 = vmatprep.subr.mxu0 0.0
    %1221 = vmatpush1.msra.mxu0 %v582
    %1222 = vmatprep.subr.mxu0 0.0
    %1223 = vmatpush1.msra.mxu0 %v583
    %1224 = vmatprep.subr.mxu0 0.0
    %1225 = vmatpush1.msra.mxu0 0.0
    %1226 = vmatprep.subr.mxu0 0.0
    %1227 = vmatpush1.msra.mxu0 0.0
    %1228 = vmatprep.subr.mxu0 0.0
    %1229 = vmatpush1.msra.mxu0 0.0
    %1230 = vmatprep.subr.mxu0 0.0
    %1231 = vmatpush1.msra.mxu0 0.0
    %1232 = vmatprep.subr.mxu0 0.0
    %1233 = vmatpush1.msra.mxu0 0.0
    %1234 = vmatprep.subr.mxu0 0.0
    %1235 = vmatpush1.msra.mxu0 0.0
    %1236 = vmatprep.subr.mxu0 0.0
    %1237 = vmatpush1.msra.mxu0 0.0
    %1238 = vmatprep.subr.mxu0 0.0
    %1239 = vmatpush1.msra.mxu0 0.0
    %1240 = vmatprep.subr.mxu0 0.0
    %1241 = vmatpush1.msra.mxu0 0.0
    %1242 = vmatprep.subr.mxu0 0.0
    %1243 = vmatpush1.msra.mxu0 0.0
    %1244 = vmatprep.subr.mxu0 0.0
    %1245 = vmatpush1.msra.mxu0 0.0
    %1246 = vmatprep.subr.mxu0 0.0
    %1247 = vmatpush1.msra.mxu0 0.0
    %1248 = vmatprep.subr.mxu0 0.0
    %1249 = vmatpush1.msra.mxu0 0.0
    %1250 = vmatprep.subr.mxu0 0.0
    %1251 = vmatpush1.msra.mxu0 0.0
    %1252 = vmatprep.subr.mxu0 0.0
    %1253 = vmatpush1.msra.mxu0 0.0
    %1254 = vmatprep.subr.mxu0 0.0
    %1255 = vmatpush1.msra.mxu0 0.0
    %1256 = vmatprep.mubr.f32.mxu0 0.0
    %1257 = vmatmul.mubr.f32.gmra.mrb[0].mxu0 %v1185
    %v1258 = vpop.f32.mrb[0].mxu0
    %v1259 = vadd.f32 %v1190, %v1258
    %v1260 = vpop.f32.mrb[0].mxu0
    %1261 = vdwg.mxu0
    %1262 = vst.msk [vmem:[#allocation2] sm:$0xff] %vm585, %v1259
    %v1263 = vsel %vm585, %v690, 0
    %1265 = vmatprep.subr.mxu0 0.0
    %1266 = vmatpush1.msra.mxu0 %v522
    %1267 = vmatprep.subr.mxu0 0.0
    %1268 = vmatpush1.msra.mxu0 %v523
    %1269 = vmatprep.subr.mxu0 0.0
    %1270 = vmatpush1.msra.mxu0 %v524
    %1271 = vmatprep.subr.mxu0 0.0
    %1272 = vmatpush1.msra.mxu0 %v525
    %1273 = vmatprep.subr.mxu0 0.0
    %1274 = vmatpush1.msra.mxu0 0.0
    %1275 = vmatprep.subr.mxu0 0.0
    %1276 = vmatpush1.msra.mxu0 0.0
    %1277 = vmatprep.subr.mxu0 0.0
    %1278 = vmatpush1.msra.mxu0 0.0
    %1279 = vmatprep.subr.mxu0 0.0
    %1280 = vmatpush1.msra.mxu0 0.0
    %1281 = vmatprep.subr.mxu0 0.0
    %1282 = vmatpush1.msra.mxu0 0.0
    %1283 = vmatprep.subr.mxu0 0.0
    %1284 = vmatpush1.msra.mxu0 0.0
    %1285 = vmatprep.subr.mxu0 0.0
    %1286 = vmatpush1.msra.mxu0 0.0
    %1287 = vmatprep.subr.mxu0 0.0
    %1288 = vmatpush1.msra.mxu0 0.0
    %1289 = vmatprep.subr.mxu0 0.0
    %1290 = vmatpush1.msra.mxu0 0.0
    %1291 = vmatprep.subr.mxu0 0.0
    %1292 = vmatpush1.msra.mxu0 0.0
    %1293 = vmatprep.subr.mxu0 0.0
    %1294 = vmatpush1.msra.mxu0 0.0
    %1295 = vmatprep.subr.mxu0 0.0
    %1296 = vmatpush1.msra.mxu0 0.0
    %1297 = vmatprep.subr.mxu0 0.0
    %1298 = vmatpush1.msra.mxu0 0.0
    %1299 = vmatprep.subr.mxu0 0.0
    %1300 = vmatpush1.msra.mxu0 0.0
    %1301 = vmatprep.subr.mxu0 0.0
    %1302 = vmatpush1.msra.mxu0 0.0
    %1303 = vmatprep.subr.mxu0 0.0
    %1304 = vmatpush1.msra.mxu0 0.0
    %1305 = vmatprep.subr.mxu0 0.0
    %1306 = vmatpush1.msra.mxu0 0.0
    %1307 = vmatprep.subr.mxu0 0.0
    %1308 = vmatpush1.msra.mxu0 0.0
    %1309 = vmatprep.subr.mxu0 0.0
    %1310 = vmatpush1.msra.mxu0 0.0
    %1311 = vmatprep.subr.mxu0 0.0
    %1312 = vmatpush1.msra.mxu0 0.0
    %1313 = vmatprep.subr.mxu0 0.0
    %1314 = vmatpush1.msra.mxu0 0.0
    %1315 = vmatprep.subr.mxu0 0.0
    %1316 = vmatpush1.msra.mxu0 0.0
    %1317 = vmatprep.subr.mxu0 0.0
    %1318 = vmatpush1.msra.mxu0 0.0
    %1319 = vmatprep.subr.mxu0 0.0
    %1320 = vmatpush1.msra.mxu0 0.0
    %1321 = vmatprep.subr.mxu0 0.0
    %1322 = vmatpush1.msra.mxu0 0.0
    %1323 = vmatprep.subr.mxu0 0.0
    %1324 = vmatpush1.msra.mxu0 0.0
    %1325 = vmatprep.subr.mxu0 0.0
    %1326 = vmatpush1.msra.mxu0 0.0
    %1327 = vmatprep.subr.mxu0 0.0
    %1328 = vmatpush1.msra.mxu0 0.0
    %1329 = vmatprep.mubr.f32.mxu0 0.0
    %1330 = vmatmul.mubr.f32.gmra.mrb[0].mxu0 %v1263
    %v1331 = vpop.f32.mrb[0].mxu0
    %v1332 = vadd.f32 0.0, %v1331
    %v1333 = vpop.f32.mrb[0].mxu0
    %1334 = vdwg.mxu0
    %v1335 = vadd.f32 %v285, %v1332
    %v1336 = vxor.u32 %v1335, 2147483648
    %v1337 = vmul.f32 %v1336, 1.442695
    %v1338 = vpow.pop %v1337
    %v1339 = vadd.f32 %v1338, 1.0
    %v1340 = vrcp.pop %v1339
    %v1341 = vmul.f32 1.0, %v1340
    %v1342 = vtanh.pop %v1335
    %v1343 = vmul.f32 %v1341, %v681
    %1345 = vrot.lane.b32.xlu0 %v1342, 64
    %v1346 = vpop.permute.xlu0 %1345
    %v1348 = vmul.f32 %v1341, %v1346
    %1350 = vrot.lane.b32.xlu0 %v1348, 32
    %v1351 = vpop.permute.xlu0 %1350
    %v1353 = vadd.f32 %v1343, %v1351
    %v1354 = vtanh.pop %v1353
    %1356 = vrot.lane.b32.xlu0 %v1354, 64
    %v1357 = vpop.permute.xlu0 %1356
    %v1359 = vmul.f32 %v1341, %v1357
    %1361 = vrot.lane.b32.xlu0 %v1359, 32
    %v1362 = vpop.permute.xlu0 %1361
    %1364 = vrot.lane.b32.xlu0 %v803, 64
    %v1365 = vpop.permute.xlu0 %1364
    %v1367 = vsel %vm585, %v1362, %v1365
    %v1369 = vsel %vm89, %v1367, 0
    %1371 = vmatprep.subr.mxu0 0.0
    %1372 = vmatpush1.msra.mxu0 %v526
    %1373 = vmatprep.subr.mxu0 0.0
    %1374 = vmatpush1.msra.mxu0 %v527
    %1375 = vmatprep.subr.mxu0 0.0
    %1376 = vmatpush1.msra.mxu0 %v528
    %1377 = vmatprep.subr.mxu0 0.0
    %1378 = vmatpush1.msra.mxu0 %v529
    %1379 = vmatprep.subr.mxu0 0.0
    %1380 = vmatpush1.msra.mxu0 %v530
    %1381 = vmatprep.subr.mxu0 0.0
    %1382 = vmatpush1.msra.mxu0 %v531
    %1383 = vmatprep.subr.mxu0 0.0
    %1384 = vmatpush1.msra.mxu0 %v532
    %1385 = vmatprep.subr.mxu0 0.0
    %1386 = vmatpush1.msra.mxu0 %v533
    %1387 = vmatprep.subr.mxu0 0.0
    %1388 = vmatpush1.msra.mxu0 0.0
    %1389 = vmatprep.subr.mxu0 0.0
    %1390 = vmatpush1.msra.mxu0 0.0
    %1391 = vmatprep.subr.mxu0 0.0
    %1392 = vmatpush1.msra.mxu0 0.0
    %1393 = vmatprep.subr.mxu0 0.0
    %1394 = vmatpush1.msra.mxu0 0.0
    %1395 = vmatprep.subr.mxu0 0.0
    %1396 = vmatpush1.msra.mxu0 0.0
    %1397 = vmatprep.subr.mxu0 0.0
    %1398 = vmatpush1.msra.mxu0 0.0
    %1399 = vmatprep.subr.mxu0 0.0
    %1400 = vmatpush1.msra.mxu0 0.0
    %1401 = vmatprep.subr.mxu0 0.0
    %1402 = vmatpush1.msra.mxu0 0.0
    %1403 = vmatprep.subr.mxu0 0.0
    %1404 = vmatpush1.msra.mxu0 0.0
    %1405 = vmatprep.subr.mxu0 0.0
    %1406 = vmatpush1.msra.mxu0 0.0
    %1407 = vmatprep.subr.mxu0 0.0
    %1408 = vmatpush1.msra.mxu0 0.0
    %1409 = vmatprep.subr.mxu0 0.0
    %1410 = vmatpush1.msra.mxu0 0.0
    %1411 = vmatprep.subr.mxu0 0.0
    %1412 = vmatpush1.msra.mxu0 0.0
    %1413 = vmatprep.subr.mxu0 0.0
    %1414 = vmatpush1.msra.mxu0 0.0
    %1415 = vmatprep.subr.mxu0 0.0
    %1416 = vmatpush1.msra.mxu0 0.0
    %1417 = vmatprep.subr.mxu0 0.0
    %1418 = vmatpush1.msra.mxu0 0.0
    %1419 = vmatprep.subr.mxu0 0.0
    %1420 = vmatpush1.msra.mxu0 0.0
    %1421 = vmatprep.subr.mxu0 0.0
    %1422 = vmatpush1.msra.mxu0 0.0
    %1423 = vmatprep.subr.mxu0 0.0
    %1424 = vmatpush1.msra.mxu0 0.0
    %1425 = vmatprep.subr.mxu0 0.0
    %1426 = vmatpush1.msra.mxu0 0.0
    %1427 = vmatprep.subr.mxu0 0.0
    %1428 = vmatpush1.msra.mxu0 0.0
    %1429 = vmatprep.subr.mxu0 0.0
    %1430 = vmatpush1.msra.mxu0 0.0
    %1431 = vmatprep.subr.mxu0 0.0
    %1432 = vmatpush1.msra.mxu0 0.0
    %1433 = vmatprep.subr.mxu0 0.0
    %1434 = vmatpush1.msra.mxu0 0.0
    %1435 = vmatprep.mubr.f32.mxu0 0.0
    %1436 = vmatmul.mubr.f32.gmra.mrb[0].mxu0 %v1369
    %v1437 = vpop.f32.mrb[0].mxu0
    %v1438 = vadd.f32 %v701, %v1437
    %v1439 = vpop.f32.mrb[0].mxu0
    %1440 = vdwg.mxu0
    %v1441 = vxor.u32 %v1438, 2147483648
    %v1442 = vmul.f32 %v1441, 1.442695
    %v1443 = vpow.pop %v1442
    %v1444 = vadd.f32 %v1443, 1.0
    %v1445 = vrcp.pop %v1444
    %v1446 = vmul.f32 1.0, %v1445
    %v1447 = vtanh.pop %v1438
    %v1448 = vmul.f32 %v1446, %v797
    %1450 = vrot.lane.b32.xlu0 %v1447, 64
    %v1451 = vpop.permute.xlu0 %1450
    %v1453 = vmul.f32 %v1446, %v1451
    %1455 = vrot.lane.b32.xlu0 %v1453, 32
    %v1456 = vpop.permute.xlu0 %1455
    %v1458 = vadd.f32 %v1448, %v1456
    %v1459 = vtanh.pop %v1458
    %1461 = vrot.lane.b32.xlu0 %v1459, 64
    %v1462 = vpop.permute.xlu0 %1461
    %v1464 = vmul.f32 %v1446, %v1462
    %1466 = vrot.lane.b32.xlu0 %v1464, 32
    %v1467 = vpop.permute.xlu0 %1466
    %v1468 = vsel %vm585, %v1467, 0
    %1470 = vmatprep.subr.mxu0 %v536
    %1471 = vmatpush1.msra.mxu0 %v535
    %1472 = vmatprep.subr.mxu0 %v538
    %1473 = vmatpush1.msra.mxu0 %v537
    %1474 = vmatprep.subr.mxu0 %v540
    %1475 = vmatpush1.msra.mxu0 %v539
    %1476 = vmatprep.subr.mxu0 %v542
    %1477 = vmatpush1.msra.mxu0 %v541
    %1478 = vmatprep.subr.mxu0 0.0
    %1479 = vmatpush1.msra.mxu0 0.0
    %1480 = vmatprep.subr.mxu0 0.0
    %1481 = vmatpush1.msra.mxu0 0.0
    %1482 = vmatprep.subr.mxu0 0.0
    %1483 = vmatpush1.msra.mxu0 0.0
    %1484 = vmatprep.subr.mxu0 0.0
    %1485 = vmatpush1.msra.mxu0 0.0
    %1486 = vmatprep.subr.mxu0 0.0
    %1487 = vmatpush1.msra.mxu0 0.0
    %1488 = vmatprep.subr.mxu0 0.0
    %1489 = vmatpush1.msra.mxu0 0.0
    %1490 = vmatprep.subr.mxu0 0.0
    %1491 = vmatpush1.msra.mxu0 0.0
    %1492 = vmatprep.subr.mxu0 0.0
    %1493 = vmatpush1.msra.mxu0 0.0
    %1494 = vmatprep.subr.mxu0 0.0
    %1495 = vmatpush1.msra.mxu0 0.0
    %1496 = vmatprep.subr.mxu0 0.0
    %1497 = vmatpush1.msra.mxu0 0.0
    %1498 = vmatprep.subr.mxu0 0.0
    %1499 = vmatpush1.msra.mxu0 0.0
    %1500 = vmatprep.subr.mxu0 0.0
    %1501 = vmatpush1.msra.mxu0 0.0
    %1502 = vmatprep.subr.mxu0 0.0
    %1503 = vmatpush1.msra.mxu0 0.0
    %1504 = vmatprep.subr.mxu0 0.0
    %1505 = vmatpush1.msra.mxu0 0.0
    %1506 = vmatprep.subr.mxu0 0.0
    %1507 = vmatpush1.msra.mxu0 0.0
    %1508 = vmatprep.subr.mxu0 0.0
    %1509 = vmatpush1.msra.mxu0 0.0
    %1510 = vmatprep.subr.mxu0 0.0
    %1511 = vmatpush1.msra.mxu0 0.0
    %1512 = vmatprep.subr.mxu0 0.0
    %1513 = vmatpush1.msra.mxu0 0.0
    %1514 = vmatprep.subr.mxu0 0.0
    %1515 = vmatpush1.msra.mxu0 0.0
    %1516 = vmatprep.subr.mxu0 0.0
    %1517 = vmatpush1.msra.mxu0 0.0
    %1518 = vmatprep.subr.mxu0 0.0
    %1519 = vmatpush1.msra.mxu0 0.0
    %1520 = vmatprep.subr.mxu0 0.0
    %1521 = vmatpush1.msra.mxu0 0.0
    %1522 = vmatprep.subr.mxu0 0.0
    %1523 = vmatpush1.msra.mxu0 0.0
    %1524 = vmatprep.subr.mxu0 0.0
    %1525 = vmatpush1.msra.mxu0 0.0
    %1526 = vmatprep.subr.mxu0 0.0
    %1527 = vmatpush1.msra.mxu0 0.0
    %1528 = vmatprep.subr.mxu0 0.0
    %1529 = vmatpush1.msra.mxu0 0.0
    %1530 = vmatprep.subr.mxu0 0.0
    %1531 = vmatpush1.msra.mxu0 0.0
    %1532 = vmatprep.subr.mxu0 0.0
    %1533 = vmatpush1.msra.mxu0 0.0
    %1534 = vmatprep.mubr.f32.mxu0 0.0
    %1535 = vmatmul.mubr.f32.gmra.mrb[0].mxu0 %v1468
    %v1536 = vpop.f32.mrb[0].mxu0
    %v1537 = vadd.f32 0.0, %v1536
    %v1538 = vpop.f32.mrb[0].mxu0
    %v1539 = vadd.f32 0.0, %v1538
    %1540 = vdwg.mxu0
    %v1541 = vadd.f32 %v510, %v1537
    %v1542 = vtanh.pop %v1541
    %1543 = vmatprep.subr.mxu0 0.0
    %1544 = vmatpush1.msra.mxu0 %v543
    %1545 = vmatprep.subr.mxu0 0.0
    %1546 = vmatpush1.msra.mxu0 %v544
    %1547 = vmatprep.subr.mxu0 0.0
    %1548 = vmatpush1.msra.mxu0 %v545
    %1549 = vmatprep.subr.mxu0 0.0
    %1550 = vmatpush1.msra.mxu0 %v546
    %1551 = vmatprep.subr.mxu0 0.0
    %1552 = vmatpush1.msra.mxu0 %v547
    %1553 = vmatprep.subr.mxu0 0.0
    %1554 = vmatpush1.msra.mxu0 %v548
    %1555 = vmatprep.subr.mxu0 0.0
    %1556 = vmatpush1.msra.mxu0 %v549
    %1557 = vmatprep.subr.mxu0 0.0
    %1558 = vmatpush1.msra.mxu0 %v550
    %1559 = vmatprep.subr.mxu0 0.0
    %1560 = vmatpush1.msra.mxu0 %v551
    %1561 = vmatprep.subr.mxu0 0.0
    %1562 = vmatpush1.msra.mxu0 %v552
    %1563 = vmatprep.subr.mxu0 0.0
    %1564 = vmatpush1.msra.mxu0 %v553
    %1565 = vmatprep.subr.mxu0 0.0
    %1566 = vmatpush1.msra.mxu0 %v554
    %1567 = vmatprep.subr.mxu0 0.0
    %1568 = vmatpush1.msra.mxu0 %v555
    %1569 = vmatprep.subr.mxu0 0.0
    %1570 = vmatpush1.msra.mxu0 %v556
    %1571 = vmatprep.subr.mxu0 0.0
    %1572 = vmatpush1.msra.mxu0 %v557
    %1573 = vmatprep.subr.mxu0 0.0
    %1574 = vmatpush1.msra.mxu0 %v558
    %1575 = vmatprep.subr.mxu0 0.0
    %1576 = vmatpush1.msra.mxu0 0.0
    %1577 = vmatprep.subr.mxu0 0.0
    %1578 = vmatpush1.msra.mxu0 0.0
    %1579 = vmatprep.subr.mxu0 0.0
    %1580 = vmatpush1.msra.mxu0 0.0
    %1581 = vmatprep.subr.mxu0 0.0
    %1582 = vmatpush1.msra.mxu0 0.0
    %1583 = vmatprep.subr.mxu0 0.0
    %1584 = vmatpush1.msra.mxu0 0.0
    %1585 = vmatprep.subr.mxu0 0.0
    %1586 = vmatpush1.msra.mxu0 0.0
    %1587 = vmatprep.subr.mxu0 0.0
    %1588 = vmatpush1.msra.mxu0 0.0
    %1589 = vmatprep.subr.mxu0 0.0
    %1590 = vmatpush1.msra.mxu0 0.0
    %1591 = vmatprep.subr.mxu0 0.0
    %1592 = vmatpush1.msra.mxu0 0.0
    %1593 = vmatprep.subr.mxu0 0.0
    %1594 = vmatpush1.msra.mxu0 0.0
    %1595 = vmatprep.subr.mxu0 0.0
    %1596 = vmatpush1.msra.mxu0 0.0
    %1597 = vmatprep.subr.mxu0 0.0
    %1598 = vmatpush1.msra.mxu0 0.0
    %1599 = vmatprep.subr.mxu0 0.0
    %1600 = vmatpush1.msra.mxu0 0.0
    %1601 = vmatprep.subr.mxu0 0.0
    %1602 = vmatpush1.msra.mxu0 0.0
    %1603 = vmatprep.subr.mxu0 0.0
    %1604 = vmatpush1.msra.mxu0 0.0
    %1605 = vmatprep.subr.mxu0 0.0
    %1606 = vmatpush1.msra.mxu0 0.0
    %1607 = vmatprep.mubr.f32.mxu0 0.0
    %1608 = vmatmul.mubr.f32.gmra.mrb[0].mxu0 %v1542
    %v1609 = vpop.f32.mrb[0].mxu0
    %v1610 = vadd.f32 %v521, %v1609
    %v1611 = vpop.f32.mrb[0].mxu0
    %1612 = vdwg.mxu0
    %v1613 = vsel %vm952, %v1610, -inf
    %1614 = vmax.xlane.f32.xlu0 %v1613
    %v1615 = vpop.xlane.xlu0 %1614
    %v1616 = vsub.f32 %v1610, %v1615
    %v1617 = vmul.f32 %v1616, 1.442695
    %v1618 = vpow.pop %v1617
    %v1619 = vsel %vm952, %v1618, 0.0
    %1620 = vadd.xlane.f32.xlu0 %v1619
    %v1621 = vpop.xlane.xlu0 %1620
    %v1622 = vrcp.pop %v1621
    %v1623 = vmul.f32 %v1618, %v1622
    %v1624 = vlaneseq
    %v1625 = vshrl.u32 %v1624, 7
    %v1626 = vsub.s32 0, %v1625
    %v1627 = vrot.slane %v1623, %v1626
    %1629 = vbcast.lane.b32.xlu0 %v1627, 256
    %v1630 = vpop.permute.xlu0 %1629
    %v1631 = vlaneseq
    %v1632 = vshrl.u32 %v1631, 7
    %v1633 = vsub.s32 1, %v1632
    %v1634 = vrot.slane %v1623, %v1633
    %1636 = vbcast.lane.b32.xlu0 %v1634, 256
    %v1637 = vpop.permute.xlu0 %1636
    %v1638 = vlaneseq
    %v1639 = vshrl.u32 %v1638, 7
    %v1640 = vsub.s32 2, %v1639
    %v1641 = vrot.slane %v1623, %v1640
    %1643 = vbcast.lane.b32.xlu0 %v1641, 256
    %v1644 = vpop.permute.xlu0 %1643
    %v1645 = vlaneseq
    %v1646 = vshrl.u32 %v1645, 7
    %v1647 = vsub.s32 3, %v1646
    %v1648 = vrot.slane %v1623, %v1647
    %1650 = vbcast.lane.b32.xlu0 %v1648, 256
    %v1651 = vpop.permute.xlu0 %1650
    %v1652 = vlaneseq
    %v1653 = vshrl.u32 %v1652, 7
    %v1654 = vsub.s32 4, %v1653
    %v1655 = vrot.slane %v1623, %v1654
    %1657 = vbcast.lane.b32.xlu0 %v1655, 256
    %v1658 = vpop.permute.xlu0 %1657
    %v1659 = vlaneseq
    %v1660 = vshrl.u32 %v1659, 7
    %v1661 = vsub.s32 5, %v1660
    %v1662 = vrot.slane %v1623, %v1661
    %1664 = vbcast.lane.b32.xlu0 %v1662, 256
    %v1665 = vpop.permute.xlu0 %1664
    %v1666 = vlaneseq
    %v1667 = vshrl.u32 %v1666, 7
    %v1668 = vsub.s32 6, %v1667
    %v1669 = vrot.slane %v1623, %v1668
    %1671 = vbcast.lane.b32.xlu0 %v1669, 256
    %v1672 = vpop.permute.xlu0 %1671
    %v1673 = vlaneseq
    %v1674 = vshrl.u32 %v1673, 7
    %v1675 = vsub.s32 7, %v1674
    %v1676 = vrot.slane %v1623, %v1675
    %1678 = vbcast.lane.b32.xlu0 %v1676, 256
    %v1679 = vpop.permute.xlu0 %1678
    %v1680 = vmul.f32 %v1630, %v513
    %v1681 = vmul.f32 %v1637, %v514
    %v1682 = vmul.f32 %v1644, %v515
    %v1683 = vmul.f32 %v1651, %v516
    %v1684 = vmul.f32 %v1658, %v517
    %v1685 = vmul.f32 %v1665, %v518
    %v1686 = vmul.f32 %v1672, %v519
    %v1687 = vmul.f32 %v1679, %v520
    %v1688 = vsel %vm89, %v1680, 0.0
    %v1689 = vrot.slane %v1688, 4
    %v1690 = vadd.f32 %v1688, %v1689
    %v1691 = vrot.slane %v1690, 2
    %v1692 = vadd.f32 %v1690, %v1691
    %v1693 = vrot.slane %v1692, 1
    %v1694 = vadd.f32 %v1692, %v1693
    %v1695 = vsel %vm89, %v1681, 0.0
    %v1696 = vrot.slane %v1695, 4
    %v1697 = vadd.f32 %v1695, %v1696
    %v1698 = vrot.slane %v1697, 2
    %v1699 = vadd.f32 %v1697, %v1698
    %v1700 = vrot.slane %v1699, 1
    %v1701 = vadd.f32 %v1699, %v1700
    %v1702 = vsel %vm89, %v1682, 0.0
    %v1703 = vrot.slane %v1702, 4
    %v1704 = vadd.f32 %v1702, %v1703
    %v1705 = vrot.slane %v1704, 2
    %v1706 = vadd.f32 %v1704, %v1705
    %v1707 = vrot.slane %v1706, 1
    %v1708 = vadd.f32 %v1706, %v1707
    %v1709 = vsel %vm89, %v1683, 0.0
    %v1710 = vrot.slane %v1709, 4
    %v1711 = vadd.f32 %v1709, %v1710
    %v1712 = vrot.slane %v1711, 2
    %v1713 = vadd.f32 %v1711, %v1712
    %v1714 = vrot.slane %v1713, 1
    %v1715 = vadd.f32 %v1713, %v1714
    %v1716 = vsel %vm89, %v1684, 0.0
    %v1717 = vrot.slane %v1716, 4
    %v1718 = vadd.f32 %v1716, %v1717
    %v1719 = vrot.slane %v1718, 2
    %v1720 = vadd.f32 %v1718, %v1719
    %v1721 = vrot.slane %v1720, 1
    %v1722 = vadd.f32 %v1720, %v1721
    %v1723 = vsel %vm89, %v1685, 0.0
    %v1724 = vrot.slane %v1723, 4
    %v1725 = vadd.f32 %v1723, %v1724
    %v1726 = vrot.slane %v1725, 2
    %v1727 = vadd.f32 %v1725, %v1726
    %v1728 = vrot.slane %v1727, 1
    %v1729 = vadd.f32 %v1727, %v1728
    %v1730 = vsel %vm89, %v1686, 0.0
    %v1731 = vrot.slane %v1730, 4
    %v1732 = vadd.f32 %v1730, %v1731
    %v1733 = vrot.slane %v1732, 2
    %v1734 = vadd.f32 %v1732, %v1733
    %v1735 = vrot.slane %v1734, 1
    %v1736 = vadd.f32 %v1734, %v1735
    %v1737 = vsel %vm89, %v1687, 0.0
    %v1738 = vrot.slane %v1737, 4
    %v1739 = vadd.f32 %v1737, %v1738
    %v1740 = vrot.slane %v1739, 2
    %v1741 = vadd.f32 %v1739, %v1740
    %v1742 = vrot.slane %v1741, 1
    %v1743 = vadd.f32 %v1741, %v1742
    %v1752 = vsel %vm1092, %v1701, %v1694
    %v1753 = vsel %vm1094, %v1708, %v1752
    %v1754 = vsel %vm1096, %v1715, %v1753
    %v1755 = vsel %vm1098, %v1722, %v1754
    %v1756 = vsel %vm1100, %v1729, %v1755
    %v1757 = vsel %vm1102, %v1736, %v1756
    %v1758 = vsel %vm1104, %v1743, %v1757
    %v1759 = vsel %vm89, %v1758, 0
    %1761 = vmatprep.subr.mxu0 0.0
    %1762 = vmatpush1.msra.mxu0 %v559
    %1763 = vmatprep.subr.mxu0 0.0
    %1764 = vmatpush1.msra.mxu0 %v560
    %1765 = vmatprep.subr.mxu0 0.0
    %1766 = vmatpush1.msra.mxu0 %v561
    %1767 = vmatprep.subr.mxu0 0.0
    %1768 = vmatpush1.msra.mxu0 %v562
    %1769 = vmatprep.subr.mxu0 0.0
    %1770 = vmatpush1.msra.mxu0 %v563
    %1771 = vmatprep.subr.mxu0 0.0
    %1772 = vmatpush1.msra.mxu0 %v564
    %1773 = vmatprep.subr.mxu0 0.0
    %1774 = vmatpush1.msra.mxu0 %v565
    %1775 = vmatprep.subr.mxu0 0.0
    %1776 = vmatpush1.msra.mxu0 %v566
    %1777 = vmatprep.subr.mxu0 0.0
    %1778 = vmatpush1.msra.mxu0 0.0
    %1779 = vmatprep.subr.mxu0 0.0
    %1780 = vmatpush1.msra.mxu0 0.0
    %1781 = vmatprep.subr.mxu0 0.0
    %1782 = vmatpush1.msra.mxu0 0.0
    %1783 = vmatprep.subr.mxu0 0.0
    %1784 = vmatpush1.msra.mxu0 0.0
    %1785 = vmatprep.subr.mxu0 0.0
    %1786 = vmatpush1.msra.mxu0 0.0
    %1787 = vmatprep.subr.mxu0 0.0
    %1788 = vmatpush1.msra.mxu0 0.0
    %1789 = vmatprep.subr.mxu0 0.0
    %1790 = vmatpush1.msra.mxu0 0.0
    %1791 = vmatprep.subr.mxu0 0.0
    %1792 = vmatpush1.msra.mxu0 0.0
    %1793 = vmatprep.subr.mxu0 0.0
    %1794 = vmatpush1.msra.mxu0 0.0
    %1795 = vmatprep.subr.mxu0 0.0
    %1796 = vmatpush1.msra.mxu0 0.0
    %1797 = vmatprep.subr.mxu0 0.0
    %1798 = vmatpush1.msra.mxu0 0.0
    %1799 = vmatprep.subr.mxu0 0.0
    %1800 = vmatpush1.msra.mxu0 0.0
    %1801 = vmatprep.subr.mxu0 0.0
    %1802 = vmatpush1.msra.mxu0 0.0
    %1803 = vmatprep.subr.mxu0 0.0
    %1804 = vmatpush1.msra.mxu0 0.0
    %1805 = vmatprep.subr.mxu0 0.0
    %1806 = vmatpush1.msra.mxu0 0.0
    %1807 = vmatprep.subr.mxu0 0.0
    %1808 = vmatpush1.msra.mxu0 0.0
    %1809 = vmatprep.subr.mxu0 0.0
    %1810 = vmatpush1.msra.mxu0 0.0
    %1811 = vmatprep.subr.mxu0 0.0
    %1812 = vmatpush1.msra.mxu0 0.0
    %1813 = vmatprep.subr.mxu0 0.0
    %1814 = vmatpush1.msra.mxu0 0.0
    %1815 = vmatprep.subr.mxu0 0.0
    %1816 = vmatpush1.msra.mxu0 0.0
    %1817 = vmatprep.subr.mxu0 0.0
    %1818 = vmatpush1.msra.mxu0 0.0
    %1819 = vmatprep.subr.mxu0 0.0
    %1820 = vmatpush1.msra.mxu0 0.0
    %1821 = vmatprep.subr.mxu0 0.0
    %1822 = vmatpush1.msra.mxu0 0.0
    %1823 = vmatprep.subr.mxu0 0.0
    %1824 = vmatpush1.msra.mxu0 0.0
    %1825 = vmatprep.mubr.f32.mxu0 0.0
    %1826 = vmatmul.mubr.f32.gmra.mrb[0].mxu0 %v1759
    %v1827 = vpop.f32.mrb[0].mxu0
    %v1828 = vadd.f32 0.0, %v1827
    %v1829 = vpop.f32.mrb[0].mxu0
    %1830 = vdwg.mxu0
    %v1831 = vadd.f32 %v1539, %v1828
    %v1832 = vadd.f32 %v1831, %v1183
    %1833 = vmatprep.subr.mxu0 0.0
    %1834 = vmatpush1.msra.mxu0 %v568
    %1835 = vmatprep.subr.mxu0 0.0
    %1836 = vmatpush1.msra.mxu0 %v569
    %1837 = vmatprep.subr.mxu0 0.0
    %1838 = vmatpush1.msra.mxu0 %v570
    %1839 = vmatprep.subr.mxu0 0.0
    %1840 = vmatpush1.msra.mxu0 %v571
    %1841 = vmatprep.subr.mxu0 0.0
    %1842 = vmatpush1.msra.mxu0 %v572
    %1843 = vmatprep.subr.mxu0 0.0
    %1844 = vmatpush1.msra.mxu0 %v573
    %1845 = vmatprep.subr.mxu0 0.0
    %1846 = vmatpush1.msra.mxu0 %v574
    %1847 = vmatprep.subr.mxu0 0.0
    %1848 = vmatpush1.msra.mxu0 %v575
    %1849 = vmatprep.subr.mxu0 0.0
    %1850 = vmatpush1.msra.mxu0 %v576
    %1851 = vmatprep.subr.mxu0 0.0
    %1852 = vmatpush1.msra.mxu0 %v577
    %1853 = vmatprep.subr.mxu0 0.0
    %1854 = vmatpush1.msra.mxu0 %v578
    %1855 = vmatprep.subr.mxu0 0.0
    %1856 = vmatpush1.msra.mxu0 %v579
    %1857 = vmatprep.subr.mxu0 0.0
    %1858 = vmatpush1.msra.mxu0 %v580
    %1859 = vmatprep.subr.mxu0 0.0
    %1860 = vmatpush1.msra.mxu0 %v581
    %1861 = vmatprep.subr.mxu0 0.0
    %1862 = vmatpush1.msra.mxu0 %v582
    %1863 = vmatprep.subr.mxu0 0.0
    %1864 = vmatpush1.msra.mxu0 %v583
    %1865 = vmatprep.subr.mxu0 0.0
    %1866 = vmatpush1.msra.mxu0 0.0
    %1867 = vmatprep.subr.mxu0 0.0
    %1868 = vmatpush1.msra.mxu0 0.0
    %1869 = vmatprep.subr.mxu0 0.0
    %1870 = vmatpush1.msra.mxu0 0.0
    %1871 = vmatprep.subr.mxu0 0.0
    %1872 = vmatpush1.msra.mxu0 0.0
    %1873 = vmatprep.subr.mxu0 0.0
    %1874 = vmatpush1.msra.mxu0 0.0
    %1875 = vmatprep.subr.mxu0 0.0
    %1876 = vmatpush1.msra.mxu0 0.0
    %1877 = vmatprep.subr.mxu0 0.0
    %1878 = vmatpush1.msra.mxu0 0.0
    %1879 = vmatprep.subr.mxu0 0.0
    %1880 = vmatpush1.msra.mxu0 0.0
    %1881 = vmatprep.subr.mxu0 0.0
    %1882 = vmatpush1.msra.mxu0 0.0
    %1883 = vmatprep.subr.mxu0 0.0
    %1884 = vmatpush1.msra.mxu0 0.0
    %1885 = vmatprep.subr.mxu0 0.0
    %1886 = vmatpush1.msra.mxu0 0.0
    %1887 = vmatprep.subr.mxu0 0.0
    %1888 = vmatpush1.msra.mxu0 0.0
    %1889 = vmatprep.subr.mxu0 0.0
    %1890 = vmatpush1.msra.mxu0 0.0
    %1891 = vmatprep.subr.mxu0 0.0
    %1892 = vmatpush1.msra.mxu0 0.0
    %1893 = vmatprep.subr.mxu0 0.0
    %1894 = vmatpush1.msra.mxu0 0.0
    %1895 = vmatprep.subr.mxu0 0.0
    %1896 = vmatpush1.msra.mxu0 0.0
    %1897 = vmatprep.mubr.f32.mxu0 0.0
    %1898 = vmatmul.mubr.f32.gmra.mrb[0].mxu0 %v1832
    %v1899 = vpop.f32.mrb[0].mxu0
    %v1900 = vadd.f32 %v1190, %v1899
    %v1901 = vpop.f32.mrb[0].mxu0
    %1902 = vdwg.mxu0
    %s1903 = scalar_lea.vmem [#allocation2], 8
    %1904 = vst.msk [vmem:[%s1903] sm:$0xff] %vm585, %v1900
    %v1905 = vsel %vm585, %v1362, 0
    %1907 = vmatprep.subr.mxu0 0.0
    %1908 = vmatpush1.msra.mxu0 %v522
    %1909 = vmatprep.subr.mxu0 0.0
    %1910 = vmatpush1.msra.mxu0 %v523
    %1911 = vmatprep.subr.mxu0 0.0
    %1912 = vmatpush1.msra.mxu0 %v524
    %1913 = vmatprep.subr.mxu0 0.0
    %1914 = vmatpush1.msra.mxu0 %v525
    %1915 = vmatprep.subr.mxu0 0.0
    %1916 = vmatpush1.msra.mxu0 0.0
    %1917 = vmatprep.subr.mxu0 0.0
    %1918 = vmatpush1.msra.mxu0 0.0
    %1919 = vmatprep.subr.mxu0 0.0
    %1920 = vmatpush1.msra.mxu0 0.0
    %1921 = vmatprep.subr.mxu0 0.0
    %1922 = vmatpush1.msra.mxu0 0.0
    %1923 = vmatprep.subr.mxu0 0.0
    %1924 = vmatpush1.msra.mxu0 0.0
    %1925 = vmatprep.subr.mxu0 0.0
    %1926 = vmatpush1.msra.mxu0 0.0
    %1927 = vmatprep.subr.mxu0 0.0
    %1928 = vmatpush1.msra.mxu0 0.0
    %1929 = vmatprep.subr.mxu0 0.0
    %1930 = vmatpush1.msra.mxu0 0.0
    %1931 = vmatprep.subr.mxu0 0.0
    %1932 = vmatpush1.msra.mxu0 0.0
    %1933 = vmatprep.subr.mxu0 0.0
    %1934 = vmatpush1.msra.mxu0 0.0
    %1935 = vmatprep.subr.mxu0 0.0
    %1936 = vmatpush1.msra.mxu0 0.0
    %1937 = vmatprep.subr.mxu0 0.0
    %1938 = vmatpush1.msra.mxu0 0.0
    %1939 = vmatprep.subr.mxu0 0.0
    %1940 = vmatpush1.msra.mxu0 0.0
    %1941 = vmatprep.subr.mxu0 0.0
    %1942 = vmatpush1.msra.mxu0 0.0
    %1943 = vmatprep.subr.mxu0 0.0
    %1944 = vmatpush1.msra.mxu0 0.0
    %1945 = vmatprep.subr.mxu0 0.0
    %1946 = vmatpush1.msra.mxu0 0.0
    %1947 = vmatprep.subr.mxu0 0.0
    %1948 = vmatpush1.msra.mxu0 0.0
    %1949 = vmatprep.subr.mxu0 0.0
    %1950 = vmatpush1.msra.mxu0 0.0
    %1951 = vmatprep.subr.mxu0 0.0
    %1952 = vmatpush1.msra.mxu0 0.0
    %1953 = vmatprep.subr.mxu0 0.0
    %1954 = vmatpush1.msra.mxu0 0.0
    %1955 = vmatprep.subr.mxu0 0.0
    %1956 = vmatpush1.msra.mxu0 0.0
    %1957 = vmatprep.subr.mxu0 0.0
    %1958 = vmatpush1.msra.mxu0 0.0
    %1959 = vmatprep.subr.mxu0 0.0
    %1960 = vmatpush1.msra.mxu0 0.0
    %1961 = vmatprep.subr.mxu0 0.0
    %1962 = vmatpush1.msra.mxu0 0.0
    %1963 = vmatprep.subr.mxu0 0.0
    %1964 = vmatpush1.msra.mxu0 0.0
    %1965 = vmatprep.subr.mxu0 0.0
    %1966 = vmatpush1.msra.mxu0 0.0
    %1967 = vmatprep.subr.mxu0 0.0
    %1968 = vmatpush1.msra.mxu0 0.0
    %1969 = vmatprep.subr.mxu0 0.0
    %1970 = vmatpush1.msra.mxu0 0.0
    %1971 = vmatprep.mubr.f32.mxu0 0.0
    %1972 = vmatmul.mubr.f32.gmra.mrb[0].mxu0 %v1905
    %v1973 = vpop.f32.mrb[0].mxu0
    %v1974 = vadd.f32 0.0, %v1973
    %v1975 = vpop.f32.mrb[0].mxu0
    %1976 = vdwg.mxu0
    %v1977 = vadd.f32 %v290, %v1974
    %v1978 = vxor.u32 %v1977, 2147483648
    %v1979 = vmul.f32 %v1978, 1.442695
    %v1980 = vpow.pop %v1979
    %v1981 = vadd.f32 %v1980, 1.0
    %v1982 = vrcp.pop %v1981
    %v1983 = vmul.f32 1.0, %v1982
    %v1984 = vtanh.pop %v1977
    %v1985 = vmul.f32 %v1983, %v1353
    %1987 = vrot.lane.b32.xlu0 %v1984, 64
    %v1988 = vpop.permute.xlu0 %1987
    %v1990 = vmul.f32 %v1983, %v1988
    %1992 = vrot.lane.b32.xlu0 %v1990, 32
    %v1993 = vpop.permute.xlu0 %1992
    %v1995 = vadd.f32 %v1985, %v1993
    %v1996 = vtanh.pop %v1995
    %1998 = vrot.lane.b32.xlu0 %v1996, 64
    %v1999 = vpop.permute.xlu0 %1998
    %v2001 = vmul.f32 %v1983, %v1999
    %2003 = vrot.lane.b32.xlu0 %v2001, 32
    %v2004 = vpop.permute.xlu0 %2003
    %2006 = vrot.lane.b32.xlu0 %v1464, 64
    %v2007 = vpop.permute.xlu0 %2006
    %v2009 = vsel %vm585, %v2004, %v2007
    %v2011 = vsel %vm89, %v2009, 0
    %2013 = vmatprep.subr.mxu0 0.0
    %2014 = vmatpush1.msra.mxu0 %v526
    %2015 = vmatprep.subr.mxu0 0.0
    %2016 = vmatpush1.msra.mxu0 %v527
    %2017 = vmatprep.subr.mxu0 0.0
    %2018 = vmatpush1.msra.mxu0 %v528
    %2019 = vmatprep.subr.mxu0 0.0
    %2020 = vmatpush1.msra.mxu0 %v529
    %2021 = vmatprep.subr.mxu0 0.0
    %2022 = vmatpush1.msra.mxu0 %v530
    %2023 = vmatprep.subr.mxu0 0.0
    %2024 = vmatpush1.msra.mxu0 %v531
    %2025 = vmatprep.subr.mxu0 0.0
    %2026 = vmatpush1.msra.mxu0 %v532
    %2027 = vmatprep.subr.mxu0 0.0
    %2028 = vmatpush1.msra.mxu0 %v533
    %2029 = vmatprep.subr.mxu0 0.0
    %2030 = vmatpush1.msra.mxu0 0.0
    %2031 = vmatprep.subr.mxu0 0.0
    %2032 = vmatpush1.msra.mxu0 0.0
    %2033 = vmatprep.subr.mxu0 0.0
    %2034 = vmatpush1.msra.mxu0 0.0
    %2035 = vmatprep.subr.mxu0 0.0
    %2036 = vmatpush1.msra.mxu0 0.0
    %2037 = vmatprep.subr.mxu0 0.0
    %2038 = vmatpush1.msra.mxu0 0.0
    %2039 = vmatprep.subr.mxu0 0.0
    %2040 = vmatpush1.msra.mxu0 0.0
    %2041 = vmatprep.subr.mxu0 0.0
    %2042 = vmatpush1.msra.mxu0 0.0
    %2043 = vmatprep.subr.mxu0 0.0
    %2044 = vmatpush1.msra.mxu0 0.0
    %2045 = vmatprep.subr.mxu0 0.0
    %2046 = vmatpush1.msra.mxu0 0.0
    %2047 = vmatprep.subr.mxu0 0.0
    %2048 = vmatpush1.msra.mxu0 0.0
    %2049 = vmatprep.subr.mxu0 0.0
    %2050 = vmatpush1.msra.mxu0 0.0
    %2051 = vmatprep.subr.mxu0 0.0
    %2052 = vmatpush1.msra.mxu0 0.0
    %2053 = vmatprep.subr.mxu0 0.0
    %2054 = vmatpush1.msra.mxu0 0.0
    %2055 = vmatprep.subr.mxu0 0.0
    %2056 = vmatpush1.msra.mxu0 0.0
    %2057 = vmatprep.subr.mxu0 0.0
    %2058 = vmatpush1.msra.mxu0 0.0
    %2059 = vmatprep.subr.mxu0 0.0
    %2060 = vmatpush1.msra.mxu0 0.0
    %2061 = vmatprep.subr.mxu0 0.0
    %2062 = vmatpush1.msra.mxu0 0.0
    %2063 = vmatprep.subr.mxu0 0.0
    %2064 = vmatpush1.msra.mxu0 0.0
    %2065 = vmatprep.subr.mxu0 0.0
    %2066 = vmatpush1.msra.mxu0 0.0
    %2067 = vmatprep.subr.mxu0 0.0
    %2068 = vmatpush1.msra.mxu0 0.0
    %2069 = vmatprep.subr.mxu0 0.0
    %2070 = vmatpush1.msra.mxu0 0.0
    %2071 = vmatprep.subr.mxu0 0.0
    %2072 = vmatpush1.msra.mxu0 0.0
    %2073 = vmatprep.subr.mxu0 0.0
    %2074 = vmatpush1.msra.mxu0 0.0
    %2075 = vmatprep.subr.mxu0 0.0
    %2076 = vmatpush1.msra.mxu0 0.0
    %2077 = vmatprep.mubr.f32.mxu0 0.0
    %2078 = vmatmul.mubr.f32.gmra.mrb[0].mxu0 %v2011
    %v2079 = vpop.f32.mrb[0].mxu0
    %v2080 = vadd.f32 %v701, %v2079
    %v2081 = vpop.f32.mrb[0].mxu0
    %2082 = vdwg.mxu0
    %v2083 = vxor.u32 %v2080, 2147483648
    %v2084 = vmul.f32 %v2083, 1.442695
    %v2085 = vpow.pop %v2084
    %v2086 = vadd.f32 %v2085, 1.0
    %v2087 = vrcp.pop %v2086
    %v2088 = vmul.f32 1.0, %v2087
    %v2089 = vtanh.pop %v2080
    %v2090 = vmul.f32 %v2088, %v1458
    %2092 = vrot.lane.b32.xlu0 %v2089, 64
    %v2093 = vpop.permute.xlu0 %2092
    %v2095 = vmul.f32 %v2088, %v2093
    %2097 = vrot.lane.b32.xlu0 %v2095, 32
    %v2098 = vpop.permute.xlu0 %2097
    %v2100 = vadd.f32 %v2090, %v2098
    %v2101 = vtanh.pop %v2100
    %2103 = vrot.lane.b32.xlu0 %v2101, 64
    %v2104 = vpop.permute.xlu0 %2103
    %v2106 = vmul.f32 %v2088, %v2104
    %2108 = vrot.lane.b32.xlu0 %v2106, 32
    %v2109 = vpop.permute.xlu0 %2108
    %v2110 = vsel %vm585, %v2109, 0
    %2112 = vmatprep.subr.mxu0 %v536
    %2113 = vmatpush1.msra.mxu0 %v535
    %2114 = vmatprep.subr.mxu0 %v538
    %2115 = vmatpush1.msra.mxu0 %v537
    %2116 = vmatprep.subr.mxu0 %v540
    %2117 = vmatpush1.msra.mxu0 %v539
    %2118 = vmatprep.subr.mxu0 %v542
    %2119 = vmatpush1.msra.mxu0 %v541
    %2120 = vmatprep.subr.mxu0 0.0
    %2121 = vmatpush1.msra.mxu0 0.0
    %2122 = vmatprep.subr.mxu0 0.0
    %2123 = vmatpush1.msra.mxu0 0.0
    %2124 = vmatprep.subr.mxu0 0.0
    %2125 = vmatpush1.msra.mxu0 0.0
    %2126 = vmatprep.subr.mxu0 0.0
    %2127 = vmatpush1.msra.mxu0 0.0
    %2128 = vmatprep.subr.mxu0 0.0
    %2129 = vmatpush1.msra.mxu0 0.0
    %2130 = vmatprep.subr.mxu0 0.0
    %2131 = vmatpush1.msra.mxu0 0.0
    %2132 = vmatprep.subr.mxu0 0.0
    %2133 = vmatpush1.msra.mxu0 0.0
    %2134 = vmatprep.subr.mxu0 0.0
    %2135 = vmatpush1.msra.mxu0 0.0
    %2136 = vmatprep.subr.mxu0 0.0
    %2137 = vmatpush1.msra.mxu0 0.0
    %2138 = vmatprep.subr.mxu0 0.0
    %2139 = vmatpush1.msra.mxu0 0.0
    %2140 = vmatprep.subr.mxu0 0.0
    %2141 = vmatpush1.msra.mxu0 0.0
    %2142 = vmatprep.subr.mxu0 0.0
    %2143 = vmatpush1.msra.mxu0 0.0
    %2144 = vmatprep.subr.mxu0 0.0
    %2145 = vmatpush1.msra.mxu0 0.0
    %2146 = vmatprep.subr.mxu0 0.0
    %2147 = vmatpush1.msra.mxu0 0.0
    %2148 = vmatprep.subr.mxu0 0.0
    %2149 = vmatpush1.msra.mxu0 0.0
    %2150 = vmatprep.subr.mxu0 0.0
    %2151 = vmatpush1.msra.mxu0 0.0
    %2152 = vmatprep.subr.mxu0 0.0
    %2153 = vmatpush1.msra.mxu0 0.0
    %2154 = vmatprep.subr.mxu0 0.0
    %2155 = vmatpush1.msra.mxu0 0.0
    %2156 = vmatprep.subr.mxu0 0.0
    %2157 = vmatpush1.msra.mxu0 0.0
    %2158 = vmatprep.subr.mxu0 0.0
    %2159 = vmatpush1.msra.mxu0 0.0
    %2160 = vmatprep.subr.mxu0 0.0
    %2161 = vmatpush1.msra.mxu0 0.0
    %2162 = vmatprep.subr.mxu0 0.0
    %2163 = vmatpush1.msra.mxu0 0.0
    %2164 = vmatprep.subr.mxu0 0.0
    %2165 = vmatpush1.msra.mxu0 0.0
    %2166 = vmatprep.subr.mxu0 0.0
    %2167 = vmatpush1.msra.mxu0 0.0
    %2168 = vmatprep.subr.mxu0 0.0
    %2169 = vmatpush1.msra.mxu0 0.0
    %2170 = vmatprep.subr.mxu0 0.0
    %2171 = vmatpush1.msra.mxu0 0.0
    %2172 = vmatprep.subr.mxu0 0.0
    %2173 = vmatpush1.msra.mxu0 0.0
    %2174 = vmatprep.subr.mxu0 0.0
    %2175 = vmatpush1.msra.mxu0 0.0
    %2176 = vmatprep.mubr.f32.mxu0 0.0
    %2177 = vmatmul.mubr.f32.gmra.mrb[0].mxu0 %v2110
    %v2178 = vpop.f32.mrb[0].mxu0
    %v2179 = vadd.f32 0.0, %v2178
    %v2180 = vpop.f32.mrb[0].mxu0
    %v2181 = vadd.f32 0.0, %v2180
    %2182 = vdwg.mxu0
    %v2183 = vadd.f32 %v510, %v2179
    %v2184 = vtanh.pop %v2183
    %2185 = vmatprep.subr.mxu0 0.0
    %2186 = vmatpush1.msra.mxu0 %v543
    %2187 = vmatprep.subr.mxu0 0.0
    %2188 = vmatpush1.msra.mxu0 %v544
    %2189 = vmatprep.subr.mxu0 0.0
    %2190 = vmatpush1.msra.mxu0 %v545
    %2191 = vmatprep.subr.mxu0 0.0
    %2192 = vmatpush1.msra.mxu0 %v546
    %2193 = vmatprep.subr.mxu0 0.0
    %2194 = vmatpush1.msra.mxu0 %v547
    %2195 = vmatprep.subr.mxu0 0.0
    %2196 = vmatpush1.msra.mxu0 %v548
    %2197 = vmatprep.subr.mxu0 0.0
    %2198 = vmatpush1.msra.mxu0 %v549
    %2199 = vmatprep.subr.mxu0 0.0
    %2200 = vmatpush1.msra.mxu0 %v550
    %2201 = vmatprep.subr.mxu0 0.0
    %2202 = vmatpush1.msra.mxu0 %v551
    %2203 = vmatprep.subr.mxu0 0.0
    %2204 = vmatpush1.msra.mxu0 %v552
    %2205 = vmatprep.subr.mxu0 0.0
    %2206 = vmatpush1.msra.mxu0 %v553
    %2207 = vmatprep.subr.mxu0 0.0
    %2208 = vmatpush1.msra.mxu0 %v554
    %2209 = vmatprep.subr.mxu0 0.0
    %2210 = vmatpush1.msra.mxu0 %v555
    %2211 = vmatprep.subr.mxu0 0.0
    %2212 = vmatpush1.msra.mxu0 %v556
    %2213 = vmatprep.subr.mxu0 0.0
    %2214 = vmatpush1.msra.mxu0 %v557
    %2215 = vmatprep.subr.mxu0 0.0
    %2216 = vmatpush1.msra.mxu0 %v558
    %2217 = vmatprep.subr.mxu0 0.0
    %2218 = vmatpush1.msra.mxu0 0.0
    %2219 = vmatprep.subr.mxu0 0.0
    %2220 = vmatpush1.msra.mxu0 0.0
    %2221 = vmatprep.subr.mxu0 0.0
    %2222 = vmatpush1.msra.mxu0 0.0
    %2223 = vmatprep.subr.mxu0 0.0
    %2224 = vmatpush1.msra.mxu0 0.0
    %2225 = vmatprep.subr.mxu0 0.0
    %2226 = vmatpush1.msra.mxu0 0.0
    %2227 = vmatprep.subr.mxu0 0.0
    %2228 = vmatpush1.msra.mxu0 0.0
    %2229 = vmatprep.subr.mxu0 0.0
    %2230 = vmatpush1.msra.mxu0 0.0
    %2231 = vmatprep.subr.mxu0 0.0
    %2232 = vmatpush1.msra.mxu0 0.0
    %2233 = vmatprep.subr.mxu0 0.0
    %2234 = vmatpush1.msra.mxu0 0.0
    %2235 = vmatprep.subr.mxu0 0.0
    %2236 = vmatpush1.msra.mxu0 0.0
    %2237 = vmatprep.subr.mxu0 0.0
    %2238 = vmatpush1.msra.mxu0 0.0
    %2239 = vmatprep.subr.mxu0 0.0
    %2240 = vmatpush1.msra.mxu0 0.0
    %2241 = vmatprep.subr.mxu0 0.0
    %2242 = vmatpush1.msra.mxu0 0.0
    %2243 = vmatprep.subr.mxu0 0.0
    %2244 = vmatpush1.msra.mxu0 0.0
    %2245 = vmatprep.subr.mxu0 0.0
    %2246 = vmatpush1.msra.mxu0 0.0
    %2247 = vmatprep.subr.mxu0 0.0
    %2248 = vmatpush1.msra.mxu0 0.0
    %2249 = vmatprep.mubr.f32.mxu0 0.0
    %2250 = vmatmul.mubr.f32.gmra.mrb[0].mxu0 %v2184
    %v2251 = vpop.f32.mrb[0].mxu0
    %v2252 = vadd.f32 %v521, %v2251
    %v2253 = vpop.f32.mrb[0].mxu0
    %2254 = vdwg.mxu0
    %v2255 = vsel %vm952, %v2252, -inf
    %2256 = vmax.xlane.f32.xlu0 %v2255
    %v2257 = vpop.xlane.xlu0 %2256
    %v2258 = vsub.f32 %v2252, %v2257
    %v2259 = vmul.f32 %v2258, 1.442695
    %v2260 = vpow.pop %v2259
    %v2261 = vsel %vm952, %v2260, 0.0
    %2262 = vadd.xlane.f32.xlu0 %v2261
    %v2263 = vpop.xlane.xlu0 %2262
    %v2264 = vrcp.pop %v2263
    %v2265 = vmul.f32 %v2260, %v2264
    %v2266 = vlaneseq
    %v2267 = vshrl.u32 %v2266, 7
    %v2268 = vsub.s32 0, %v2267
    %v2269 = vrot.slane %v2265, %v2268
    %2271 = vbcast.lane.b32.xlu0 %v2269, 256
    %v2272 = vpop.permute.xlu0 %2271
    %v2273 = vlaneseq
    %v2274 = vshrl.u32 %v2273, 7
    %v2275 = vsub.s32 1, %v2274
    %v2276 = vrot.slane %v2265, %v2275
    %2278 = vbcast.lane.b32.xlu0 %v2276, 256
    %v2279 = vpop.permute.xlu0 %2278
    %v2280 = vlaneseq
    %v2281 = vshrl.u32 %v2280, 7
    %v2282 = vsub.s32 2, %v2281
    %v2283 = vrot.slane %v2265, %v2282
    %2285 = vbcast.lane.b32.xlu0 %v2283, 256
    %v2286 = vpop.permute.xlu0 %2285
    %v2287 = vlaneseq
    %v2288 = vshrl.u32 %v2287, 7
    %v2289 = vsub.s32 3, %v2288
    %v2290 = vrot.slane %v2265, %v2289
    %2292 = vbcast.lane.b32.xlu0 %v2290, 256
    %v2293 = vpop.permute.xlu0 %2292
    %v2294 = vlaneseq
    %v2295 = vshrl.u32 %v2294, 7
    %v2296 = vsub.s32 4, %v2295
    %v2297 = vrot.slane %v2265, %v2296
    %2299 = vbcast.lane.b32.xlu0 %v2297, 256
    %v2300 = vpop.permute.xlu0 %2299
    %v2301 = vlaneseq
    %v2302 = vshrl.u32 %v2301, 7
    %v2303 = vsub.s32 5, %v2302
    %v2304 = vrot.slane %v2265, %v2303
    %2306 = vbcast.lane.b32.xlu0 %v2304, 256
    %v2307 = vpop.permute.xlu0 %2306
    %v2308 = vlaneseq
    %v2309 = vshrl.u32 %v2308, 7
    %v2310 = vsub.s32 6, %v2309
    %v2311 = vrot.slane %v2265, %v2310
    %2313 = vbcast.lane.b32.xlu0 %v2311, 256
    %v2314 = vpop.permute.xlu0 %2313
    %v2315 = vlaneseq
    %v2316 = vshrl.u32 %v2315, 7
    %v2317 = vsub.s32 7, %v2316
    %v2318 = vrot.slane %v2265, %v2317
    %2320 = vbcast.lane.b32.xlu0 %v2318, 256
    %v2321 = vpop.permute.xlu0 %2320
    %v2322 = vmul.f32 %v2272, %v513
    %v2323 = vmul.f32 %v2279, %v514
    %v2324 = vmul.f32 %v2286, %v515
    %v2325 = vmul.f32 %v2293, %v516
    %v2326 = vmul.f32 %v2300, %v517
    %v2327 = vmul.f32 %v2307, %v518
    %v2328 = vmul.f32 %v2314, %v519
    %v2329 = vmul.f32 %v2321, %v520
    %v2330 = vsel %vm89, %v2322, 0.0
    %v2331 = vrot.slane %v2330, 4
    %v2332 = vadd.f32 %v2330, %v2331
    %v2333 = vrot.slane %v2332, 2
    %v2334 = vadd.f32 %v2332, %v2333
    %v2335 = vrot.slane %v2334, 1
    %v2336 = vadd.f32 %v2334, %v2335
    %v2337 = vsel %vm89, %v2323, 0.0
    %v2338 = vrot.slane %v2337, 4
    %v2339 = vadd.f32 %v2337, %v2338
    %v2340 = vrot.slane %v2339, 2
    %v2341 = vadd.f32 %v2339, %v2340
    %v2342 = vrot.slane %v2341, 1
    %v2343 = vadd.f32 %v2341, %v2342
    %v2344 = vsel %vm89, %v2324, 0.0
    %v2345 = vrot.slane %v2344, 4
    %v2346 = vadd.f32 %v2344, %v2345
    %v2347 = vrot.slane %v2346, 2
    %v2348 = vadd.f32 %v2346, %v2347
    %v2349 = vrot.slane %v2348, 1
    %v2350 = vadd.f32 %v2348, %v2349
    %v2351 = vsel %vm89, %v2325, 0.0
    %v2352 = vrot.slane %v2351, 4
    %v2353 = vadd.f32 %v2351, %v2352
    %v2354 = vrot.slane %v2353, 2
    %v2355 = vadd.f32 %v2353, %v2354
    %v2356 = vrot.slane %v2355, 1
    %v2357 = vadd.f32 %v2355, %v2356
    %v2358 = vsel %vm89, %v2326, 0.0
    %v2359 = vrot.slane %v2358, 4
    %v2360 = vadd.f32 %v2358, %v2359
    %v2361 = vrot.slane %v2360, 2
    %v2362 = vadd.f32 %v2360, %v2361
    %v2363 = vrot.slane %v2362, 1
    %v2364 = vadd.f32 %v2362, %v2363
    %v2365 = vsel %vm89, %v2327, 0.0
    %v2366 = vrot.slane %v2365, 4
    %v2367 = vadd.f32 %v2365, %v2366
    %v2368 = vrot.slane %v2367, 2
    %v2369 = vadd.f32 %v2367, %v2368
    %v2370 = vrot.slane %v2369, 1
    %v2371 = vadd.f32 %v2369, %v2370
    %v2372 = vsel %vm89, %v2328, 0.0
    %v2373 = vrot.slane %v2372, 4
    %v2374 = vadd.f32 %v2372, %v2373
    %v2375 = vrot.slane %v2374, 2
    %v2376 = vadd.f32 %v2374, %v2375
    %v2377 = vrot.slane %v2376, 1
    %v2378 = vadd.f32 %v2376, %v2377
    %v2379 = vsel %vm89, %v2329, 0.0
    %v2380 = vrot.slane %v2379, 4
    %v2381 = vadd.f32 %v2379, %v2380
    %v2382 = vrot.slane %v2381, 2
    %v2383 = vadd.f32 %v2381, %v2382
    %v2384 = vrot.slane %v2383, 1
    %v2385 = vadd.f32 %v2383, %v2384
    %v2394 = vsel %vm1092, %v2343, %v2336
    %v2395 = vsel %vm1094, %v2350, %v2394
    %v2396 = vsel %vm1096, %v2357, %v2395
    %v2397 = vsel %vm1098, %v2364, %v2396
    %v2398 = vsel %vm1100, %v2371, %v2397
    %v2399 = vsel %vm1102, %v2378, %v2398
    %v2400 = vsel %vm1104, %v2385, %v2399
    %v2401 = vsel %vm89, %v2400, 0
    %2403 = vmatprep.subr.mxu0 0.0
    %2404 = vmatpush1.msra.mxu0 %v559
    %2405 = vmatprep.subr.mxu0 0.0
    %2406 = vmatpush1.msra.mxu0 %v560
    %2407 = vmatprep.subr.mxu0 0.0
    %2408 = vmatpush1.msra.mxu0 %v561
    %2409 = vmatprep.subr.mxu0 0.0
    %2410 = vmatpush1.msra.mxu0 %v562
    %2411 = vmatprep.subr.mxu0 0.0
    %2412 = vmatpush1.msra.mxu0 %v563
    %2413 = vmatprep.subr.mxu0 0.0
    %2414 = vmatpush1.msra.mxu0 %v564
    %2415 = vmatprep.subr.mxu0 0.0
    %2416 = vmatpush1.msra.mxu0 %v565
    %2417 = vmatprep.subr.mxu0 0.0
    %2418 = vmatpush1.msra.mxu0 %v566
    %2419 = vmatprep.subr.mxu0 0.0
    %2420 = vmatpush1.msra.mxu0 0.0
    %2421 = vmatprep.subr.mxu0 0.0
    %2422 = vmatpush1.msra.mxu0 0.0
    %2423 = vmatprep.subr.mxu0 0.0
    %2424 = vmatpush1.msra.mxu0 0.0
    %2425 = vmatprep.subr.mxu0 0.0
    %2426 = vmatpush1.msra.mxu0 0.0
    %2427 = vmatprep.subr.mxu0 0.0
    %2428 = vmatpush1.msra.mxu0 0.0
    %2429 = vmatprep.subr.mxu0 0.0
    %2430 = vmatpush1.msra.mxu0 0.0
    %2431 = vmatprep.subr.mxu0 0.0
    %2432 = vmatpush1.msra.mxu0 0.0
    %2433 = vmatprep.subr.mxu0 0.0
    %2434 = vmatpush1.msra.mxu0 0.0
    %2435 = vmatprep.subr.mxu0 0.0
    %2436 = vmatpush1.msra.mxu0 0.0
    %2437 = vmatprep.subr.mxu0 0.0
    %2438 = vmatpush1.msra.mxu0 0.0
    %2439 = vmatprep.subr.mxu0 0.0
    %2440 = vmatpush1.msra.mxu0 0.0
    %2441 = vmatprep.subr.mxu0 0.0
    %2442 = vmatpush1.msra.mxu0 0.0
    %2443 = vmatprep.subr.mxu0 0.0
    %2444 = vmatpush1.msra.mxu0 0.0
    %2445 = vmatprep.subr.mxu0 0.0
    %2446 = vmatpush1.msra.mxu0 0.0
    %2447 = vmatprep.subr.mxu0 0.0
    %2448 = vmatpush1.msra.mxu0 0.0
    %2449 = vmatprep.subr.mxu0 0.0
    %2450 = vmatpush1.msra.mxu0 0.0
    %2451 = vmatprep.subr.mxu0 0.0
    %2452 = vmatpush1.msra.mxu0 0.0
    %2453 = vmatprep.subr.mxu0 0.0
    %2454 = vmatpush1.msra.mxu0 0.0
    %2455 = vmatprep.subr.mxu0 0.0
    %2456 = vmatpush1.msra.mxu0 0.0
    %2457 = vmatprep.subr.mxu0 0.0
    %2458 = vmatpush1.msra.mxu0 0.0
    %2459 = vmatprep.subr.mxu0 0.0
    %2460 = vmatpush1.msra.mxu0 0.0
    %2461 = vmatprep.subr.mxu0 0.0
    %2462 = vmatpush1.msra.mxu0 0.0
    %2463 = vmatprep.subr.mxu0 0.0
    %2464 = vmatpush1.msra.mxu0 0.0
    %2465 = vmatprep.subr.mxu0 0.0
    %2466 = vmatpush1.msra.mxu0 0.0
    %2467 = vmatprep.mubr.f32.mxu0 0.0
    %2468 = vmatmul.mubr.f32.gmra.mrb[0].mxu0 %v2401
    %v2469 = vpop.f32.mrb[0].mxu0
    %v2470 = vadd.f32 0.0, %v2469
    %v2471 = vpop.f32.mrb[0].mxu0
    %2472 = vdwg.mxu0
    %v2473 = vadd.f32 %v2181, %v2470
    %v2474 = vadd.f32 %v2473, %v1183
    %2475 = vmatprep.subr.mxu0 0.0
    %2476 = vmatpush1.msra.mxu0 %v568
    %2477 = vmatprep.subr.mxu0 0.0
    %2478 = vmatpush1.msra.mxu0 %v569
    %2479 = vmatprep.subr.mxu0 0.0
    %2480 = vmatpush1.msra.mxu0 %v570
    %2481 = vmatprep.subr.mxu0 0.0
    %2482 = vmatpush1.msra.mxu0 %v571
    %2483 = vmatprep.subr.mxu0 0.0
    %2484 = vmatpush1.msra.mxu0 %v572
    %2485 = vmatprep.subr.mxu0 0.0
    %2486 = vmatpush1.msra.mxu0 %v573
    %2487 = vmatprep.subr.mxu0 0.0
    %2488 = vmatpush1.msra.mxu0 %v574
    %2489 = vmatprep.subr.mxu0 0.0
    %2490 = vmatpush1.msra.mxu0 %v575
    %2491 = vmatprep.subr.mxu0 0.0
    %2492 = vmatpush1.msra.mxu0 %v576
    %2493 = vmatprep.subr.mxu0 0.0
    %2494 = vmatpush1.msra.mxu0 %v577
    %2495 = vmatprep.subr.mxu0 0.0
    %2496 = vmatpush1.msra.mxu0 %v578
    %2497 = vmatprep.subr.mxu0 0.0
    %2498 = vmatpush1.msra.mxu0 %v579
    %2499 = vmatprep.subr.mxu0 0.0
    %2500 = vmatpush1.msra.mxu0 %v580
    %2501 = vmatprep.subr.mxu0 0.0
    %2502 = vmatpush1.msra.mxu0 %v581
    %2503 = vmatprep.subr.mxu0 0.0
    %2504 = vmatpush1.msra.mxu0 %v582
    %2505 = vmatprep.subr.mxu0 0.0
    %2506 = vmatpush1.msra.mxu0 %v583
    %2507 = vmatprep.subr.mxu0 0.0
    %2508 = vmatpush1.msra.mxu0 0.0
    %2509 = vmatprep.subr.mxu0 0.0
    %2510 = vmatpush1.msra.mxu0 0.0
    %2511 = vmatprep.subr.mxu0 0.0
    %2512 = vmatpush1.msra.mxu0 0.0
    %2513 = vmatprep.subr.mxu0 0.0
    %2514 = vmatpush1.msra.mxu0 0.0
    %2515 = vmatprep.subr.mxu0 0.0
    %2516 = vmatpush1.msra.mxu0 0.0
    %2517 = vmatprep.subr.mxu0 0.0
    %2518 = vmatpush1.msra.mxu0 0.0
    %2519 = vmatprep.subr.mxu0 0.0
    %2520 = vmatpush1.msra.mxu0 0.0
    %2521 = vmatprep.subr.mxu0 0.0
    %2522 = vmatpush1.msra.mxu0 0.0
    %2523 = vmatprep.subr.mxu0 0.0
    %2524 = vmatpush1.msra.mxu0 0.0
    %2525 = vmatprep.subr.mxu0 0.0
    %2526 = vmatpush1.msra.mxu0 0.0
    %2527 = vmatprep.subr.mxu0 0.0
    %2528 = vmatpush1.msra.mxu0 0.0
    %2529 = vmatprep.subr.mxu0 0.0
    %2530 = vmatpush1.msra.mxu0 0.0
    %2531 = vmatprep.subr.mxu0 0.0
    %2532 = vmatpush1.msra.mxu0 0.0
    %2533 = vmatprep.subr.mxu0 0.0
    %2534 = vmatpush1.msra.mxu0 0.0
    %2535 = vmatprep.subr.mxu0 0.0
    %2536 = vmatpush1.msra.mxu0 0.0
    %2537 = vmatprep.subr.mxu0 0.0
    %2538 = vmatpush1.msra.mxu0 0.0
    %2539 = vmatprep.mubr.f32.mxu0 0.0
    %2540 = vmatmul.mubr.f32.gmra.mrb[0].mxu0 %v2474
    %v2541 = vpop.f32.mrb[0].mxu0
    %v2542 = vadd.f32 %v1190, %v2541
    %v2543 = vpop.f32.mrb[0].mxu0
    %2544 = vdwg.mxu0
    %s2545 = scalar_lea.vmem [#allocation2], 16
    %2546 = vst.msk [vmem:[%s2545] sm:$0xff] %vm585, %v2542
    %v2547 = vsel %vm585, %v2004, 0
    %2549 = vmatprep.subr.mxu0 0.0
    %2550 = vmatpush1.msra.mxu0 %v522
    %2551 = vmatprep.subr.mxu0 0.0
    %2552 = vmatpush1.msra.mxu0 %v523
    %2553 = vmatprep.subr.mxu0 0.0
    %2554 = vmatpush1.msra.mxu0 %v524
    %2555 = vmatprep.subr.mxu0 0.0
    %2556 = vmatpush1.msra.mxu0 %v525
    %2557 = vmatprep.subr.mxu0 0.0
    %2558 = vmatpush1.msra.mxu0 0.0
    %2559 = vmatprep.subr.mxu0 0.0
    %2560 = vmatpush1.msra.mxu0 0.0
    %2561 = vmatprep.subr.mxu0 0.0
    %2562 = vmatpush1.msra.mxu0 0.0
    %2563 = vmatprep.subr.mxu0 0.0
    %2564 = vmatpush1.msra.mxu0 0.0
    %2565 = vmatprep.subr.mxu0 0.0
    %2566 = vmatpush1.msra.mxu0 0.0
    %2567 = vmatprep.subr.mxu0 0.0
    %2568 = vmatpush1.msra.mxu0 0.0
    %2569 = vmatprep.subr.mxu0 0.0
    %2570 = vmatpush1.msra.mxu0 0.0
    %2571 = vmatprep.subr.mxu0 0.0
    %2572 = vmatpush1.msra.mxu0 0.0
    %2573 = vmatprep.subr.mxu0 0.0
    %2574 = vmatpush1.msra.mxu0 0.0
    %2575 = vmatprep.subr.mxu0 0.0
    %2576 = vmatpush1.msra.mxu0 0.0
    %2577 = vmatprep.subr.mxu0 0.0
    %2578 = vmatpush1.msra.mxu0 0.0
    %2579 = vmatprep.subr.mxu0 0.0
    %2580 = vmatpush1.msra.mxu0 0.0
    %2581 = vmatprep.subr.mxu0 0.0
    %2582 = vmatpush1.msra.mxu0 0.0
    %2583 = vmatprep.subr.mxu0 0.0
    %2584 = vmatpush1.msra.mxu0 0.0
    %2585 = vmatprep.subr.mxu0 0.0
    %2586 = vmatpush1.msra.mxu0 0.0
    %2587 = vmatprep.subr.mxu0 0.0
    %2588 = vmatpush1.msra.mxu0 0.0
    %2589 = vmatprep.subr.mxu0 0.0
    %2590 = vmatpush1.msra.mxu0 0.0
    %2591 = vmatprep.subr.mxu0 0.0
    %2592 = vmatpush1.msra.mxu0 0.0
    %2593 = vmatprep.subr.mxu0 0.0
    %2594 = vmatpush1.msra.mxu0 0.0
    %2595 = vmatprep.subr.mxu0 0.0
    %2596 = vmatpush1.msra.mxu0 0.0
    %2597 = vmatprep.subr.mxu0 0.0
    %2598 = vmatpush1.msra.mxu0 0.0
    %2599 = vmatprep.subr.mxu0 0.0
    %2600 = vmatpush1.msra.mxu0 0.0
    %2601 = vmatprep.subr.mxu0 0.0
    %2602 = vmatpush1.msra.mxu0 0.0
    %2603 = vmatprep.subr.mxu0 0.0
    %2604 = vmatpush1.msra.mxu0 0.0
    %2605 = vmatprep.subr.mxu0 0.0
    %2606 = vmatpush1.msra.mxu0 0.0
    %2607 = vmatprep.subr.mxu0 0.0
    %2608 = vmatpush1.msra.mxu0 0.0
    %2609 = vmatprep.subr.mxu0 0.0
    %2610 = vmatpush1.msra.mxu0 0.0
    %2611 = vmatprep.subr.mxu0 0.0
    %2612 = vmatpush1.msra.mxu0 0.0
    %2613 = vmatprep.mubr.f32.mxu0 0.0
    %2614 = vmatmul.mubr.f32.gmra.mrb[0].mxu0 %v2547
    %v2615 = vpop.f32.mrb[0].mxu0
    %v2616 = vadd.f32 0.0, %v2615
    %v2617 = vpop.f32.mrb[0].mxu0
    %2618 = vdwg.mxu0
    %v2619 = vadd.f32 %v295, %v2616
    %v2620 = vxor.u32 %v2619, 2147483648
    %v2621 = vmul.f32 %v2620, 1.442695
    %v2622 = vpow.pop %v2621
    %v2623 = vadd.f32 %v2622, 1.0
    %v2624 = vrcp.pop %v2623
    %v2625 = vmul.f32 1.0, %v2624
    %v2626 = vtanh.pop %v2619
    %v2627 = vmul.f32 %v2625, %v1995
    %2629 = vrot.lane.b32.xlu0 %v2626, 64
    %v2630 = vpop.permute.xlu0 %2629
    %v2632 = vmul.f32 %v2625, %v2630
    %2634 = vrot.lane.b32.xlu0 %v2632, 32
    %v2635 = vpop.permute.xlu0 %2634
    %v2637 = vadd.f32 %v2627, %v2635
    %v2638 = vtanh.pop %v2637
    %2640 = vrot.lane.b32.xlu0 %v2638, 64
    %v2641 = vpop.permute.xlu0 %2640
    %v2643 = vmul.f32 %v2625, %v2641
    %2645 = vrot.lane.b32.xlu0 %v2643, 32
    %v2646 = vpop.permute.xlu0 %2645
    %2648 = vrot.lane.b32.xlu0 %v2106, 64
    %v2649 = vpop.permute.xlu0 %2648
    %v2651 = vsel %vm585, %v2646, %v2649
    %v2653 = vsel %vm89, %v2651, 0
    %2655 = vmatprep.subr.mxu0 0.0
    %2656 = vmatpush1.msra.mxu0 %v526
    %2657 = vmatprep.subr.mxu0 0.0
    %2658 = vmatpush1.msra.mxu0 %v527
    %2659 = vmatprep.subr.mxu0 0.0
    %2660 = vmatpush1.msra.mxu0 %v528
    %2661 = vmatprep.subr.mxu0 0.0
    %2662 = vmatpush1.msra.mxu0 %v529
    %2663 = vmatprep.subr.mxu0 0.0
    %2664 = vmatpush1.msra.mxu0 %v530
    %2665 = vmatprep.subr.mxu0 0.0
    %2666 = vmatpush1.msra.mxu0 %v531
    %2667 = vmatprep.subr.mxu0 0.0
    %2668 = vmatpush1.msra.mxu0 %v532
    %2669 = vmatprep.subr.mxu0 0.0
    %2670 = vmatpush1.msra.mxu0 %v533
    %2671 = vmatprep.subr.mxu0 0.0
    %2672 = vmatpush1.msra.mxu0 0.0
    %2673 = vmatprep.subr.mxu0 0.0
    %2674 = vmatpush1.msra.mxu0 0.0
    %2675 = vmatprep.subr.mxu0 0.0
    %2676 = vmatpush1.msra.mxu0 0.0
    %2677 = vmatprep.subr.mxu0 0.0
    %2678 = vmatpush1.msra.mxu0 0.0
    %2679 = vmatprep.subr.mxu0 0.0
    %2680 = vmatpush1.msra.mxu0 0.0
    %2681 = vmatprep.subr.mxu0 0.0
    %2682 = vmatpush1.msra.mxu0 0.0
    %2683 = vmatprep.subr.mxu0 0.0
    %2684 = vmatpush1.msra.mxu0 0.0
    %2685 = vmatprep.subr.mxu0 0.0
    %2686 = vmatpush1.msra.mxu0 0.0
    %2687 = vmatprep.subr.mxu0 0.0
    %2688 = vmatpush1.msra.mxu0 0.0
    %2689 = vmatprep.subr.mxu0 0.0
    %2690 = vmatpush1.msra.mxu0 0.0
    %2691 = vmatprep.subr.mxu0 0.0
    %2692 = vmatpush1.msra.mxu0 0.0
    %2693 = vmatprep.subr.mxu0 0.0
    %2694 = vmatpush1.msra.mxu0 0.0
    %2695 = vmatprep.subr.mxu0 0.0
    %2696 = vmatpush1.msra.mxu0 0.0
    %2697 = vmatprep.subr.mxu0 0.0
    %2698 = vmatpush1.msra.mxu0 0.0
    %2699 = vmatprep.subr.mxu0 0.0
    %2700 = vmatpush1.msra.mxu0 0.0
    %2701 = vmatprep.subr.mxu0 0.0
    %2702 = vmatpush1.msra.mxu0 0.0
    %2703 = vmatprep.subr.mxu0 0.0
    %2704 = vmatpush1.msra.mxu0 0.0
    %2705 = vmatprep.subr.mxu0 0.0
    %2706 = vmatpush1.msra.mxu0 0.0
    %2707 = vmatprep.subr.mxu0 0.0
    %2708 = vmatpush1.msra.mxu0 0.0
    %2709 = vmatprep.subr.mxu0 0.0
    %2710 = vmatpush1.msra.mxu0 0.0
    %2711 = vmatprep.subr.mxu0 0.0
    %2712 = vmatpush1.msra.mxu0 0.0
    %2713 = vmatprep.subr.mxu0 0.0
    %2714 = vmatpush1.msra.mxu0 0.0
    %2715 = vmatprep.subr.mxu0 0.0
    %2716 = vmatpush1.msra.mxu0 0.0
    %2717 = vmatprep.subr.mxu0 0.0
    %2718 = vmatpush1.msra.mxu0 0.0
    %2719 = vmatprep.mubr.f32.mxu0 0.0
    %2720 = vmatmul.mubr.f32.gmra.mrb[0].mxu0 %v2653
    %v2721 = vpop.f32.mrb[0].mxu0
    %v2722 = vadd.f32 %v701, %v2721
    %v2723 = vpop.f32.mrb[0].mxu0
    %2724 = vdwg.mxu0
    %v2725 = vxor.u32 %v2722, 2147483648
    %v2726 = vmul.f32 %v2725, 1.442695
    %v2727 = vpow.pop %v2726
    %v2728 = vadd.f32 %v2727, 1.0
    %v2729 = vrcp.pop %v2728
    %v2730 = vmul.f32 1.0, %v2729
    %v2731 = vtanh.pop %v2722
    %v2732 = vmul.f32 %v2730, %v2100
    %2734 = vrot.lane.b32.xlu0 %v2731, 64
    %v2735 = vpop.permute.xlu0 %2734
    %v2737 = vmul.f32 %v2730, %v2735
    %2739 = vrot.lane.b32.xlu0 %v2737, 32
    %v2740 = vpop.permute.xlu0 %2739
    %v2742 = vadd.f32 %v2732, %v2740
    %v2743 = vtanh.pop %v2742
    %2745 = vrot.lane.b32.xlu0 %v2743, 64
    %v2746 = vpop.permute.xlu0 %2745
    %v2748 = vmul.f32 %v2730, %v2746
    %2750 = vrot.lane.b32.xlu0 %v2748, 32
    %v2751 = vpop.permute.xlu0 %2750
    %v2752 = vsel %vm585, %v2751, 0
    %2754 = vmatprep.subr.mxu0 %v536
    %2755 = vmatpush1.msra.mxu0 %v535
    %2756 = vmatprep.subr.mxu0 %v538
    %2757 = vmatpush1.msra.mxu0 %v537
    %2758 = vmatprep.subr.mxu0 %v540
    %2759 = vmatpush1.msra.mxu0 %v539
    %2760 = vmatprep.subr.mxu0 %v542
    %2761 = vmatpush1.msra.mxu0 %v541
    %2762 = vmatprep.subr.mxu0 0.0
    %2763 = vmatpush1.msra.mxu0 0.0
    %2764 = vmatprep.subr.mxu0 0.0
    %2765 = vmatpush1.msra.mxu0 0.0
    %2766 = vmatprep.subr.mxu0 0.0
    %2767 = vmatpush1.msra.mxu0 0.0
    %2768 = vmatprep.subr.mxu0 0.0
    %2769 = vmatpush1.msra.mxu0 0.0
    %2770 = vmatprep.subr.mxu0 0.0
    %2771 = vmatpush1.msra.mxu0 0.0
    %2772 = vmatprep.subr.mxu0 0.0
    %2773 = vmatpush1.msra.mxu0 0.0
    %2774 = vmatprep.subr.mxu0 0.0
    %2775 = vmatpush1.msra.mxu0 0.0
    %2776 = vmatprep.subr.mxu0 0.0
    %2777 = vmatpush1.msra.mxu0 0.0
    %2778 = vmatprep.subr.mxu0 0.0
    %2779 = vmatpush1.msra.mxu0 0.0
    %2780 = vmatprep.subr.mxu0 0.0
    %2781 = vmatpush1.msra.mxu0 0.0
    %2782 = vmatprep.subr.mxu0 0.0
    %2783 = vmatpush1.msra.mxu0 0.0
    %2784 = vmatprep.subr.mxu0 0.0
    %2785 = vmatpush1.msra.mxu0 0.0
    %2786 = vmatprep.subr.mxu0 0.0
    %2787 = vmatpush1.msra.mxu0 0.0
    %2788 = vmatprep.subr.mxu0 0.0
    %2789 = vmatpush1.msra.mxu0 0.0
    %2790 = vmatprep.subr.mxu0 0.0
    %2791 = vmatpush1.msra.mxu0 0.0
    %2792 = vmatprep.subr.mxu0 0.0
    %2793 = vmatpush1.msra.mxu0 0.0
    %2794 = vmatprep.subr.mxu0 0.0
    %2795 = vmatpush1.msra.mxu0 0.0
    %2796 = vmatprep.subr.mxu0 0.0
    %2797 = vmatpush1.msra.mxu0 0.0
    %2798 = vmatprep.subr.mxu0 0.0
    %2799 = vmatpush1.msra.mxu0 0.0
    %2800 = vmatprep.subr.mxu0 0.0
    %2801 = vmatpush1.msra.mxu0 0.0
    %2802 = vmatprep.subr.mxu0 0.0
    %2803 = vmatpush1.msra.mxu0 0.0
    %2804 = vmatprep.subr.mxu0 0.0
    %2805 = vmatpush1.msra.mxu0 0.0
    %2806 = vmatprep.subr.mxu0 0.0
    %2807 = vmatpush1.msra.mxu0 0.0
    %2808 = vmatprep.subr.mxu0 0.0
    %2809 = vmatpush1.msra.mxu0 0.0
    %2810 = vmatprep.subr.mxu0 0.0
    %2811 = vmatpush1.msra.mxu0 0.0
    %2812 = vmatprep.subr.mxu0 0.0
    %2813 = vmatpush1.msra.mxu0 0.0
    %2814 = vmatprep.subr.mxu0 0.0
    %2815 = vmatpush1.msra.mxu0 0.0
    %2816 = vmatprep.subr.mxu0 0.0
    %2817 = vmatpush1.msra.mxu0 0.0
    %2818 = vmatprep.mubr.f32.mxu0 0.0
    %2819 = vmatmul.mubr.f32.gmra.mrb[0].mxu0 %v2752
    %v2820 = vpop.f32.mrb[0].mxu0
    %v2821 = vadd.f32 0.0, %v2820
    %v2822 = vpop.f32.mrb[0].mxu0
    %v2823 = vadd.f32 0.0, %v2822
    %2824 = vdwg.mxu0
    %v2825 = vadd.f32 %v510, %v2821
    %v2826 = vtanh.pop %v2825
    %2827 = vmatprep.subr.mxu0 0.0
    %2828 = vmatpush1.msra.mxu0 %v543
    %2829 = vmatprep.subr.mxu0 0.0
    %2830 = vmatpush1.msra.mxu0 %v544
    %2831 = vmatprep.subr.mxu0 0.0
    %2832 = vmatpush1.msra.mxu0 %v545
    %2833 = vmatprep.subr.mxu0 0.0
    %2834 = vmatpush1.msra.mxu0 %v546
    %2835 = vmatprep.subr.mxu0 0.0
    %2836 = vmatpush1.msra.mxu0 %v547
    %2837 = vmatprep.subr.mxu0 0.0
    %2838 = vmatpush1.msra.mxu0 %v548
    %2839 = vmatprep.subr.mxu0 0.0
    %2840 = vmatpush1.msra.mxu0 %v549
    %2841 = vmatprep.subr.mxu0 0.0
    %2842 = vmatpush1.msra.mxu0 %v550
    %2843 = vmatprep.subr.mxu0 0.0
    %2844 = vmatpush1.msra.mxu0 %v551
    %2845 = vmatprep.subr.mxu0 0.0
    %2846 = vmatpush1.msra.mxu0 %v552
    %2847 = vmatprep.subr.mxu0 0.0
    %2848 = vmatpush1.msra.mxu0 %v553
    %2849 = vmatprep.subr.mxu0 0.0
    %2850 = vmatpush1.msra.mxu0 %v554
    %2851 = vmatprep.subr.mxu0 0.0
    %2852 = vmatpush1.msra.mxu0 %v555
    %2853 = vmatprep.subr.mxu0 0.0
    %2854 = vmatpush1.msra.mxu0 %v556
    %2855 = vmatprep.subr.mxu0 0.0
    %2856 = vmatpush1.msra.mxu0 %v557
    %2857 = vmatprep.subr.mxu0 0.0
    %2858 = vmatpush1.msra.mxu0 %v558
    %2859 = vmatprep.subr.mxu0 0.0
    %2860 = vmatpush1.msra.mxu0 0.0
    %2861 = vmatprep.subr.mxu0 0.0
    %2862 = vmatpush1.msra.mxu0 0.0
    %2863 = vmatprep.subr.mxu0 0.0
    %2864 = vmatpush1.msra.mxu0 0.0
    %2865 = vmatprep.subr.mxu0 0.0
    %2866 = vmatpush1.msra.mxu0 0.0
    %2867 = vmatprep.subr.mxu0 0.0
    %2868 = vmatpush1.msra.mxu0 0.0
    %2869 = vmatprep.subr.mxu0 0.0
    %2870 = vmatpush1.msra.mxu0 0.0
    %2871 = vmatprep.subr.mxu0 0.0
    %2872 = vmatpush1.msra.mxu0 0.0
    %2873 = vmatprep.subr.mxu0 0.0
    %2874 = vmatpush1.msra.mxu0 0.0
    %2875 = vmatprep.subr.mxu0 0.0
    %2876 = vmatpush1.msra.mxu0 0.0
    %2877 = vmatprep.subr.mxu0 0.0
    %2878 = vmatpush1.msra.mxu0 0.0
    %2879 = vmatprep.subr.mxu0 0.0
    %2880 = vmatpush1.msra.mxu0 0.0
    %2881 = vmatprep.subr.mxu0 0.0
    %2882 = vmatpush1.msra.mxu0 0.0
    %2883 = vmatprep.subr.mxu0 0.0
    %2884 = vmatpush1.msra.mxu0 0.0
    %2885 = vmatprep.subr.mxu0 0.0
    %2886 = vmatpush1.msra.mxu0 0.0
    %2887 = vmatprep.subr.mxu0 0.0
    %2888 = vmatpush1.msra.mxu0 0.0
    %2889 = vmatprep.subr.mxu0 0.0
    %2890 = vmatpush1.msra.mxu0 0.0
    %2891 = vmatprep.mubr.f32.mxu0 0.0
    %2892 = vmatmul.mubr.f32.gmra.mrb[0].mxu0 %v2826
    %v2893 = vpop.f32.mrb[0].mxu0
    %v2894 = vadd.f32 %v521, %v2893
    %v2895 = vpop.f32.mrb[0].mxu0
    %2896 = vdwg.mxu0
    %v2897 = vsel %vm952, %v2894, -inf
    %2898 = vmax.xlane.f32.xlu0 %v2897
    %v2899 = vpop.xlane.xlu0 %2898
    %v2900 = vsub.f32 %v2894, %v2899
    %v2901 = vmul.f32 %v2900, 1.442695
    %v2902 = vpow.pop %v2901
    %v2903 = vsel %vm952, %v2902, 0.0
    %2904 = vadd.xlane.f32.xlu0 %v2903
    %v2905 = vpop.xlane.xlu0 %2904
    %v2906 = vrcp.pop %v2905
    %v2907 = vmul.f32 %v2902, %v2906
    %v2908 = vlaneseq
    %v2909 = vshrl.u32 %v2908, 7
    %v2910 = vsub.s32 0, %v2909
    %v2911 = vrot.slane %v2907, %v2910
    %2913 = vbcast.lane.b32.xlu0 %v2911, 256
    %v2914 = vpop.permute.xlu0 %2913
    %v2915 = vlaneseq
    %v2916 = vshrl.u32 %v2915, 7
    %v2917 = vsub.s32 1, %v2916
    %v2918 = vrot.slane %v2907, %v2917
    %2920 = vbcast.lane.b32.xlu0 %v2918, 256
    %v2921 = vpop.permute.xlu0 %2920
    %v2922 = vlaneseq
    %v2923 = vshrl.u32 %v2922, 7
    %v2924 = vsub.s32 2, %v2923
    %v2925 = vrot.slane %v2907, %v2924
    %2927 = vbcast.lane.b32.xlu0 %v2925, 256
    %v2928 = vpop.permute.xlu0 %2927
    %v2929 = vlaneseq
    %v2930 = vshrl.u32 %v2929, 7
    %v2931 = vsub.s32 3, %v2930
    %v2932 = vrot.slane %v2907, %v2931
    %2934 = vbcast.lane.b32.xlu0 %v2932, 256
    %v2935 = vpop.permute.xlu0 %2934
    %v2936 = vlaneseq
    %v2937 = vshrl.u32 %v2936, 7
    %v2938 = vsub.s32 4, %v2937
    %v2939 = vrot.slane %v2907, %v2938
    %2941 = vbcast.lane.b32.xlu0 %v2939, 256
    %v2942 = vpop.permute.xlu0 %2941
    %v2943 = vlaneseq
    %v2944 = vshrl.u32 %v2943, 7
    %v2945 = vsub.s32 5, %v2944
    %v2946 = vrot.slane %v2907, %v2945
    %2948 = vbcast.lane.b32.xlu0 %v2946, 256
    %v2949 = vpop.permute.xlu0 %2948
    %v2950 = vlaneseq
    %v2951 = vshrl.u32 %v2950, 7
    %v2952 = vsub.s32 6, %v2951
    %v2953 = vrot.slane %v2907, %v2952
    %2955 = vbcast.lane.b32.xlu0 %v2953, 256
    %v2956 = vpop.permute.xlu0 %2955
    %v2957 = vlaneseq
    %v2958 = vshrl.u32 %v2957, 7
    %v2959 = vsub.s32 7, %v2958
    %v2960 = vrot.slane %v2907, %v2959
    %2962 = vbcast.lane.b32.xlu0 %v2960, 256
    %v2963 = vpop.permute.xlu0 %2962
    %v2964 = vmul.f32 %v2914, %v513
    %v2965 = vmul.f32 %v2921, %v514
    %v2966 = vmul.f32 %v2928, %v515
    %v2967 = vmul.f32 %v2935, %v516
    %v2968 = vmul.f32 %v2942, %v517
    %v2969 = vmul.f32 %v2949, %v518
    %v2970 = vmul.f32 %v2956, %v519
    %v2971 = vmul.f32 %v2963, %v520
    %v2972 = vsel %vm89, %v2964, 0.0
    %v2973 = vrot.slane %v2972, 4
    %v2974 = vadd.f32 %v2972, %v2973
    %v2975 = vrot.slane %v2974, 2
    %v2976 = vadd.f32 %v2974, %v2975
    %v2977 = vrot.slane %v2976, 1
    %v2978 = vadd.f32 %v2976, %v2977
    %v2979 = vsel %vm89, %v2965, 0.0
    %v2980 = vrot.slane %v2979, 4
    %v2981 = vadd.f32 %v2979, %v2980
    %v2982 = vrot.slane %v2981, 2
    %v2983 = vadd.f32 %v2981, %v2982
    %v2984 = vrot.slane %v2983, 1
    %v2985 = vadd.f32 %v2983, %v2984
    %v2986 = vsel %vm89, %v2966, 0.0
    %v2987 = vrot.slane %v2986, 4
    %v2988 = vadd.f32 %v2986, %v2987
    %v2989 = vrot.slane %v2988, 2
    %v2990 = vadd.f32 %v2988, %v2989
    %v2991 = vrot.slane %v2990, 1
    %v2992 = vadd.f32 %v2990, %v2991
    %v2993 = vsel %vm89, %v2967, 0.0
    %v2994 = vrot.slane %v2993, 4
    %v2995 = vadd.f32 %v2993, %v2994
    %v2996 = vrot.slane %v2995, 2
    %v2997 = vadd.f32 %v2995, %v2996
    %v2998 = vrot.slane %v2997, 1
    %v2999 = vadd.f32 %v2997, %v2998
    %v3000 = vsel %vm89, %v2968, 0.0
    %v3001 = vrot.slane %v3000, 4
    %v3002 = vadd.f32 %v3000, %v3001
    %v3003 = vrot.slane %v3002, 2
    %v3004 = vadd.f32 %v3002, %v3003
    %v3005 = vrot.slane %v3004, 1
    %v3006 = vadd.f32 %v3004, %v3005
    %v3007 = vsel %vm89, %v2969, 0.0
    %v3008 = vrot.slane %v3007, 4
    %v3009 = vadd.f32 %v3007, %v3008
    %v3010 = vrot.slane %v3009, 2
    %v3011 = vadd.f32 %v3009, %v3010
    %v3012 = vrot.slane %v3011, 1
    %v3013 = vadd.f32 %v3011, %v3012
    %v3014 = vsel %vm89, %v2970, 0.0
    %v3015 = vrot.slane %v3014, 4
    %v3016 = vadd.f32 %v3014, %v3015
    %v3017 = vrot.slane %v3016, 2
    %v3018 = vadd.f32 %v3016, %v3017
    %v3019 = vrot.slane %v3018, 1
    %v3020 = vadd.f32 %v3018, %v3019
    %v3021 = vsel %vm89, %v2971, 0.0
    %v3022 = vrot.slane %v3021, 4
    %v3023 = vadd.f32 %v3021, %v3022
    %v3024 = vrot.slane %v3023, 2
    %v3025 = vadd.f32 %v3023, %v3024
    %v3026 = vrot.slane %v3025, 1
    %v3027 = vadd.f32 %v3025, %v3026
    %v3036 = vsel %vm1092, %v2985, %v2978
    %v3037 = vsel %vm1094, %v2992, %v3036
    %v3038 = vsel %vm1096, %v2999, %v3037
    %v3039 = vsel %vm1098, %v3006, %v3038
    %v3040 = vsel %vm1100, %v3013, %v3039
    %v3041 = vsel %vm1102, %v3020, %v3040
    %v3042 = vsel %vm1104, %v3027, %v3041
    %v3043 = vsel %vm89, %v3042, 0
    %3045 = vmatprep.subr.mxu0 0.0
    %3046 = vmatpush1.msra.mxu0 %v559
    %3047 = vmatprep.subr.mxu0 0.0
    %3048 = vmatpush1.msra.mxu0 %v560
    %3049 = vmatprep.subr.mxu0 0.0
    %3050 = vmatpush1.msra.mxu0 %v561
    %3051 = vmatprep.subr.mxu0 0.0
    %3052 = vmatpush1.msra.mxu0 %v562
    %3053 = vmatprep.subr.mxu0 0.0
    %3054 = vmatpush1.msra.mxu0 %v563
    %3055 = vmatprep.subr.mxu0 0.0
    %3056 = vmatpush1.msra.mxu0 %v564
    %3057 = vmatprep.subr.mxu0 0.0
    %3058 = vmatpush1.msra.mxu0 %v565
    %3059 = vmatprep.subr.mxu0 0.0
    %3060 = vmatpush1.msra.mxu0 %v566
    %3061 = vmatprep.subr.mxu0 0.0
    %3062 = vmatpush1.msra.mxu0 0.0
    %3063 = vmatprep.subr.mxu0 0.0
    %3064 = vmatpush1.msra.mxu0 0.0
    %3065 = vmatprep.subr.mxu0 0.0
    %3066 = vmatpush1.msra.mxu0 0.0
    %3067 = vmatprep.subr.mxu0 0.0
    %3068 = vmatpush1.msra.mxu0 0.0
    %3069 = vmatprep.subr.mxu0 0.0
    %3070 = vmatpush1.msra.mxu0 0.0
    %3071 = vmatprep.subr.mxu0 0.0
    %3072 = vmatpush1.msra.mxu0 0.0
    %3073 = vmatprep.subr.mxu0 0.0
    %3074 = vmatpush1.msra.mxu0 0.0
    %3075 = vmatprep.subr.mxu0 0.0
    %3076 = vmatpush1.msra.mxu0 0.0
    %3077 = vmatprep.subr.mxu0 0.0
    %3078 = vmatpush1.msra.mxu0 0.0
    %3079 = vmatprep.subr.mxu0 0.0
    %3080 = vmatpush1.msra.mxu0 0.0
    %3081 = vmatprep.subr.mxu0 0.0
    %3082 = vmatpush1.msra.mxu0 0.0
    %3083 = vmatprep.subr.mxu0 0.0
    %3084 = vmatpush1.msra.mxu0 0.0
    %3085 = vmatprep.subr.mxu0 0.0
    %3086 = vmatpush1.msra.mxu0 0.0
    %3087 = vmatprep.subr.mxu0 0.0
    %3088 = vmatpush1.msra.mxu0 0.0
    %3089 = vmatprep.subr.mxu0 0.0
    %3090 = vmatpush1.msra.mxu0 0.0
    %3091 = vmatprep.subr.mxu0 0.0
    %3092 = vmatpush1.msra.mxu0 0.0
    %3093 = vmatprep.subr.mxu0 0.0
    %3094 = vmatpush1.msra.mxu0 0.0
    %3095 = vmatprep.subr.mxu0 0.0
    %3096 = vmatpush1.msra.mxu0 0.0
    %3097 = vmatprep.subr.mxu0 0.0
    %3098 = vmatpush1.msra.mxu0 0.0
    %3099 = vmatprep.subr.mxu0 0.0
    %3100 = vmatpush1.msra.mxu0 0.0
    %3101 = vmatprep.subr.mxu0 0.0
    %3102 = vmatpush1.msra.mxu0 0.0
    %3103 = vmatprep.subr.mxu0 0.0
    %3104 = vmatpush1.msra.mxu0 0.0
    %3105 = vmatprep.subr.mxu0 0.0
    %3106 = vmatpush1.msra.mxu0 0.0
    %3107 = vmatprep.subr.mxu0 0.0
    %3108 = vmatpush1.msra.mxu0 0.0
    %3109 = vmatprep.mubr.f32.mxu0 0.0
    %3110 = vmatmul.mubr.f32.gmra.mrb[0].mxu0 %v3043
    %v3111 = vpop.f32.mrb[0].mxu0
    %v3112 = vadd.f32 0.0, %v3111
    %v3113 = vpop.f32.mrb[0].mxu0
    %3114 = vdwg.mxu0
    %v3115 = vadd.f32 %v2823, %v3112
    %v3116 = vadd.f32 %v3115, %v1183
    %3117 = vmatprep.subr.mxu0 0.0
    %3118 = vmatpush1.msra.mxu0 %v568
    %3119 = vmatprep.subr.mxu0 0.0
    %3120 = vmatpush1.msra.mxu0 %v569
    %3121 = vmatprep.subr.mxu0 0.0
    %3122 = vmatpush1.msra.mxu0 %v570
    %3123 = vmatprep.subr.mxu0 0.0
    %3124 = vmatpush1.msra.mxu0 %v571
    %3125 = vmatprep.subr.mxu0 0.0
    %3126 = vmatpush1.msra.mxu0 %v572
    %3127 = vmatprep.subr.mxu0 0.0
    %3128 = vmatpush1.msra.mxu0 %v573
    %3129 = vmatprep.subr.mxu0 0.0
    %3130 = vmatpush1.msra.mxu0 %v574
    %3131 = vmatprep.subr.mxu0 0.0
    %3132 = vmatpush1.msra.mxu0 %v575
    %3133 = vmatprep.subr.mxu0 0.0
    %3134 = vmatpush1.msra.mxu0 %v576
    %3135 = vmatprep.subr.mxu0 0.0
    %3136 = vmatpush1.msra.mxu0 %v577
    %3137 = vmatprep.subr.mxu0 0.0
    %3138 = vmatpush1.msra.mxu0 %v578
    %3139 = vmatprep.subr.mxu0 0.0
    %3140 = vmatpush1.msra.mxu0 %v579
    %3141 = vmatprep.subr.mxu0 0.0
    %3142 = vmatpush1.msra.mxu0 %v580
    %3143 = vmatprep.subr.mxu0 0.0
    %3144 = vmatpush1.msra.mxu0 %v581
    %3145 = vmatprep.subr.mxu0 0.0
    %3146 = vmatpush1.msra.mxu0 %v582
    %3147 = vmatprep.subr.mxu0 0.0
    %3148 = vmatpush1.msra.mxu0 %v583
    %3149 = vmatprep.subr.mxu0 0.0
    %3150 = vmatpush1.msra.mxu0 0.0
    %3151 = vmatprep.subr.mxu0 0.0
    %3152 = vmatpush1.msra.mxu0 0.0
    %3153 = vmatprep.subr.mxu0 0.0
    %3154 = vmatpush1.msra.mxu0 0.0
    %3155 = vmatprep.subr.mxu0 0.0
    %3156 = vmatpush1.msra.mxu0 0.0
    %3157 = vmatprep.subr.mxu0 0.0
    %3158 = vmatpush1.msra.mxu0 0.0
    %3159 = vmatprep.subr.mxu0 0.0
    %3160 = vmatpush1.msra.mxu0 0.0
    %3161 = vmatprep.subr.mxu0 0.0
    %3162 = vmatpush1.msra.mxu0 0.0
    %3163 = vmatprep.subr.mxu0 0.0
    %3164 = vmatpush1.msra.mxu0 0.0
    %3165 = vmatprep.subr.mxu0 0.0
    %3166 = vmatpush1.msra.mxu0 0.0
    %3167 = vmatprep.subr.mxu0 0.0
    %3168 = vmatpush1.msra.mxu0 0.0
    %3169 = vmatprep.subr.mxu0 0.0
    %3170 = vmatpush1.msra.mxu0 0.0
    %3171 = vmatprep.subr.mxu0 0.0
    %3172 = vmatpush1.msra.mxu0 0.0
    %3173 = vmatprep.subr.mxu0 0.0
    %3174 = vmatpush1.msra.mxu0 0.0
    %3175 = vmatprep.subr.mxu0 0.0
    %3176 = vmatpush1.msra.mxu0 0.0
    %3177 = vmatprep.subr.mxu0 0.0
    %3178 = vmatpush1.msra.mxu0 0.0
    %3179 = vmatprep.subr.mxu0 0.0
    %3180 = vmatpush1.msra.mxu0 0.0
    %3181 = vmatprep.mubr.f32.mxu0 0.0
    %3182 = vmatmul.mubr.f32.gmra.mrb[0].mxu0 %v3116
    %v3183 = vpop.f32.mrb[0].mxu0
    %v3184 = vadd.f32 %v1190, %v3183
    %v3185 = vpop.f32.mrb[0].mxu0
    %3186 = vdwg.mxu0
    %s3187 = scalar_lea.vmem [#allocation2], 24
    %3188 = vst.msk [vmem:[%s3187] sm:$0xff] %vm585, %v3184
    %3189 = vst.msk [vmem:[#allocation4] sm:$0xff] %vm585, %v2646
    %s3191 = scalar_lea.vmem [#allocation4], 8
    %3192 = vst.msk [vmem:[%s3191] sm:$0xff] %vm585, %v2751
    %3194 = vrot.lane.b32.xlu0 %v2637, 96
    %v3195 = vpop.permute.xlu0 %3194
    %3197 = vst.msk [vmem:[#allocation6] sm:$0xff] %vm585, %v3195
    %3199 = vrot.lane.b32.xlu0 %v2742, 96
    %v3200 = vpop.permute.xlu0 %3199
    %s3202 = scalar_lea.vmem [#allocation6], 8
    %3203 = vst.msk [vmem:[%s3202] sm:$0xff] %vm585, %v3200
    // Predicated region
    $region82: #{bi_decoder_forward.1} parent=1 // pred_check
      _
    $region83: #{bi_decoder_forward.1} parent=1 // pred_check_branch
      %3205 = sbr.rel (0) target = $region85
    $region84: #{bi_decoder_forward.1} parent=1 // pred_region
      %s3207 = ssub.s32 512, 512
      %3208 = vsyncadd [#allocation3], %s3207
      %s3209 = sshll.u32 [#allocation2], 4
      %s3210 = int_to_ptr.vmem [resolvable:$true] %s3209
      %3215 = dma.vmem_to_hbm [thread:$0]  %s3210, 512, %s20, [#allocation3], 128, 128, 8
    $region85: #{bi_decoder_forward.1} parent=1 // pred_fallthru
      _
    // Predicated region
    $region86: #{bi_decoder_forward.1} parent=1 // pred_check
      _
    $region87: #{bi_decoder_forward.1} parent=1 // pred_check_branch
      %3217 = sbr.rel (0) target = $region89
    $region88: #{bi_decoder_forward.1} parent=1 // pred_region
      %s3219 = ssub.s32 256, 256
      %3220 = vsyncadd [#allocation5], %s3219
      %s3221 = sshll.u32 [#allocation4], 4
      %s3222 = int_to_ptr.vmem [resolvable:$true] %s3221
      %3227 = dma.vmem_to_hbm [thread:$0]  %s3222, 256, %s21, [#allocation5], 128, 128, 8
    $region89: #{bi_decoder_forward.1} parent=1 // pred_fallthru
      _
    // Predicated region
    $region90: #{bi_decoder_forward.1} parent=1 // pred_check
      _
    $region91: #{bi_decoder_forward.1} parent=1 // pred_check_branch
      %3229 = sbr.rel (0) target = $region93
    $region92: #{bi_decoder_forward.1} parent=1 // pred_region
      %s3231 = ssub.s32 256, 256
      %3232 = vsyncadd [#allocation5], %s3231
      %s3233 = sshll.u32 [#allocation6], 4
      %s3234 = int_to_ptr.vmem [resolvable:$true] %s3233
      %3239 = dma.vmem_to_hbm [thread:$0]  %s3234, 256, %s22, [#allocation5], 128, 128, 8
    $region93: #{bi_decoder_forward.1} parent=1 // pred_fallthru
      _
    // Predicated region
    $region94: #{bi_decoder_forward.1} parent=1 // pred_check
      _
    $region95: #{bi_decoder_forward.1} parent=1 // pred_check_branch
      %3241 = sbr.rel (0) target = $region97
    $region96: #{bi_decoder_forward.1} parent=1 // pred_region
      %3242 = dma.done [#allocation3], 512
    $region97: #{bi_decoder_forward.1} parent=1 // pred_fallthru
      _
    // Predicated region
    $region98: #{bi_decoder_forward.1} parent=1 // pred_check
      _
    $region99: #{bi_decoder_forward.1} parent=1 // pred_check_branch
      %3244 = sbr.rel (0) target = $region101
    $region100: #{bi_decoder_forward.1} parent=1 // pred_region
      %3245 = dma.done [#allocation5], 256
    $region101: #{bi_decoder_forward.1} parent=1 // pred_fallthru
      _
    // Predicated region
    $region102: #{bi_decoder_forward.1} parent=1 // pred_check
      _
    $region103: #{bi_decoder_forward.1} parent=1 // pred_check_branch
      %3247 = sbr.rel (0) target = $region105
    $region104: #{bi_decoder_forward.1} parent=1 // pred_region
      %3248 = dma.done [#allocation5], 256
    $region105: #{bi_decoder_forward.1} parent=1 // pred_fallthru
      _
    %3249 = vsyncpa [#allocation3], 1
    %3250 = vsyncpa [#allocation5], 1

</llo_original>
